<compile_context>
chip_gen: v6e
topology: v6e:2x2x1
jax: 0.10.0
libtpu: 0.0.40
codegen_flags: <defaults>
</compile_context>

<pallas_src>
import functools

import jax
import jax.numpy as jnp
from jax.experimental import pallas as pl
from jax.experimental.pallas import tpu as pltpu


_TILE_R = 512          # default rows per block (multiple of 8/16/32 sublane packings)
_TILE_LOUT = 2048      # default pooled lanes per block (multiple of the 128-lane width)
_LANE = 128
_SMALL_THRESHOLD = 1 << 20   # below this many elements, plain XLA wins


def _cdiv(a, b):
    return -(-a // b)


def _round_up(x, m):
    return _cdiv(x, m) * m


def _round_down(x, m):
    return (x // m) * m


# --------------------------------------------------------------------------------------
# Kernel bodies: max over adjacent lane pairs of a (tile_r, 2*tile_lout) input block into
# a (tile_r, tile_lout) output block.
# --------------------------------------------------------------------------------------
def _pool_body_slice(x_ref, o_ref):
    # Lane deinterleave on the loaded value: two strided slices + one VPU max.
    x = x_ref[...]
    o_ref[...] = jnp.maximum(x[:, 0::2], x[:, 1::2])


def _pool_body_strided_load(x_ref, o_ref):
    # Lane deinterleave done by strided loads straight from the VMEM block.
    t = o_ref.shape[-1]
    even = x_ref[:, pl.ds(0, t, stride=2)]
    odd = x_ref[:, pl.ds(1, t, stride=2)]
    o_ref[...] = jnp.maximum(even, odd)


def _pool_body_reshape(x_ref, o_ref):
    # Known-good fallback: pair on a trailing size-2 axis and reduce.  Forces a vreg
    # relayout, so it is only used (at smaller tiles) if the bodies above do not lower.
    x = x_ref[...]
    r, l2 = x.shape
    o_ref[...] = jnp.max(x.reshape(r, l2 // 2, 2), axis=-1)


_BODY_CANDIDATES = (_pool_body_slice, _pool_body_strided_load, _pool_body_reshape)
# Probe configs: one 128-aligned block and one full-dim (unaligned) block, covering the
# two block-shape classes the wrapper generates.
_PROBE_CONFIGS = ((8, 256, 128), (8, 16, 8))


@functools.lru_cache(maxsize=None)
def _select_body(dtype_name):
    """Pick the first pooling body that both compiles (Mosaic) and is numerically right.

    Runs tiny eager pallas_calls once per dtype (cached), so lowering failures are caught
    reliably instead of relying on a try/except around the real, possibly-jitted call.
    """
    dtype = jnp.dtype(dtype_name)
    for body in _BODY_CANDIDATES:
        ok = True
        for rows, lin, lout in _PROBE_CONFIGS:
            try:
                x = jnp.arange(rows * lin, dtype=jnp.float32).astype(dtype)
                x = x.reshape(rows, lin)
                y = pl.pallas_call(
                    body,
                    out_shape=jax.ShapeDtypeStruct((rows, lout), dtype),
                    grid=(1, 1),
                    in_specs=[pl.BlockSpec((rows, lin), lambda i, j: (i, j))],
                    out_specs=pl.BlockSpec((rows, lout), lambda i, j: (i, j)),
                )(x)
                ref = jnp.max(x.reshape(rows, lout, 2), axis=-1)
                ok = bool(jnp.array_equal(y, ref))
            except Exception:      # lowering / compile failure -> try the next body
                ok = False
            if not ok:
                break
        if ok:
            return body
    return _pool_body_reshape       # last resort; the real call will surface any error


def _pallas_pool2d(x2d, l_out, *, tile_r, tile_lout, body):
    rows = x2d.shape[0]
    grid = (_cdiv(rows, tile_r), _cdiv(l_out, tile_lout))
    itemsize = jnp.dtype(x2d.dtype).itemsize
    block_bytes = tile_r * 3 * tile_lout * itemsize   # 2*tile_lout input + tile_lout output
    # Explicit scoped-VMEM budget: double-buffered blocks + headroom.  Needed so the large
    # default tiles compile under v5e's 16 MiB scoped default; capped at 48 MiB to stay
    # well inside v7x's 64 MiB physical VMEM.
    vmem_limit = int(min(48 << 20, max(16 << 20, 2 * block_bytes + (16 << 20))))
    return pl.pallas_call(
        body,
        out_shape=jax.ShapeDtypeStruct((rows, l_out), x2d.dtype),
        grid=grid,
        in_specs=[pl.BlockSpec((tile_r, 2 * tile_lout), lambda i, j: (i, j))],
        # TODO(synk): if an xprof trace on v7x shows exposed DMA at step boundaries, try
        # pipeline_mode=pl.Buffered(3) on the input spec (budget it vs the 64 MiB VMEM).
        out_specs=pl.BlockSpec((tile_r, tile_lout), lambda i, j: (i, j)),
        compiler_params=pltpu.CompilerParams(
            dimension_semantics=("parallel", "parallel"),
            vmem_limit_bytes=vmem_limit),
    )(x2d)


def maxpool1d(x, *, force_pallas=False, tile_r=None, tile_lout=None):
    """nn.MaxPool1d(kernel_size=2) on an NCL tensor (stride=2, floor mode)."""
    n, c, l = x.shape
    l_out = l // 2
    if l_out == 0:
        return jnp.zeros((n, c, 0), x.dtype)

    if not force_pallas and x.size < _SMALL_THRESHOLD:
        # Kernel launch / layout plumbing dwarfs the work at tiny sizes.
        return jnp.max(x[:, :, :2 * l_out].reshape(n, c, l_out, 2), axis=-1)

    rows = n * c
    itemsize = jnp.dtype(x.dtype).itemsize
    sublane = max(8, 32 // itemsize)

    body = _select_body(jnp.dtype(x.dtype).name)
    cap_r, cap_l = _TILE_R, _TILE_LOUT
    if body is _pool_body_reshape:
        # TODO(synk): remove once a deinterleave body is confirmed to lower on all deployed
        # Mosaic versions; smaller tiles bound the fallback's (r, t, 2) relayout footprint.
        cap_r, cap_l = 128, 256

    # Lane (pooled-length) tile: single tile when it fits (fewest grid steps, contiguous
    # lane-dense writeback), otherwise the largest 128-multiple <= cap; ragged edges are
    # left to Pallas' masked stores -- no wrapper-side pad.
    if tile_lout is None:
        if l_out <= cap_l and (2 * l_out == l or (2 * l_out) % _LANE == 0):
            tile_lout = l_out
        elif l_out >= _LANE:
            tile_lout = min(cap_l, _round_down(l_out, _LANE))
        else:
            tile_lout = l_out                    # tiny odd-length corner, presliced below

    # Row tile: full rows when they fit, else the cap; if the whole op would collapse to a
    # single grid step, split rows so v7x's two TensorCores both get work.
    if tile_r is None:
        tile_r = rows if rows <= cap_r else cap_r
        if tile_r >= rows and tile_lout >= l_out and rows >= 2 * sublane:
            tile_r = _round_up(_cdiv(rows, 2), sublane)

    x2d = x.reshape(rows, l)                     # free reshape (merges leading dims)
    # Only remaining wrapper-side copy: drop a trailing odd element when the lane tile is
    # not 128-aligned (tiny lengths only).  Everywhere else OOB input lanes are harmless:
    # they only feed OOB output lanes, which Pallas masks on store.
    if not ((2 * tile_lout) % _LANE == 0 or (tile_lout == l_out and 2 * l_out == l)):
        x2d = x2d[:, : 2 * l_out]

    out2d = _pallas_pool2d(x2d, l_out, tile_r=tile_r, tile_lout=tile_lout, body=body)
    return out2d.reshape(n, c, l_out)            # free reshape (splits leading dim)


if __name__ == "__main__":
    key = jax.random.PRNGKey(0)

    # 1) Small NCL input (batch=2, channels=4, length=16); force the Pallas path so the
    #    kernel itself is exercised even below the small-input threshold.
    x = jax.random.normal(key, (2, 4, 16), dtype=jnp.float32)
    ref = jnp.max(x.reshape(2, 4, 8, 2), axis=-1)
    y = jax.block_until_ready(maxpool1d(x, force_pallas=True))
    assert y.shape == (2, 4, 8), y.shape
    assert jnp.allclose(y, ref), "mismatch vs reference (small case)"
    # The small-input XLA fast path must agree too.
    assert jnp.allclose(jax.block_until_ready(maxpool1d(x)), ref)

    # 2) Odd length with explicit small tiles: ragged lane edge handled by masked stores
    #    (no wrapper pad/slice), floor semantics drop the trailing element.
    x2 = jax.random.normal(jax.random.PRNGKey(0), (2, 8, 521), dtype=jnp.float32)
    ref2 = jnp.max(x2[:, :, :520].reshape(2, 8, 260, 2), axis=-1)
    y2 = jax.block_until_ready(
        maxpool1d(x2, force_pallas=True, tile_r=8, tile_lout=128))
    assert y2.shape == (2, 8, 260), y2.shape
    assert jnp.allclose(y2, ref2), "mismatch vs reference (explicit-tile ragged case)"

    # 3) Same odd-length input with automatic tile selection (cdiv grid with a ragged
    #    lane tile on the 128-aligned auto path).
    y3 = jax.block_until_ready(maxpool1d(x2, force_pallas=True))
    assert jnp.allclose(y3, ref2), "mismatch vs reference (auto-tile ragged case)"

    # 4) Ragged rows + single full-width lane tile + the two-TensorCore row split.
    x4 = jax.random.normal(jax.random.PRNGKey(0), (3, 7, 300), dtype=jnp.float32)
    ref4 = jnp.max(x4.reshape(3, 7, 150, 2), axis=-1)
    y4 = jax.block_until_ready(maxpool1d(x4, force_pallas=True))
    assert y4.shape == (3, 7, 150), y4.shape
    assert jnp.allclose(y4, ref4), "mismatch vs reference (ragged-row case)"

    print("KERNEL_OK")
</pallas_src>

<mosaic_0001>
module attributes {stable_mosaic.version = 11 : i64} {
  func.func @_pool_body_strided_load(%arg0: i32, %arg1: i32, %arg2: memref<8x256xf32, #tpu.memory_space<vmem>>, %arg3: memref<8x128xf32, #tpu.memory_space<vmem>>) attributes {dimension_semantics = [#tpu.dimension_semantics<arbitrary>, #tpu.dimension_semantics<arbitrary>], iteration_bounds = array<i64: 1, 1>, scalar_prefetch = 0 : i64, scratch_operands = 0 : i64, tpu.core_type = #tpu.core_type<tc>, window_params = [{transform_indices = @transform_0, window_bounds = array<i64: 8, 256>}, {transform_indices = @transform_1, window_bounds = array<i64: 8, 128>}]} {
    %c0 = arith.constant 0 : index
    %c0_0 = arith.constant 0 : index
    %0 = tpu.strided_load %arg2[%c0, %c0_0] {strides = array<i32: 1, 2>} : memref<8x256xf32, #tpu.memory_space<vmem>>, vector<8x128xf32>
    %c0_1 = arith.constant 0 : index
    %c1 = arith.constant 1 : index
    %1 = tpu.strided_load %arg2[%c0_1, %c1] {strides = array<i32: 1, 2>} : memref<8x256xf32, #tpu.memory_space<vmem>>, vector<8x128xf32>
    %2 = arith.maximumf %0, %1 : vector<8x128xf32>
    %c0_2 = arith.constant 0 : index
    %c0_3 = arith.constant 0 : index
    %3 = vector.load %arg3[%c0_2, %c0_3] : memref<8x128xf32, #tpu.memory_space<vmem>>, vector<8x128xf32>
    tpu.vector_store %arg3[%c0_2, %c0_3], %2 {strides = array<i32>} : memref<8x128xf32, #tpu.memory_space<vmem>>, vector<8x128xf32>,
    return
  }
  func.func @transform_0(%arg0: i32, %arg1: i32) -> (i32, i32) {
    %c0_i32 = arith.constant 0 : i32
    return %arg0, %arg1 : i32, i32
  }
  func.func @transform_1(%arg0: i32, %arg1: i32) -> (i32, i32) {
    %c0_i32 = arith.constant 0 : i32
    return %arg0, %arg1 : i32, i32
  }
}

module attributes {stable_mosaic.version = 11 : i64} {
  func.func @_pool_body_reshape(%arg0: i32, %arg1: i32, %arg2: memref<8x256xf32, #tpu.memory_space<vmem>>, %arg3: memref<8x128xf32, #tpu.memory_space<vmem>>) attributes {dimension_semantics = [#tpu.dimension_semantics<arbitrary>, #tpu.dimension_semantics<arbitrary>], iteration_bounds = array<i64: 1, 1>, scalar_prefetch = 0 : i64, scratch_operands = 0 : i64, tpu.core_type = #tpu.core_type<tc>, window_params = [{transform_indices = @transform_0, window_bounds = array<i64: 8, 256>}, {transform_indices = @transform_1, window_bounds = array<i64: 8, 128>}]} {
    %c0 = arith.constant 0 : index
    %c0_0 = arith.constant 0 : index
    %0 = vector.load %arg2[%c0, %c0_0] : memref<8x256xf32, #tpu.memory_space<vmem>>, vector<8x256xf32>
    %1 = vector.shape_cast %0 : vector<8x256xf32> to vector<8x128x2xf32>
    %cst = arith.constant dense<0xFF800000> : vector<8x128xf32>
    %2 = vector.multi_reduction <maximumf>, %1, %cst [2] : vector<8x128x2xf32> to vector<8x128xf32>
    %c0_1 = arith.constant 0 : index
    %c0_2 = arith.constant 0 : index
    %3 = vector.load %arg3[%c0_1, %c0_2] : memref<8x128xf32, #tpu.memory_space<vmem>>, vector<8x128xf32>
    tpu.vector_store %arg3[%c0_1, %c0_2], %2 {strides = array<i32>} : memref<8x128xf32, #tpu.memory_space<vmem>>, vector<8x128xf32>,
    return
  }
  func.func @transform_0(%arg0: i32, %arg1: i32) -> (i32, i32) {
    %c0_i32 = arith.constant 0 : i32
    return %arg0, %arg1 : i32, i32
  }
  func.func @transform_1(%arg0: i32, %arg1: i32) -> (i32, i32) {
    %c0_i32 = arith.constant 0 : i32
    return %arg0, %arg1 : i32, i32
  }
}

module attributes {stable_mosaic.version = 11 : i64} {
  func.func @_pool_body_reshape(%arg0: i32, %arg1: i32, %arg2: memref<8x16xf32, #tpu.memory_space<vmem>>, %arg3: memref<8x8xf32, #tpu.memory_space<vmem>>) attributes {dimension_semantics = [#tpu.dimension_semantics<parallel>, #tpu.dimension_semantics<parallel>], iteration_bounds = array<i64: 1, 1>, scalar_prefetch = 0 : i64, scratch_operands = 0 : i64, tpu.core_type = #tpu.core_type<tc>, window_params = [{transform_indices = @transform_0, window_bounds = array<i64: 8, 16>}, {transform_indices = @transform_1, window_bounds = array<i64: 8, 8>}]} {
    %c0 = arith.constant 0 : index
    %c0_0 = arith.constant 0 : index
    %0 = vector.load %arg2[%c0, %c0_0] : memref<8x16xf32, #tpu.memory_space<vmem>>, vector<8x16xf32>
    %1 = vector.shape_cast %0 : vector<8x16xf32> to vector<8x8x2xf32>
    %cst = arith.constant dense<0xFF800000> : vector<8x8xf32>
    %2 = vector.multi_reduction <maximumf>, %1, %cst [2] : vector<8x8x2xf32> to vector<8x8xf32>
    %c0_1 = arith.constant 0 : index
    %c0_2 = arith.constant 0 : index
    %3 = vector.load %arg3[%c0_1, %c0_2] : memref<8x8xf32, #tpu.memory_space<vmem>>, vector<8x8xf32>
    tpu.vector_store %arg3[%c0_1, %c0_2], %2 {strides = array<i32>} : memref<8x8xf32, #tpu.memory_space<vmem>>, vector<8x8xf32>,
    return
  }
  func.func @transform_0(%arg0: i32, %arg1: i32) -> (i32, i32) {
    %c0_i32 = arith.constant 0 : i32
    return %arg0, %arg1 : i32, i32
  }
  func.func @transform_1(%arg0: i32, %arg1: i32) -> (i32, i32) {
    %c0_i32 = arith.constant 0 : i32
    return %arg0, %arg1 : i32, i32
  }
}

</mosaic_0001>

<llo_original>
// kernel: tpu_custom_call.1
$region0: #{tpu_custom_call.1}
  #allocation0 [shape = 'u32[]', space=smem, size = 0x4, offset = 0x4, fixed_abs, tag = 'smem constant byte address 0x4 - core index']
  #allocation1 [shape = 'u32[144,128]{1,0:T(1,128)}', space=vmem, size = 0x12000, scoped, tag = 'internal scratch']
  %s0 = inlined_call_operand.hbm [shape: f32[8,256], index: 0, kind: input, shape index: {}]
  %s1 = inlined_call_operand.hbm [shape: f32[8,128], index: 1, kind: output, shape index: {}]
  %s2 = sld [smem:[#allocation0]]
  $region18: #{tpu_custom_call.1} parent=0
    _
  %s4 = ssub.s32 1, %s2
  %s5 = scalar_select 0, %s4, %s2
  $region1: #{tpu_custom_call.1} parent=0
    #allocation2 [shape = 'u8[8192]{0}', space=vmem, size = 0x2000, scoped, tag = 'input window, operand 0, single buffered']
    #allocation3 [shape = 's32[1]{0}', space=sflag, size = 0x4, scoped, tag = 'scoped memory for tpu_custom_call.1']
    #allocation4 [shape = 's32[1]{0}', space=sflag, size = 0x4, scoped, tag = 'scoped memory for tpu_custom_call.1']
    #allocation5 [shape = 'u8[4096]{0}', space=vmem, size = 0x1000, scoped, tag = 'output window, operand 0, single buffered']
    %6 = vsyncpa [#allocation3], 0
    %7 = vsyncpa [#allocation4], 0
    // Predicated region
    $region2: #{tpu_custom_call.1} parent=1 // pred_check
      _
    $region3: #{tpu_custom_call.1} parent=1 // pred_check_branch
      %9 = sbr.rel (0) target = $region5
    $region4: #{tpu_custom_call.1} parent=1 // pred_region
      %s11 = ssub.s32 256, 256
      %12 = vsyncadd [#allocation3], %s11
      %s14 = sshll.u32 [#allocation2], 4
      %s15 = int_to_ptr.vmem [resolvable:$true] %s14
      %17 = dma.hbm_to_vmem [thread:$0]  %s0, 256, %s15, [#allocation3]
    $region5: #{tpu_custom_call.1} parent=1 // pred_fallthru
      _
    // Predicated region
    $region6: #{tpu_custom_call.1} parent=1 // pred_check
      _
    $region7: #{tpu_custom_call.1} parent=1 // pred_check_branch
      %19 = sbr.rel (0) target = $region9
    $region8: #{tpu_custom_call.1} parent=1 // pred_region
      %20 = dma.done [#allocation3], 256
    $region9: #{tpu_custom_call.1} parent=1 // pred_fallthru
      _
    %v21 = vld [vmem:[#allocation2] sm:$0xff]
    %v22 = vld [vmem:[#allocation2 + $0x8] sm:$0xff]
    %24 = vrot.lane.b32.xlu0 %v21, 126
    %v25 = vpop.permute.xlu0 %24
    %27 = vrot.lane.b32.xlu0 %v21, 124
    %v28 = vpop.permute.xlu0 %27
    %30 = vrot.lane.b32.xlu0 %v21, 122
    %v31 = vpop.permute.xlu0 %30
    %33 = vrot.lane.b32.xlu0 %v21, 120
    %v34 = vpop.permute.xlu0 %33
    %36 = vrot.lane.b32.xlu0 %v21, 118
    %v37 = vpop.permute.xlu0 %36
    %39 = vrot.lane.b32.xlu0 %v21, 116
    %v40 = vpop.permute.xlu0 %39
    %42 = vrot.lane.b32.xlu0 %v21, 114
    %v43 = vpop.permute.xlu0 %42
    %45 = vrot.lane.b32.xlu0 %v21, 112
    %v46 = vpop.permute.xlu0 %45
    %48 = vrot.lane.b32.xlu0 %v21, 110
    %v49 = vpop.permute.xlu0 %48
    %51 = vrot.lane.b32.xlu0 %v21, 108
    %v52 = vpop.permute.xlu0 %51
    %54 = vrot.lane.b32.xlu0 %v21, 106
    %v55 = vpop.permute.xlu0 %54
    %57 = vrot.lane.b32.xlu0 %v21, 104
    %v58 = vpop.permute.xlu0 %57
    %60 = vrot.lane.b32.xlu0 %v21, 102
    %v61 = vpop.permute.xlu0 %60
    %63 = vrot.lane.b32.xlu0 %v21, 100
    %v64 = vpop.permute.xlu0 %63
    %66 = vrot.lane.b32.xlu0 %v21, 98
    %v67 = vpop.permute.xlu0 %66
    %69 = vrot.lane.b32.xlu0 %v21, 96
    %v70 = vpop.permute.xlu0 %69
    %72 = vrot.lane.b32.xlu0 %v21, 94
    %v73 = vpop.permute.xlu0 %72
    %75 = vrot.lane.b32.xlu0 %v21, 92
    %v76 = vpop.permute.xlu0 %75
    %78 = vrot.lane.b32.xlu0 %v21, 90
    %v79 = vpop.permute.xlu0 %78
    %81 = vrot.lane.b32.xlu0 %v21, 88
    %v82 = vpop.permute.xlu0 %81
    %84 = vrot.lane.b32.xlu0 %v21, 86
    %v85 = vpop.permute.xlu0 %84
    %87 = vrot.lane.b32.xlu0 %v21, 84
    %v88 = vpop.permute.xlu0 %87
    %90 = vrot.lane.b32.xlu0 %v21, 82
    %v91 = vpop.permute.xlu0 %90
    %93 = vrot.lane.b32.xlu0 %v21, 80
    %v94 = vpop.permute.xlu0 %93
    %96 = vrot.lane.b32.xlu0 %v21, 78
    %v97 = vpop.permute.xlu0 %96
    %99 = vrot.lane.b32.xlu0 %v21, 76
    %v100 = vpop.permute.xlu0 %99
    %102 = vrot.lane.b32.xlu0 %v21, 74
    %v103 = vpop.permute.xlu0 %102
    %105 = vrot.lane.b32.xlu0 %v21, 72
    %v106 = vpop.permute.xlu0 %105
    %108 = vrot.lane.b32.xlu0 %v21, 70
    %v109 = vpop.permute.xlu0 %108
    %111 = vrot.lane.b32.xlu0 %v21, 68
    %v112 = vpop.permute.xlu0 %111
    %114 = vrot.lane.b32.xlu0 %v21, 66
    %v115 = vpop.permute.xlu0 %114
    %117 = vrot.lane.b32.xlu0 %v21, 64
    %v118 = vpop.permute.xlu0 %117
    %120 = vrot.lane.b32.xlu0 %v21, 62
    %v121 = vpop.permute.xlu0 %120
    %123 = vrot.lane.b32.xlu0 %v21, 60
    %v124 = vpop.permute.xlu0 %123
    %126 = vrot.lane.b32.xlu0 %v21, 58
    %v127 = vpop.permute.xlu0 %126
    %129 = vrot.lane.b32.xlu0 %v21, 56
    %v130 = vpop.permute.xlu0 %129
    %132 = vrot.lane.b32.xlu0 %v21, 54
    %v133 = vpop.permute.xlu0 %132
    %135 = vrot.lane.b32.xlu0 %v21, 52
    %v136 = vpop.permute.xlu0 %135
    %138 = vrot.lane.b32.xlu0 %v21, 50
    %v139 = vpop.permute.xlu0 %138
    %141 = vrot.lane.b32.xlu0 %v21, 48
    %v142 = vpop.permute.xlu0 %141
    %144 = vrot.lane.b32.xlu0 %v21, 46
    %v145 = vpop.permute.xlu0 %144
    %147 = vrot.lane.b32.xlu0 %v21, 44
    %v148 = vpop.permute.xlu0 %147
    %150 = vrot.lane.b32.xlu0 %v21, 42
    %v151 = vpop.permute.xlu0 %150
    %153 = vrot.lane.b32.xlu0 %v21, 40
    %v154 = vpop.permute.xlu0 %153
    %156 = vrot.lane.b32.xlu0 %v21, 38
    %v157 = vpop.permute.xlu0 %156
    %159 = vrot.lane.b32.xlu0 %v21, 36
    %v160 = vpop.permute.xlu0 %159
    %162 = vrot.lane.b32.xlu0 %v21, 34
    %v163 = vpop.permute.xlu0 %162
    %165 = vrot.lane.b32.xlu0 %v21, 32
    %v166 = vpop.permute.xlu0 %165
    %168 = vrot.lane.b32.xlu0 %v21, 30
    %v169 = vpop.permute.xlu0 %168
    %171 = vrot.lane.b32.xlu0 %v21, 28
    %v172 = vpop.permute.xlu0 %171
    %174 = vrot.lane.b32.xlu0 %v21, 26
    %v175 = vpop.permute.xlu0 %174
    %177 = vrot.lane.b32.xlu0 %v21, 24
    %v178 = vpop.permute.xlu0 %177
    %180 = vrot.lane.b32.xlu0 %v21, 22
    %v181 = vpop.permute.xlu0 %180
    %183 = vrot.lane.b32.xlu0 %v21, 20
    %v184 = vpop.permute.xlu0 %183
    %186 = vrot.lane.b32.xlu0 %v21, 18
    %v187 = vpop.permute.xlu0 %186
    %189 = vrot.lane.b32.xlu0 %v21, 16
    %v190 = vpop.permute.xlu0 %189
    %192 = vrot.lane.b32.xlu0 %v21, 14
    %v193 = vpop.permute.xlu0 %192
    %195 = vrot.lane.b32.xlu0 %v21, 12
    %v196 = vpop.permute.xlu0 %195
    %198 = vrot.lane.b32.xlu0 %v21, 10
    %v199 = vpop.permute.xlu0 %198
    %201 = vrot.lane.b32.xlu0 %v21, 8
    %v202 = vpop.permute.xlu0 %201
    %204 = vrot.lane.b32.xlu0 %v21, 6
    %v205 = vpop.permute.xlu0 %204
    %207 = vrot.lane.b32.xlu0 %v21, 4
    %v208 = vpop.permute.xlu0 %207
    %210 = vrot.lane.b32.xlu0 %v21, 2
    %v211 = vpop.permute.xlu0 %210
    %214 = vrot.lane.b32.xlu0 %v22, 126
    %v215 = vpop.permute.xlu0 %214
    %217 = vrot.lane.b32.xlu0 %v22, 124
    %v218 = vpop.permute.xlu0 %217
    %220 = vrot.lane.b32.xlu0 %v22, 122
    %v221 = vpop.permute.xlu0 %220
    %223 = vrot.lane.b32.xlu0 %v22, 120
    %v224 = vpop.permute.xlu0 %223
    %226 = vrot.lane.b32.xlu0 %v22, 118
    %v227 = vpop.permute.xlu0 %226
    %229 = vrot.lane.b32.xlu0 %v22, 116
    %v230 = vpop.permute.xlu0 %229
    %232 = vrot.lane.b32.xlu0 %v22, 114
    %v233 = vpop.permute.xlu0 %232
    %235 = vrot.lane.b32.xlu0 %v22, 112
    %v236 = vpop.permute.xlu0 %235
    %238 = vrot.lane.b32.xlu0 %v22, 110
    %v239 = vpop.permute.xlu0 %238
    %241 = vrot.lane.b32.xlu0 %v22, 108
    %v242 = vpop.permute.xlu0 %241
    %244 = vrot.lane.b32.xlu0 %v22, 106
    %v245 = vpop.permute.xlu0 %244
    %247 = vrot.lane.b32.xlu0 %v22, 104
    %v248 = vpop.permute.xlu0 %247
    %250 = vrot.lane.b32.xlu0 %v22, 102
    %v251 = vpop.permute.xlu0 %250
    %253 = vrot.lane.b32.xlu0 %v22, 100
    %v254 = vpop.permute.xlu0 %253
    %256 = vrot.lane.b32.xlu0 %v22, 98
    %v257 = vpop.permute.xlu0 %256
    %259 = vrot.lane.b32.xlu0 %v22, 96
    %v260 = vpop.permute.xlu0 %259
    %262 = vrot.lane.b32.xlu0 %v22, 94
    %v263 = vpop.permute.xlu0 %262
    %265 = vrot.lane.b32.xlu0 %v22, 92
    %v266 = vpop.permute.xlu0 %265
    %268 = vrot.lane.b32.xlu0 %v22, 90
    %v269 = vpop.permute.xlu0 %268
    %271 = vrot.lane.b32.xlu0 %v22, 88
    %v272 = vpop.permute.xlu0 %271
    %274 = vrot.lane.b32.xlu0 %v22, 86
    %v275 = vpop.permute.xlu0 %274
    %277 = vrot.lane.b32.xlu0 %v22, 84
    %v278 = vpop.permute.xlu0 %277
    %280 = vrot.lane.b32.xlu0 %v22, 82
    %v281 = vpop.permute.xlu0 %280
    %283 = vrot.lane.b32.xlu0 %v22, 80
    %v284 = vpop.permute.xlu0 %283
    %286 = vrot.lane.b32.xlu0 %v22, 78
    %v287 = vpop.permute.xlu0 %286
    %289 = vrot.lane.b32.xlu0 %v22, 76
    %v290 = vpop.permute.xlu0 %289
    %292 = vrot.lane.b32.xlu0 %v22, 74
    %v293 = vpop.permute.xlu0 %292
    %295 = vrot.lane.b32.xlu0 %v22, 72
    %v296 = vpop.permute.xlu0 %295
    %298 = vrot.lane.b32.xlu0 %v22, 70
    %v299 = vpop.permute.xlu0 %298
    %301 = vrot.lane.b32.xlu0 %v22, 68
    %v302 = vpop.permute.xlu0 %301
    %304 = vrot.lane.b32.xlu0 %v22, 66
    %v305 = vpop.permute.xlu0 %304
    %307 = vrot.lane.b32.xlu0 %v22, 64
    %v308 = vpop.permute.xlu0 %307
    %310 = vrot.lane.b32.xlu0 %v22, 62
    %v311 = vpop.permute.xlu0 %310
    %313 = vrot.lane.b32.xlu0 %v22, 60
    %v314 = vpop.permute.xlu0 %313
    %316 = vrot.lane.b32.xlu0 %v22, 58
    %v317 = vpop.permute.xlu0 %316
    %319 = vrot.lane.b32.xlu0 %v22, 56
    %v320 = vpop.permute.xlu0 %319
    %322 = vrot.lane.b32.xlu0 %v22, 54
    %v323 = vpop.permute.xlu0 %322
    %325 = vrot.lane.b32.xlu0 %v22, 52
    %v326 = vpop.permute.xlu0 %325
    %328 = vrot.lane.b32.xlu0 %v22, 50
    %v329 = vpop.permute.xlu0 %328
    %331 = vrot.lane.b32.xlu0 %v22, 48
    %v332 = vpop.permute.xlu0 %331
    %334 = vrot.lane.b32.xlu0 %v22, 46
    %v335 = vpop.permute.xlu0 %334
    %337 = vrot.lane.b32.xlu0 %v22, 44
    %v338 = vpop.permute.xlu0 %337
    %340 = vrot.lane.b32.xlu0 %v22, 42
    %v341 = vpop.permute.xlu0 %340
    %343 = vrot.lane.b32.xlu0 %v22, 40
    %v344 = vpop.permute.xlu0 %343
    %346 = vrot.lane.b32.xlu0 %v22, 38
    %v347 = vpop.permute.xlu0 %346
    %349 = vrot.lane.b32.xlu0 %v22, 36
    %v350 = vpop.permute.xlu0 %349
    %352 = vrot.lane.b32.xlu0 %v22, 34
    %v353 = vpop.permute.xlu0 %352
    %355 = vrot.lane.b32.xlu0 %v22, 32
    %v356 = vpop.permute.xlu0 %355
    %358 = vrot.lane.b32.xlu0 %v22, 30
    %v359 = vpop.permute.xlu0 %358
    %361 = vrot.lane.b32.xlu0 %v22, 28
    %v362 = vpop.permute.xlu0 %361
    %364 = vrot.lane.b32.xlu0 %v22, 26
    %v365 = vpop.permute.xlu0 %364
    %367 = vrot.lane.b32.xlu0 %v22, 24
    %v368 = vpop.permute.xlu0 %367
    %370 = vrot.lane.b32.xlu0 %v22, 22
    %v371 = vpop.permute.xlu0 %370
    %373 = vrot.lane.b32.xlu0 %v22, 20
    %v374 = vpop.permute.xlu0 %373
    %376 = vrot.lane.b32.xlu0 %v22, 18
    %v377 = vpop.permute.xlu0 %376
    %379 = vrot.lane.b32.xlu0 %v22, 16
    %v380 = vpop.permute.xlu0 %379
    %382 = vrot.lane.b32.xlu0 %v22, 14
    %v383 = vpop.permute.xlu0 %382
    %385 = vrot.lane.b32.xlu0 %v22, 12
    %v386 = vpop.permute.xlu0 %385
    %388 = vrot.lane.b32.xlu0 %v22, 10
    %v389 = vpop.permute.xlu0 %388
    %391 = vrot.lane.b32.xlu0 %v22, 8
    %v392 = vpop.permute.xlu0 %391
    %394 = vrot.lane.b32.xlu0 %v22, 6
    %v395 = vpop.permute.xlu0 %394
    %397 = vrot.lane.b32.xlu0 %v22, 4
    %v398 = vpop.permute.xlu0 %397
    %400 = vrot.lane.b32.xlu0 %v22, 2
    %v401 = vpop.permute.xlu0 %400
    %v403 = vcombine.low %v21, %v28
    %v404 = vcombine.high %v21, %v28
    %v406 = vunpack.c.l.s4 1983009808
    %v407 = vunpack.c.0.s8 %v406
    %v408 = vlaneseq
    %v409 = vshrl.u32 %v408, 7
    %v410 = vsub.s32 %v407, %v409
    %v411 = vrot.slane %v403, %v410
    %v413 = vunpack.c.l.s4 1983009808
    %v414 = vunpack.c.0.s8 %v413
    %v415 = vlaneseq
    %v416 = vshrl.u32 %v415, 7
    %v417 = vsub.s32 %v414, %v416
    %v418 = vrot.slane %v404, %v417
    %v419 = vcombine.low %v25, %v31
    %v420 = vcombine.high %v25, %v31
    %v422 = vunpack.c.l.s4 1983009808
    %v423 = vunpack.c.0.s8 %v422
    %v424 = vlaneseq
    %v425 = vshrl.u32 %v424, 7
    %v426 = vsub.s32 %v423, %v425
    %v427 = vrot.slane %v419, %v426
    %v429 = vunpack.c.l.s4 1983009808
    %v430 = vunpack.c.0.s8 %v429
    %v431 = vlaneseq
    %v432 = vshrl.u32 %v431, 7
    %v433 = vsub.s32 %v430, %v432
    %v434 = vrot.slane %v420, %v433
    %v435 = vcombine.low %v34, %v40
    %v436 = vcombine.high %v34, %v40
    %v438 = vunpack.c.l.s4 1983009808
    %v439 = vunpack.c.0.s8 %v438
    %v440 = vlaneseq
    %v441 = vshrl.u32 %v440, 7
    %v442 = vsub.s32 %v439, %v441
    %v443 = vrot.slane %v435, %v442
    %v445 = vunpack.c.l.s4 1983009808
    %v446 = vunpack.c.0.s8 %v445
    %v447 = vlaneseq
    %v448 = vshrl.u32 %v447, 7
    %v449 = vsub.s32 %v446, %v448
    %v450 = vrot.slane %v436, %v449
    %v451 = vcombine.low %v37, %v43
    %v452 = vcombine.high %v37, %v43
    %v454 = vunpack.c.l.s4 1983009808
    %v455 = vunpack.c.0.s8 %v454
    %v456 = vlaneseq
    %v457 = vshrl.u32 %v456, 7
    %v458 = vsub.s32 %v455, %v457
    %v459 = vrot.slane %v451, %v458
    %v461 = vunpack.c.l.s4 1983009808
    %v462 = vunpack.c.0.s8 %v461
    %v463 = vlaneseq
    %v464 = vshrl.u32 %v463, 7
    %v465 = vsub.s32 %v462, %v464
    %v466 = vrot.slane %v452, %v465
    %v467 = vcombine.low %v411, %v427
    %v468 = vcombine.high %v411, %v427
    %v470 = vunpack.c.l.s4 1934713408
    %v471 = vunpack.c.0.s8 %v470
    %v472 = vlaneseq
    %v473 = vshrl.u32 %v472, 7
    %v474 = vsub.s32 %v471, %v473
    %v475 = vrot.slane %v467, %v474
    %v477 = vunpack.c.l.s4 1934713408
    %v478 = vunpack.c.0.s8 %v477
    %v479 = vlaneseq
    %v480 = vshrl.u32 %v479, 7
    %v481 = vsub.s32 %v478, %v480
    %v482 = vrot.slane %v468, %v481
    %v483 = vcombine.low %v418, %v434
    %v484 = vcombine.high %v418, %v434
    %v486 = vunpack.c.l.s4 1934713408
    %v487 = vunpack.c.0.s8 %v486
    %v488 = vlaneseq
    %v489 = vshrl.u32 %v488, 7
    %v490 = vsub.s32 %v487, %v489
    %v491 = vrot.slane %v483, %v490
    %v493 = vunpack.c.l.s4 1934713408
    %v494 = vunpack.c.0.s8 %v493
    %v495 = vlaneseq
    %v496 = vshrl.u32 %v495, 7
    %v497 = vsub.s32 %v494, %v496
    %v498 = vrot.slane %v484, %v497
    %v499 = vcombine.low %v443, %v459
    %v500 = vcombine.high %v443, %v459
    %v502 = vunpack.c.l.s4 1934713408
    %v503 = vunpack.c.0.s8 %v502
    %v504 = vlaneseq
    %v505 = vshrl.u32 %v504, 7
    %v506 = vsub.s32 %v503, %v505
    %v507 = vrot.slane %v499, %v506
    %v509 = vunpack.c.l.s4 1934713408
    %v510 = vunpack.c.0.s8 %v509
    %v511 = vlaneseq
    %v512 = vshrl.u32 %v511, 7
    %v513 = vsub.s32 %v510, %v512
    %v514 = vrot.slane %v500, %v513
    %v515 = vcombine.low %v450, %v466
    %v516 = vcombine.high %v450, %v466
    %v518 = vunpack.c.l.s4 1934713408
    %v519 = vunpack.c.0.s8 %v518
    %v520 = vlaneseq
    %v521 = vshrl.u32 %v520, 7
    %v522 = vsub.s32 %v519, %v521
    %v523 = vrot.slane %v515, %v522
    %v525 = vunpack.c.l.s4 1934713408
    %v526 = vunpack.c.0.s8 %v525
    %v527 = vlaneseq
    %v528 = vshrl.u32 %v527, 7
    %v529 = vsub.s32 %v526, %v528
    %v530 = vrot.slane %v516, %v529
    %v531 = vcombine.low %v475, %v507
    %v532 = vcombine.high %v475, %v507
    %v533 = vcombine.low %v482, %v514
    %v534 = vcombine.high %v482, %v514
    %v535 = vcombine.low %v491, %v523
    %v536 = vcombine.high %v491, %v523
    %v537 = vcombine.low %v498, %v530
    %v538 = vcombine.high %v498, %v530
    %v539 = vcombine.low %v46, %v52
    %v540 = vcombine.high %v46, %v52
    %v542 = vunpack.c.l.s4 1983009808
    %v543 = vunpack.c.0.s8 %v542
    %v544 = vlaneseq
    %v545 = vshrl.u32 %v544, 7
    %v546 = vsub.s32 %v543, %v545
    %v547 = vrot.slane %v539, %v546
    %v549 = vunpack.c.l.s4 1983009808
    %v550 = vunpack.c.0.s8 %v549
    %v551 = vlaneseq
    %v552 = vshrl.u32 %v551, 7
    %v553 = vsub.s32 %v550, %v552
    %v554 = vrot.slane %v540, %v553
    %v555 = vcombine.low %v49, %v55
    %v556 = vcombine.high %v49, %v55
    %v558 = vunpack.c.l.s4 1983009808
    %v559 = vunpack.c.0.s8 %v558
    %v560 = vlaneseq
    %v561 = vshrl.u32 %v560, 7
    %v562 = vsub.s32 %v559, %v561
    %v563 = vrot.slane %v555, %v562
    %v565 = vunpack.c.l.s4 1983009808
    %v566 = vunpack.c.0.s8 %v565
    %v567 = vlaneseq
    %v568 = vshrl.u32 %v567, 7
    %v569 = vsub.s32 %v566, %v568
    %v570 = vrot.slane %v556, %v569
    %v571 = vcombine.low %v58, %v64
    %v572 = vcombine.high %v58, %v64
    %v574 = vunpack.c.l.s4 1983009808
    %v575 = vunpack.c.0.s8 %v574
    %v576 = vlaneseq
    %v577 = vshrl.u32 %v576, 7
    %v578 = vsub.s32 %v575, %v577
    %v579 = vrot.slane %v571, %v578
    %v581 = vunpack.c.l.s4 1983009808
    %v582 = vunpack.c.0.s8 %v581
    %v583 = vlaneseq
    %v584 = vshrl.u32 %v583, 7
    %v585 = vsub.s32 %v582, %v584
    %v586 = vrot.slane %v572, %v585
    %v587 = vcombine.low %v61, %v67
    %v588 = vcombine.high %v61, %v67
    %v590 = vunpack.c.l.s4 1983009808
    %v591 = vunpack.c.0.s8 %v590
    %v592 = vlaneseq
    %v593 = vshrl.u32 %v592, 7
    %v594 = vsub.s32 %v591, %v593
    %v595 = vrot.slane %v587, %v594
    %v597 = vunpack.c.l.s4 1983009808
    %v598 = vunpack.c.0.s8 %v597
    %v599 = vlaneseq
    %v600 = vshrl.u32 %v599, 7
    %v601 = vsub.s32 %v598, %v600
    %v602 = vrot.slane %v588, %v601
    %v603 = vcombine.low %v547, %v563
    %v604 = vcombine.high %v547, %v563
    %v606 = vunpack.c.l.s4 1934713408
    %v607 = vunpack.c.0.s8 %v606
    %v608 = vlaneseq
    %v609 = vshrl.u32 %v608, 7
    %v610 = vsub.s32 %v607, %v609
    %v611 = vrot.slane %v603, %v610
    %v613 = vunpack.c.l.s4 1934713408
    %v614 = vunpack.c.0.s8 %v613
    %v615 = vlaneseq
    %v616 = vshrl.u32 %v615, 7
    %v617 = vsub.s32 %v614, %v616
    %v618 = vrot.slane %v604, %v617
    %v619 = vcombine.low %v554, %v570
    %v620 = vcombine.high %v554, %v570
    %v622 = vunpack.c.l.s4 1934713408
    %v623 = vunpack.c.0.s8 %v622
    %v624 = vlaneseq
    %v625 = vshrl.u32 %v624, 7
    %v626 = vsub.s32 %v623, %v625
    %v627 = vrot.slane %v619, %v626
    %v629 = vunpack.c.l.s4 1934713408
    %v630 = vunpack.c.0.s8 %v629
    %v631 = vlaneseq
    %v632 = vshrl.u32 %v631, 7
    %v633 = vsub.s32 %v630, %v632
    %v634 = vrot.slane %v620, %v633
    %v635 = vcombine.low %v579, %v595
    %v636 = vcombine.high %v579, %v595
    %v638 = vunpack.c.l.s4 1934713408
    %v639 = vunpack.c.0.s8 %v638
    %v640 = vlaneseq
    %v641 = vshrl.u32 %v640, 7
    %v642 = vsub.s32 %v639, %v641
    %v643 = vrot.slane %v635, %v642
    %v645 = vunpack.c.l.s4 1934713408
    %v646 = vunpack.c.0.s8 %v645
    %v647 = vlaneseq
    %v648 = vshrl.u32 %v647, 7
    %v649 = vsub.s32 %v646, %v648
    %v650 = vrot.slane %v636, %v649
    %v651 = vcombine.low %v586, %v602
    %v652 = vcombine.high %v586, %v602
    %v654 = vunpack.c.l.s4 1934713408
    %v655 = vunpack.c.0.s8 %v654
    %v656 = vlaneseq
    %v657 = vshrl.u32 %v656, 7
    %v658 = vsub.s32 %v655, %v657
    %v659 = vrot.slane %v651, %v658
    %v661 = vunpack.c.l.s4 1934713408
    %v662 = vunpack.c.0.s8 %v661
    %v663 = vlaneseq
    %v664 = vshrl.u32 %v663, 7
    %v665 = vsub.s32 %v662, %v664
    %v666 = vrot.slane %v652, %v665
    %v667 = vcombine.low %v611, %v643
    %v668 = vcombine.high %v611, %v643
    %v669 = vcombine.low %v618, %v650
    %v670 = vcombine.high %v618, %v650
    %v671 = vcombine.low %v627, %v659
    %v672 = vcombine.high %v627, %v659
    %v673 = vcombine.low %v634, %v666
    %v674 = vcombine.high %v634, %v666
    %v675 = vcombine.low %v70, %v76
    %v676 = vcombine.high %v70, %v76
    %v678 = vunpack.c.l.s4 1983009808
    %v679 = vunpack.c.0.s8 %v678
    %v680 = vlaneseq
    %v681 = vshrl.u32 %v680, 7
    %v682 = vsub.s32 %v679, %v681
    %v683 = vrot.slane %v675, %v682
    %v685 = vunpack.c.l.s4 1983009808
    %v686 = vunpack.c.0.s8 %v685
    %v687 = vlaneseq
    %v688 = vshrl.u32 %v687, 7
    %v689 = vsub.s32 %v686, %v688
    %v690 = vrot.slane %v676, %v689
    %v691 = vcombine.low %v73, %v79
    %v692 = vcombine.high %v73, %v79
    %v694 = vunpack.c.l.s4 1983009808
    %v695 = vunpack.c.0.s8 %v694
    %v696 = vlaneseq
    %v697 = vshrl.u32 %v696, 7
    %v698 = vsub.s32 %v695, %v697
    %v699 = vrot.slane %v691, %v698
    %v701 = vunpack.c.l.s4 1983009808
    %v702 = vunpack.c.0.s8 %v701
    %v703 = vlaneseq
    %v704 = vshrl.u32 %v703, 7
    %v705 = vsub.s32 %v702, %v704
    %v706 = vrot.slane %v692, %v705
    %v707 = vcombine.low %v82, %v88
    %v708 = vcombine.high %v82, %v88
    %v710 = vunpack.c.l.s4 1983009808
    %v711 = vunpack.c.0.s8 %v710
    %v712 = vlaneseq
    %v713 = vshrl.u32 %v712, 7
    %v714 = vsub.s32 %v711, %v713
    %v715 = vrot.slane %v707, %v714
    %v717 = vunpack.c.l.s4 1983009808
    %v718 = vunpack.c.0.s8 %v717
    %v719 = vlaneseq
    %v720 = vshrl.u32 %v719, 7
    %v721 = vsub.s32 %v718, %v720
    %v722 = vrot.slane %v708, %v721
    %v723 = vcombine.low %v85, %v91
    %v724 = vcombine.high %v85, %v91
    %v726 = vunpack.c.l.s4 1983009808
    %v727 = vunpack.c.0.s8 %v726
    %v728 = vlaneseq
    %v729 = vshrl.u32 %v728, 7
    %v730 = vsub.s32 %v727, %v729
    %v731 = vrot.slane %v723, %v730
    %v733 = vunpack.c.l.s4 1983009808
    %v734 = vunpack.c.0.s8 %v733
    %v735 = vlaneseq
    %v736 = vshrl.u32 %v735, 7
    %v737 = vsub.s32 %v734, %v736
    %v738 = vrot.slane %v724, %v737
    %v739 = vcombine.low %v683, %v699
    %v740 = vcombine.high %v683, %v699
    %v742 = vunpack.c.l.s4 1934713408
    %v743 = vunpack.c.0.s8 %v742
    %v744 = vlaneseq
    %v745 = vshrl.u32 %v744, 7
    %v746 = vsub.s32 %v743, %v745
    %v747 = vrot.slane %v739, %v746
    %v749 = vunpack.c.l.s4 1934713408
    %v750 = vunpack.c.0.s8 %v749
    %v751 = vlaneseq
    %v752 = vshrl.u32 %v751, 7
    %v753 = vsub.s32 %v750, %v752
    %v754 = vrot.slane %v740, %v753
    %v755 = vcombine.low %v690, %v706
    %v756 = vcombine.high %v690, %v706
    %v758 = vunpack.c.l.s4 1934713408
    %v759 = vunpack.c.0.s8 %v758
    %v760 = vlaneseq
    %v761 = vshrl.u32 %v760, 7
    %v762 = vsub.s32 %v759, %v761
    %v763 = vrot.slane %v755, %v762
    %v765 = vunpack.c.l.s4 1934713408
    %v766 = vunpack.c.0.s8 %v765
    %v767 = vlaneseq
    %v768 = vshrl.u32 %v767, 7
    %v769 = vsub.s32 %v766, %v768
    %v770 = vrot.slane %v756, %v769
    %v771 = vcombine.low %v715, %v731
    %v772 = vcombine.high %v715, %v731
    %v774 = vunpack.c.l.s4 1934713408
    %v775 = vunpack.c.0.s8 %v774
    %v776 = vlaneseq
    %v777 = vshrl.u32 %v776, 7
    %v778 = vsub.s32 %v775, %v777
    %v779 = vrot.slane %v771, %v778
    %v781 = vunpack.c.l.s4 1934713408
    %v782 = vunpack.c.0.s8 %v781
    %v783 = vlaneseq
    %v784 = vshrl.u32 %v783, 7
    %v785 = vsub.s32 %v782, %v784
    %v786 = vrot.slane %v772, %v785
    %v787 = vcombine.low %v722, %v738
    %v788 = vcombine.high %v722, %v738
    %v790 = vunpack.c.l.s4 1934713408
    %v791 = vunpack.c.0.s8 %v790
    %v792 = vlaneseq
    %v793 = vshrl.u32 %v792, 7
    %v794 = vsub.s32 %v791, %v793
    %v795 = vrot.slane %v787, %v794
    %v797 = vunpack.c.l.s4 1934713408
    %v798 = vunpack.c.0.s8 %v797
    %v799 = vlaneseq
    %v800 = vshrl.u32 %v799, 7
    %v801 = vsub.s32 %v798, %v800
    %v802 = vrot.slane %v788, %v801
    %v803 = vcombine.low %v747, %v779
    %v804 = vcombine.high %v747, %v779
    %v805 = vcombine.low %v754, %v786
    %v806 = vcombine.high %v754, %v786
    %v807 = vcombine.low %v763, %v795
    %v808 = vcombine.high %v763, %v795
    %v809 = vcombine.low %v770, %v802
    %v810 = vcombine.high %v770, %v802
    %v811 = vcombine.low %v94, %v100
    %v812 = vcombine.high %v94, %v100
    %v814 = vunpack.c.l.s4 1983009808
    %v815 = vunpack.c.0.s8 %v814
    %v816 = vlaneseq
    %v817 = vshrl.u32 %v816, 7
    %v818 = vsub.s32 %v815, %v817
    %v819 = vrot.slane %v811, %v818
    %v821 = vunpack.c.l.s4 1983009808
    %v822 = vunpack.c.0.s8 %v821
    %v823 = vlaneseq
    %v824 = vshrl.u32 %v823, 7
    %v825 = vsub.s32 %v822, %v824
    %v826 = vrot.slane %v812, %v825
    %v827 = vcombine.low %v97, %v103
    %v828 = vcombine.high %v97, %v103
    %v830 = vunpack.c.l.s4 1983009808
    %v831 = vunpack.c.0.s8 %v830
    %v832 = vlaneseq
    %v833 = vshrl.u32 %v832, 7
    %v834 = vsub.s32 %v831, %v833
    %v835 = vrot.slane %v827, %v834
    %v837 = vunpack.c.l.s4 1983009808
    %v838 = vunpack.c.0.s8 %v837
    %v839 = vlaneseq
    %v840 = vshrl.u32 %v839, 7
    %v841 = vsub.s32 %v838, %v840
    %v842 = vrot.slane %v828, %v841
    %v843 = vcombine.low %v106, %v112
    %v844 = vcombine.high %v106, %v112
    %v846 = vunpack.c.l.s4 1983009808
    %v847 = vunpack.c.0.s8 %v846
    %v848 = vlaneseq
    %v849 = vshrl.u32 %v848, 7
    %v850 = vsub.s32 %v847, %v849
    %v851 = vrot.slane %v843, %v850
    %v853 = vunpack.c.l.s4 1983009808
    %v854 = vunpack.c.0.s8 %v853
    %v855 = vlaneseq
    %v856 = vshrl.u32 %v855, 7
    %v857 = vsub.s32 %v854, %v856
    %v858 = vrot.slane %v844, %v857
    %v859 = vcombine.low %v109, %v115
    %v860 = vcombine.high %v109, %v115
    %v862 = vunpack.c.l.s4 1983009808
    %v863 = vunpack.c.0.s8 %v862
    %v864 = vlaneseq
    %v865 = vshrl.u32 %v864, 7
    %v866 = vsub.s32 %v863, %v865
    %v867 = vrot.slane %v859, %v866
    %v869 = vunpack.c.l.s4 1983009808
    %v870 = vunpack.c.0.s8 %v869
    %v871 = vlaneseq
    %v872 = vshrl.u32 %v871, 7
    %v873 = vsub.s32 %v870, %v872
    %v874 = vrot.slane %v860, %v873
    %v875 = vcombine.low %v819, %v835
    %v876 = vcombine.high %v819, %v835
    %v878 = vunpack.c.l.s4 1934713408
    %v879 = vunpack.c.0.s8 %v878
    %v880 = vlaneseq
    %v881 = vshrl.u32 %v880, 7
    %v882 = vsub.s32 %v879, %v881
    %v883 = vrot.slane %v875, %v882
    %v885 = vunpack.c.l.s4 1934713408
    %v886 = vunpack.c.0.s8 %v885
    %v887 = vlaneseq
    %v888 = vshrl.u32 %v887, 7
    %v889 = vsub.s32 %v886, %v888
    %v890 = vrot.slane %v876, %v889
    %v891 = vcombine.low %v826, %v842
    %v892 = vcombine.high %v826, %v842
    %v894 = vunpack.c.l.s4 1934713408
    %v895 = vunpack.c.0.s8 %v894
    %v896 = vlaneseq
    %v897 = vshrl.u32 %v896, 7
    %v898 = vsub.s32 %v895, %v897
    %v899 = vrot.slane %v891, %v898
    %v901 = vunpack.c.l.s4 1934713408
    %v902 = vunpack.c.0.s8 %v901
    %v903 = vlaneseq
    %v904 = vshrl.u32 %v903, 7
    %v905 = vsub.s32 %v902, %v904
    %v906 = vrot.slane %v892, %v905
    %v907 = vcombine.low %v851, %v867
    %v908 = vcombine.high %v851, %v867
    %v910 = vunpack.c.l.s4 1934713408
    %v911 = vunpack.c.0.s8 %v910
    %v912 = vlaneseq
    %v913 = vshrl.u32 %v912, 7
    %v914 = vsub.s32 %v911, %v913
    %v915 = vrot.slane %v907, %v914
    %v917 = vunpack.c.l.s4 1934713408
    %v918 = vunpack.c.0.s8 %v917
    %v919 = vlaneseq
    %v920 = vshrl.u32 %v919, 7
    %v921 = vsub.s32 %v918, %v920
    %v922 = vrot.slane %v908, %v921
    %v923 = vcombine.low %v858, %v874
    %v924 = vcombine.high %v858, %v874
    %v926 = vunpack.c.l.s4 1934713408
    %v927 = vunpack.c.0.s8 %v926
    %v928 = vlaneseq
    %v929 = vshrl.u32 %v928, 7
    %v930 = vsub.s32 %v927, %v929
    %v931 = vrot.slane %v923, %v930
    %v933 = vunpack.c.l.s4 1934713408
    %v934 = vunpack.c.0.s8 %v933
    %v935 = vlaneseq
    %v936 = vshrl.u32 %v935, 7
    %v937 = vsub.s32 %v934, %v936
    %v938 = vrot.slane %v924, %v937
    %v939 = vcombine.low %v883, %v915
    %v940 = vcombine.high %v883, %v915
    %v941 = vcombine.low %v890, %v922
    %v942 = vcombine.high %v890, %v922
    %v943 = vcombine.low %v899, %v931
    %v944 = vcombine.high %v899, %v931
    %v945 = vcombine.low %v906, %v938
    %v946 = vcombine.high %v906, %v938
    %v947 = vcombine.low %v118, %v124
    %v948 = vcombine.high %v118, %v124
    %v950 = vunpack.c.l.s4 1983009808
    %v951 = vunpack.c.0.s8 %v950
    %v952 = vlaneseq
    %v953 = vshrl.u32 %v952, 7
    %v954 = vsub.s32 %v951, %v953
    %v955 = vrot.slane %v947, %v954
    %v957 = vunpack.c.l.s4 1983009808
    %v958 = vunpack.c.0.s8 %v957
    %v959 = vlaneseq
    %v960 = vshrl.u32 %v959, 7
    %v961 = vsub.s32 %v958, %v960
    %v962 = vrot.slane %v948, %v961
    %v963 = vcombine.low %v121, %v127
    %v964 = vcombine.high %v121, %v127
    %v966 = vunpack.c.l.s4 1983009808
    %v967 = vunpack.c.0.s8 %v966
    %v968 = vlaneseq
    %v969 = vshrl.u32 %v968, 7
    %v970 = vsub.s32 %v967, %v969
    %v971 = vrot.slane %v963, %v970
    %v973 = vunpack.c.l.s4 1983009808
    %v974 = vunpack.c.0.s8 %v973
    %v975 = vlaneseq
    %v976 = vshrl.u32 %v975, 7
    %v977 = vsub.s32 %v974, %v976
    %v978 = vrot.slane %v964, %v977
    %v979 = vcombine.low %v130, %v136
    %v980 = vcombine.high %v130, %v136
    %v982 = vunpack.c.l.s4 1983009808
    %v983 = vunpack.c.0.s8 %v982
    %v984 = vlaneseq
    %v985 = vshrl.u32 %v984, 7
    %v986 = vsub.s32 %v983, %v985
    %v987 = vrot.slane %v979, %v986
    %v989 = vunpack.c.l.s4 1983009808
    %v990 = vunpack.c.0.s8 %v989
    %v991 = vlaneseq
    %v992 = vshrl.u32 %v991, 7
    %v993 = vsub.s32 %v990, %v992
    %v994 = vrot.slane %v980, %v993
    %v995 = vcombine.low %v133, %v139
    %v996 = vcombine.high %v133, %v139
    %v998 = vunpack.c.l.s4 1983009808
    %v999 = vunpack.c.0.s8 %v998
    %v1000 = vlaneseq
    %v1001 = vshrl.u32 %v1000, 7
    %v1002 = vsub.s32 %v999, %v1001
    %v1003 = vrot.slane %v995, %v1002
    %v1005 = vunpack.c.l.s4 1983009808
    %v1006 = vunpack.c.0.s8 %v1005
    %v1007 = vlaneseq
    %v1008 = vshrl.u32 %v1007, 7
    %v1009 = vsub.s32 %v1006, %v1008
    %v1010 = vrot.slane %v996, %v1009
    %v1011 = vcombine.low %v955, %v971
    %v1012 = vcombine.high %v955, %v971
    %v1014 = vunpack.c.l.s4 1934713408
    %v1015 = vunpack.c.0.s8 %v1014
    %v1016 = vlaneseq
    %v1017 = vshrl.u32 %v1016, 7
    %v1018 = vsub.s32 %v1015, %v1017
    %v1019 = vrot.slane %v1011, %v1018
    %v1021 = vunpack.c.l.s4 1934713408
    %v1022 = vunpack.c.0.s8 %v1021
    %v1023 = vlaneseq
    %v1024 = vshrl.u32 %v1023, 7
    %v1025 = vsub.s32 %v1022, %v1024
    %v1026 = vrot.slane %v1012, %v1025
    %v1027 = vcombine.low %v962, %v978
    %v1028 = vcombine.high %v962, %v978
    %v1030 = vunpack.c.l.s4 1934713408
    %v1031 = vunpack.c.0.s8 %v1030
    %v1032 = vlaneseq
    %v1033 = vshrl.u32 %v1032, 7
    %v1034 = vsub.s32 %v1031, %v1033
    %v1035 = vrot.slane %v1027, %v1034
    %v1037 = vunpack.c.l.s4 1934713408
    %v1038 = vunpack.c.0.s8 %v1037
    %v1039 = vlaneseq
    %v1040 = vshrl.u32 %v1039, 7
    %v1041 = vsub.s32 %v1038, %v1040
    %v1042 = vrot.slane %v1028, %v1041
    %v1043 = vcombine.low %v987, %v1003
    %v1044 = vcombine.high %v987, %v1003
    %v1046 = vunpack.c.l.s4 1934713408
    %v1047 = vunpack.c.0.s8 %v1046
    %v1048 = vlaneseq
    %v1049 = vshrl.u32 %v1048, 7
    %v1050 = vsub.s32 %v1047, %v1049
    %v1051 = vrot.slane %v1043, %v1050
    %v1053 = vunpack.c.l.s4 1934713408
    %v1054 = vunpack.c.0.s8 %v1053
    %v1055 = vlaneseq
    %v1056 = vshrl.u32 %v1055, 7
    %v1057 = vsub.s32 %v1054, %v1056
    %v1058 = vrot.slane %v1044, %v1057
    %v1059 = vcombine.low %v994, %v1010
    %v1060 = vcombine.high %v994, %v1010
    %v1062 = vunpack.c.l.s4 1934713408
    %v1063 = vunpack.c.0.s8 %v1062
    %v1064 = vlaneseq
    %v1065 = vshrl.u32 %v1064, 7
    %v1066 = vsub.s32 %v1063, %v1065
    %v1067 = vrot.slane %v1059, %v1066
    %v1069 = vunpack.c.l.s4 1934713408
    %v1070 = vunpack.c.0.s8 %v1069
    %v1071 = vlaneseq
    %v1072 = vshrl.u32 %v1071, 7
    %v1073 = vsub.s32 %v1070, %v1072
    %v1074 = vrot.slane %v1060, %v1073
    %v1075 = vcombine.low %v1019, %v1051
    %v1076 = vcombine.high %v1019, %v1051
    %v1077 = vcombine.low %v1026, %v1058
    %v1078 = vcombine.high %v1026, %v1058
    %v1079 = vcombine.low %v1035, %v1067
    %v1080 = vcombine.high %v1035, %v1067
    %v1081 = vcombine.low %v1042, %v1074
    %v1082 = vcombine.high %v1042, %v1074
    %v1083 = vcombine.low %v142, %v148
    %v1084 = vcombine.high %v142, %v148
    %v1086 = vunpack.c.l.s4 1983009808
    %v1087 = vunpack.c.0.s8 %v1086
    %v1088 = vlaneseq
    %v1089 = vshrl.u32 %v1088, 7
    %v1090 = vsub.s32 %v1087, %v1089
    %v1091 = vrot.slane %v1083, %v1090
    %v1093 = vunpack.c.l.s4 1983009808
    %v1094 = vunpack.c.0.s8 %v1093
    %v1095 = vlaneseq
    %v1096 = vshrl.u32 %v1095, 7
    %v1097 = vsub.s32 %v1094, %v1096
    %v1098 = vrot.slane %v1084, %v1097
    %v1099 = vcombine.low %v145, %v151
    %v1100 = vcombine.high %v145, %v151
    %v1102 = vunpack.c.l.s4 1983009808
    %v1103 = vunpack.c.0.s8 %v1102
    %v1104 = vlaneseq
    %v1105 = vshrl.u32 %v1104, 7
    %v1106 = vsub.s32 %v1103, %v1105
    %v1107 = vrot.slane %v1099, %v1106
    %v1109 = vunpack.c.l.s4 1983009808
    %v1110 = vunpack.c.0.s8 %v1109
    %v1111 = vlaneseq
    %v1112 = vshrl.u32 %v1111, 7
    %v1113 = vsub.s32 %v1110, %v1112
    %v1114 = vrot.slane %v1100, %v1113
    %v1115 = vcombine.low %v154, %v160
    %v1116 = vcombine.high %v154, %v160
    %v1118 = vunpack.c.l.s4 1983009808
    %v1119 = vunpack.c.0.s8 %v1118
    %v1120 = vlaneseq
    %v1121 = vshrl.u32 %v1120, 7
    %v1122 = vsub.s32 %v1119, %v1121
    %v1123 = vrot.slane %v1115, %v1122
    %v1125 = vunpack.c.l.s4 1983009808
    %v1126 = vunpack.c.0.s8 %v1125
    %v1127 = vlaneseq
    %v1128 = vshrl.u32 %v1127, 7
    %v1129 = vsub.s32 %v1126, %v1128
    %v1130 = vrot.slane %v1116, %v1129
    %v1131 = vcombine.low %v157, %v163
    %v1132 = vcombine.high %v157, %v163
    %v1134 = vunpack.c.l.s4 1983009808
    %v1135 = vunpack.c.0.s8 %v1134
    %v1136 = vlaneseq
    %v1137 = vshrl.u32 %v1136, 7
    %v1138 = vsub.s32 %v1135, %v1137
    %v1139 = vrot.slane %v1131, %v1138
    %v1141 = vunpack.c.l.s4 1983009808
    %v1142 = vunpack.c.0.s8 %v1141
    %v1143 = vlaneseq
    %v1144 = vshrl.u32 %v1143, 7
    %v1145 = vsub.s32 %v1142, %v1144
    %v1146 = vrot.slane %v1132, %v1145
    %v1147 = vcombine.low %v1091, %v1107
    %v1148 = vcombine.high %v1091, %v1107
    %v1150 = vunpack.c.l.s4 1934713408
    %v1151 = vunpack.c.0.s8 %v1150
    %v1152 = vlaneseq
    %v1153 = vshrl.u32 %v1152, 7
    %v1154 = vsub.s32 %v1151, %v1153
    %v1155 = vrot.slane %v1147, %v1154
    %v1157 = vunpack.c.l.s4 1934713408
    %v1158 = vunpack.c.0.s8 %v1157
    %v1159 = vlaneseq
    %v1160 = vshrl.u32 %v1159, 7
    %v1161 = vsub.s32 %v1158, %v1160
    %v1162 = vrot.slane %v1148, %v1161
    %v1163 = vcombine.low %v1098, %v1114
    %v1164 = vcombine.high %v1098, %v1114
    %v1166 = vunpack.c.l.s4 1934713408
    %v1167 = vunpack.c.0.s8 %v1166
    %v1168 = vlaneseq
    %v1169 = vshrl.u32 %v1168, 7
    %v1170 = vsub.s32 %v1167, %v1169
    %v1171 = vrot.slane %v1163, %v1170
    %v1173 = vunpack.c.l.s4 1934713408
    %v1174 = vunpack.c.0.s8 %v1173
    %v1175 = vlaneseq
    %v1176 = vshrl.u32 %v1175, 7
    %v1177 = vsub.s32 %v1174, %v1176
    %v1178 = vrot.slane %v1164, %v1177
    %v1179 = vcombine.low %v1123, %v1139
    %v1180 = vcombine.high %v1123, %v1139
    %v1182 = vunpack.c.l.s4 1934713408
    %v1183 = vunpack.c.0.s8 %v1182
    %v1184 = vlaneseq
    %v1185 = vshrl.u32 %v1184, 7
    %v1186 = vsub.s32 %v1183, %v1185
    %v1187 = vrot.slane %v1179, %v1186
    %v1189 = vunpack.c.l.s4 1934713408
    %v1190 = vunpack.c.0.s8 %v1189
    %v1191 = vlaneseq
    %v1192 = vshrl.u32 %v1191, 7
    %v1193 = vsub.s32 %v1190, %v1192
    %v1194 = vrot.slane %v1180, %v1193
    %v1195 = vcombine.low %v1130, %v1146
    %v1196 = vcombine.high %v1130, %v1146
    %v1198 = vunpack.c.l.s4 1934713408
    %v1199 = vunpack.c.0.s8 %v1198
    %v1200 = vlaneseq
    %v1201 = vshrl.u32 %v1200, 7
    %v1202 = vsub.s32 %v1199, %v1201
    %v1203 = vrot.slane %v1195, %v1202
    %v1205 = vunpack.c.l.s4 1934713408
    %v1206 = vunpack.c.0.s8 %v1205
    %v1207 = vlaneseq
    %v1208 = vshrl.u32 %v1207, 7
    %v1209 = vsub.s32 %v1206, %v1208
    %v1210 = vrot.slane %v1196, %v1209
    %v1211 = vcombine.low %v1155, %v1187
    %v1212 = vcombine.high %v1155, %v1187
    %v1213 = vcombine.low %v1162, %v1194
    %v1214 = vcombine.high %v1162, %v1194
    %v1215 = vcombine.low %v1171, %v1203
    %v1216 = vcombine.high %v1171, %v1203
    %v1217 = vcombine.low %v1178, %v1210
    %v1218 = vcombine.high %v1178, %v1210
    %v1219 = vcombine.low %v166, %v172
    %v1220 = vcombine.high %v166, %v172
    %v1222 = vunpack.c.l.s4 1983009808
    %v1223 = vunpack.c.0.s8 %v1222
    %v1224 = vlaneseq
    %v1225 = vshrl.u32 %v1224, 7
    %v1226 = vsub.s32 %v1223, %v1225
    %v1227 = vrot.slane %v1219, %v1226
    %v1229 = vunpack.c.l.s4 1983009808
    %v1230 = vunpack.c.0.s8 %v1229
    %v1231 = vlaneseq
    %v1232 = vshrl.u32 %v1231, 7
    %v1233 = vsub.s32 %v1230, %v1232
    %v1234 = vrot.slane %v1220, %v1233
    %v1235 = vcombine.low %v169, %v175
    %v1236 = vcombine.high %v169, %v175
    %v1238 = vunpack.c.l.s4 1983009808
    %v1239 = vunpack.c.0.s8 %v1238
    %v1240 = vlaneseq
    %v1241 = vshrl.u32 %v1240, 7
    %v1242 = vsub.s32 %v1239, %v1241
    %v1243 = vrot.slane %v1235, %v1242
    %v1245 = vunpack.c.l.s4 1983009808
    %v1246 = vunpack.c.0.s8 %v1245
    %v1247 = vlaneseq
    %v1248 = vshrl.u32 %v1247, 7
    %v1249 = vsub.s32 %v1246, %v1248
    %v1250 = vrot.slane %v1236, %v1249
    %v1251 = vcombine.low %v178, %v184
    %v1252 = vcombine.high %v178, %v184
    %v1254 = vunpack.c.l.s4 1983009808
    %v1255 = vunpack.c.0.s8 %v1254
    %v1256 = vlaneseq
    %v1257 = vshrl.u32 %v1256, 7
    %v1258 = vsub.s32 %v1255, %v1257
    %v1259 = vrot.slane %v1251, %v1258
    %v1261 = vunpack.c.l.s4 1983009808
    %v1262 = vunpack.c.0.s8 %v1261
    %v1263 = vlaneseq
    %v1264 = vshrl.u32 %v1263, 7
    %v1265 = vsub.s32 %v1262, %v1264
    %v1266 = vrot.slane %v1252, %v1265
    %v1267 = vcombine.low %v181, %v187
    %v1268 = vcombine.high %v181, %v187
    %v1270 = vunpack.c.l.s4 1983009808
    %v1271 = vunpack.c.0.s8 %v1270
    %v1272 = vlaneseq
    %v1273 = vshrl.u32 %v1272, 7
    %v1274 = vsub.s32 %v1271, %v1273
    %v1275 = vrot.slane %v1267, %v1274
    %v1277 = vunpack.c.l.s4 1983009808
    %v1278 = vunpack.c.0.s8 %v1277
    %v1279 = vlaneseq
    %v1280 = vshrl.u32 %v1279, 7
    %v1281 = vsub.s32 %v1278, %v1280
    %v1282 = vrot.slane %v1268, %v1281
    %v1283 = vcombine.low %v1227, %v1243
    %v1284 = vcombine.high %v1227, %v1243
    %v1286 = vunpack.c.l.s4 1934713408
    %v1287 = vunpack.c.0.s8 %v1286
    %v1288 = vlaneseq
    %v1289 = vshrl.u32 %v1288, 7
    %v1290 = vsub.s32 %v1287, %v1289
    %v1291 = vrot.slane %v1283, %v1290
    %v1293 = vunpack.c.l.s4 1934713408
    %v1294 = vunpack.c.0.s8 %v1293
    %v1295 = vlaneseq
    %v1296 = vshrl.u32 %v1295, 7
    %v1297 = vsub.s32 %v1294, %v1296
    %v1298 = vrot.slane %v1284, %v1297
    %v1299 = vcombine.low %v1234, %v1250
    %v1300 = vcombine.high %v1234, %v1250
    %v1302 = vunpack.c.l.s4 1934713408
    %v1303 = vunpack.c.0.s8 %v1302
    %v1304 = vlaneseq
    %v1305 = vshrl.u32 %v1304, 7
    %v1306 = vsub.s32 %v1303, %v1305
    %v1307 = vrot.slane %v1299, %v1306
    %v1309 = vunpack.c.l.s4 1934713408
    %v1310 = vunpack.c.0.s8 %v1309
    %v1311 = vlaneseq
    %v1312 = vshrl.u32 %v1311, 7
    %v1313 = vsub.s32 %v1310, %v1312
    %v1314 = vrot.slane %v1300, %v1313
    %v1315 = vcombine.low %v1259, %v1275
    %v1316 = vcombine.high %v1259, %v1275
    %v1318 = vunpack.c.l.s4 1934713408
    %v1319 = vunpack.c.0.s8 %v1318
    %v1320 = vlaneseq
    %v1321 = vshrl.u32 %v1320, 7
    %v1322 = vsub.s32 %v1319, %v1321
    %v1323 = vrot.slane %v1315, %v1322
    %v1325 = vunpack.c.l.s4 1934713408
    %v1326 = vunpack.c.0.s8 %v1325
    %v1327 = vlaneseq
    %v1328 = vshrl.u32 %v1327, 7
    %v1329 = vsub.s32 %v1326, %v1328
    %v1330 = vrot.slane %v1316, %v1329
    %v1331 = vcombine.low %v1266, %v1282
    %v1332 = vcombine.high %v1266, %v1282
    %v1334 = vunpack.c.l.s4 1934713408
    %v1335 = vunpack.c.0.s8 %v1334
    %v1336 = vlaneseq
    %v1337 = vshrl.u32 %v1336, 7
    %v1338 = vsub.s32 %v1335, %v1337
    %v1339 = vrot.slane %v1331, %v1338
    %v1341 = vunpack.c.l.s4 1934713408
    %v1342 = vunpack.c.0.s8 %v1341
    %v1343 = vlaneseq
    %v1344 = vshrl.u32 %v1343, 7
    %v1345 = vsub.s32 %v1342, %v1344
    %v1346 = vrot.slane %v1332, %v1345
    %v1347 = vcombine.low %v1291, %v1323
    %v1348 = vcombine.high %v1291, %v1323
    %v1349 = vcombine.low %v1298, %v1330
    %v1350 = vcombine.high %v1298, %v1330
    %v1351 = vcombine.low %v1307, %v1339
    %v1352 = vcombine.high %v1307, %v1339
    %v1353 = vcombine.low %v1314, %v1346
    %v1354 = vcombine.high %v1314, %v1346
    %v1355 = vcombine.low %v190, %v196
    %v1356 = vcombine.high %v190, %v196
    %v1358 = vunpack.c.l.s4 1983009808
    %v1359 = vunpack.c.0.s8 %v1358
    %v1360 = vlaneseq
    %v1361 = vshrl.u32 %v1360, 7
    %v1362 = vsub.s32 %v1359, %v1361
    %v1363 = vrot.slane %v1355, %v1362
    %v1365 = vunpack.c.l.s4 1983009808
    %v1366 = vunpack.c.0.s8 %v1365
    %v1367 = vlaneseq
    %v1368 = vshrl.u32 %v1367, 7
    %v1369 = vsub.s32 %v1366, %v1368
    %v1370 = vrot.slane %v1356, %v1369
    %v1371 = vcombine.low %v193, %v199
    %v1372 = vcombine.high %v193, %v199
    %v1374 = vunpack.c.l.s4 1983009808
    %v1375 = vunpack.c.0.s8 %v1374
    %v1376 = vlaneseq
    %v1377 = vshrl.u32 %v1376, 7
    %v1378 = vsub.s32 %v1375, %v1377
    %v1379 = vrot.slane %v1371, %v1378
    %v1381 = vunpack.c.l.s4 1983009808
    %v1382 = vunpack.c.0.s8 %v1381
    %v1383 = vlaneseq
    %v1384 = vshrl.u32 %v1383, 7
    %v1385 = vsub.s32 %v1382, %v1384
    %v1386 = vrot.slane %v1372, %v1385
    %v1387 = vcombine.low %v202, %v208
    %v1388 = vcombine.high %v202, %v208
    %v1390 = vunpack.c.l.s4 1983009808
    %v1391 = vunpack.c.0.s8 %v1390
    %v1392 = vlaneseq
    %v1393 = vshrl.u32 %v1392, 7
    %v1394 = vsub.s32 %v1391, %v1393
    %v1395 = vrot.slane %v1387, %v1394
    %v1397 = vunpack.c.l.s4 1983009808
    %v1398 = vunpack.c.0.s8 %v1397
    %v1399 = vlaneseq
    %v1400 = vshrl.u32 %v1399, 7
    %v1401 = vsub.s32 %v1398, %v1400
    %v1402 = vrot.slane %v1388, %v1401
    %v1403 = vcombine.low %v205, %v211
    %v1404 = vcombine.high %v205, %v211
    %v1406 = vunpack.c.l.s4 1983009808
    %v1407 = vunpack.c.0.s8 %v1406
    %v1408 = vlaneseq
    %v1409 = vshrl.u32 %v1408, 7
    %v1410 = vsub.s32 %v1407, %v1409
    %v1411 = vrot.slane %v1403, %v1410
    %v1413 = vunpack.c.l.s4 1983009808
    %v1414 = vunpack.c.0.s8 %v1413
    %v1415 = vlaneseq
    %v1416 = vshrl.u32 %v1415, 7
    %v1417 = vsub.s32 %v1414, %v1416
    %v1418 = vrot.slane %v1404, %v1417
    %v1419 = vcombine.low %v1363, %v1379
    %v1420 = vcombine.high %v1363, %v1379
    %v1422 = vunpack.c.l.s4 1934713408
    %v1423 = vunpack.c.0.s8 %v1422
    %v1424 = vlaneseq
    %v1425 = vshrl.u32 %v1424, 7
    %v1426 = vsub.s32 %v1423, %v1425
    %v1427 = vrot.slane %v1419, %v1426
    %v1429 = vunpack.c.l.s4 1934713408
    %v1430 = vunpack.c.0.s8 %v1429
    %v1431 = vlaneseq
    %v1432 = vshrl.u32 %v1431, 7
    %v1433 = vsub.s32 %v1430, %v1432
    %v1434 = vrot.slane %v1420, %v1433
    %v1435 = vcombine.low %v1370, %v1386
    %v1436 = vcombine.high %v1370, %v1386
    %v1438 = vunpack.c.l.s4 1934713408
    %v1439 = vunpack.c.0.s8 %v1438
    %v1440 = vlaneseq
    %v1441 = vshrl.u32 %v1440, 7
    %v1442 = vsub.s32 %v1439, %v1441
    %v1443 = vrot.slane %v1435, %v1442
    %v1445 = vunpack.c.l.s4 1934713408
    %v1446 = vunpack.c.0.s8 %v1445
    %v1447 = vlaneseq
    %v1448 = vshrl.u32 %v1447, 7
    %v1449 = vsub.s32 %v1446, %v1448
    %v1450 = vrot.slane %v1436, %v1449
    %v1451 = vcombine.low %v1395, %v1411
    %v1452 = vcombine.high %v1395, %v1411
    %v1454 = vunpack.c.l.s4 1934713408
    %v1455 = vunpack.c.0.s8 %v1454
    %v1456 = vlaneseq
    %v1457 = vshrl.u32 %v1456, 7
    %v1458 = vsub.s32 %v1455, %v1457
    %v1459 = vrot.slane %v1451, %v1458
    %v1461 = vunpack.c.l.s4 1934713408
    %v1462 = vunpack.c.0.s8 %v1461
    %v1463 = vlaneseq
    %v1464 = vshrl.u32 %v1463, 7
    %v1465 = vsub.s32 %v1462, %v1464
    %v1466 = vrot.slane %v1452, %v1465
    %v1467 = vcombine.low %v1402, %v1418
    %v1468 = vcombine.high %v1402, %v1418
    %v1470 = vunpack.c.l.s4 1934713408
    %v1471 = vunpack.c.0.s8 %v1470
    %v1472 = vlaneseq
    %v1473 = vshrl.u32 %v1472, 7
    %v1474 = vsub.s32 %v1471, %v1473
    %v1475 = vrot.slane %v1467, %v1474
    %v1477 = vunpack.c.l.s4 1934713408
    %v1478 = vunpack.c.0.s8 %v1477
    %v1479 = vlaneseq
    %v1480 = vshrl.u32 %v1479, 7
    %v1481 = vsub.s32 %v1478, %v1480
    %v1482 = vrot.slane %v1468, %v1481
    %v1483 = vcombine.low %v1427, %v1459
    %v1484 = vcombine.high %v1427, %v1459
    %v1485 = vcombine.low %v1434, %v1466
    %v1486 = vcombine.high %v1434, %v1466
    %v1487 = vcombine.low %v1443, %v1475
    %v1488 = vcombine.high %v1443, %v1475
    %v1489 = vcombine.low %v1450, %v1482
    %v1490 = vcombine.high %v1450, %v1482
    %v1491 = vcombine.low %v22, %v218
    %v1492 = vcombine.high %v22, %v218
    %v1494 = vunpack.c.l.s4 1983009808
    %v1495 = vunpack.c.0.s8 %v1494
    %v1496 = vlaneseq
    %v1497 = vshrl.u32 %v1496, 7
    %v1498 = vsub.s32 %v1495, %v1497
    %v1499 = vrot.slane %v1491, %v1498
    %v1501 = vunpack.c.l.s4 1983009808
    %v1502 = vunpack.c.0.s8 %v1501
    %v1503 = vlaneseq
    %v1504 = vshrl.u32 %v1503, 7
    %v1505 = vsub.s32 %v1502, %v1504
    %v1506 = vrot.slane %v1492, %v1505
    %v1507 = vcombine.low %v215, %v221
    %v1508 = vcombine.high %v215, %v221
    %v1510 = vunpack.c.l.s4 1983009808
    %v1511 = vunpack.c.0.s8 %v1510
    %v1512 = vlaneseq
    %v1513 = vshrl.u32 %v1512, 7
    %v1514 = vsub.s32 %v1511, %v1513
    %v1515 = vrot.slane %v1507, %v1514
    %v1517 = vunpack.c.l.s4 1983009808
    %v1518 = vunpack.c.0.s8 %v1517
    %v1519 = vlaneseq
    %v1520 = vshrl.u32 %v1519, 7
    %v1521 = vsub.s32 %v1518, %v1520
    %v1522 = vrot.slane %v1508, %v1521
    %v1523 = vcombine.low %v224, %v230
    %v1524 = vcombine.high %v224, %v230
    %v1526 = vunpack.c.l.s4 1983009808
    %v1527 = vunpack.c.0.s8 %v1526
    %v1528 = vlaneseq
    %v1529 = vshrl.u32 %v1528, 7
    %v1530 = vsub.s32 %v1527, %v1529
    %v1531 = vrot.slane %v1523, %v1530
    %v1533 = vunpack.c.l.s4 1983009808
    %v1534 = vunpack.c.0.s8 %v1533
    %v1535 = vlaneseq
    %v1536 = vshrl.u32 %v1535, 7
    %v1537 = vsub.s32 %v1534, %v1536
    %v1538 = vrot.slane %v1524, %v1537
    %v1539 = vcombine.low %v227, %v233
    %v1540 = vcombine.high %v227, %v233
    %v1542 = vunpack.c.l.s4 1983009808
    %v1543 = vunpack.c.0.s8 %v1542
    %v1544 = vlaneseq
    %v1545 = vshrl.u32 %v1544, 7
    %v1546 = vsub.s32 %v1543, %v1545
    %v1547 = vrot.slane %v1539, %v1546
    %v1549 = vunpack.c.l.s4 1983009808
    %v1550 = vunpack.c.0.s8 %v1549
    %v1551 = vlaneseq
    %v1552 = vshrl.u32 %v1551, 7
    %v1553 = vsub.s32 %v1550, %v1552
    %v1554 = vrot.slane %v1540, %v1553
    %v1555 = vcombine.low %v1499, %v1515
    %v1556 = vcombine.high %v1499, %v1515
    %v1558 = vunpack.c.l.s4 1934713408
    %v1559 = vunpack.c.0.s8 %v1558
    %v1560 = vlaneseq
    %v1561 = vshrl.u32 %v1560, 7
    %v1562 = vsub.s32 %v1559, %v1561
    %v1563 = vrot.slane %v1555, %v1562
    %v1565 = vunpack.c.l.s4 1934713408
    %v1566 = vunpack.c.0.s8 %v1565
    %v1567 = vlaneseq
    %v1568 = vshrl.u32 %v1567, 7
    %v1569 = vsub.s32 %v1566, %v1568
    %v1570 = vrot.slane %v1556, %v1569
    %v1571 = vcombine.low %v1506, %v1522
    %v1572 = vcombine.high %v1506, %v1522
    %v1574 = vunpack.c.l.s4 1934713408
    %v1575 = vunpack.c.0.s8 %v1574
    %v1576 = vlaneseq
    %v1577 = vshrl.u32 %v1576, 7
    %v1578 = vsub.s32 %v1575, %v1577
    %v1579 = vrot.slane %v1571, %v1578
    %v1581 = vunpack.c.l.s4 1934713408
    %v1582 = vunpack.c.0.s8 %v1581
    %v1583 = vlaneseq
    %v1584 = vshrl.u32 %v1583, 7
    %v1585 = vsub.s32 %v1582, %v1584
    %v1586 = vrot.slane %v1572, %v1585
    %v1587 = vcombine.low %v1531, %v1547
    %v1588 = vcombine.high %v1531, %v1547
    %v1590 = vunpack.c.l.s4 1934713408
    %v1591 = vunpack.c.0.s8 %v1590
    %v1592 = vlaneseq
    %v1593 = vshrl.u32 %v1592, 7
    %v1594 = vsub.s32 %v1591, %v1593
    %v1595 = vrot.slane %v1587, %v1594
    %v1597 = vunpack.c.l.s4 1934713408
    %v1598 = vunpack.c.0.s8 %v1597
    %v1599 = vlaneseq
    %v1600 = vshrl.u32 %v1599, 7
    %v1601 = vsub.s32 %v1598, %v1600
    %v1602 = vrot.slane %v1588, %v1601
    %v1603 = vcombine.low %v1538, %v1554
    %v1604 = vcombine.high %v1538, %v1554
    %v1606 = vunpack.c.l.s4 1934713408
    %v1607 = vunpack.c.0.s8 %v1606
    %v1608 = vlaneseq
    %v1609 = vshrl.u32 %v1608, 7
    %v1610 = vsub.s32 %v1607, %v1609
    %v1611 = vrot.slane %v1603, %v1610
    %v1613 = vunpack.c.l.s4 1934713408
    %v1614 = vunpack.c.0.s8 %v1613
    %v1615 = vlaneseq
    %v1616 = vshrl.u32 %v1615, 7
    %v1617 = vsub.s32 %v1614, %v1616
    %v1618 = vrot.slane %v1604, %v1617
    %v1619 = vcombine.low %v1563, %v1595
    %v1620 = vcombine.high %v1563, %v1595
    %v1621 = vcombine.low %v1570, %v1602
    %v1622 = vcombine.high %v1570, %v1602
    %v1623 = vcombine.low %v1579, %v1611
    %v1624 = vcombine.high %v1579, %v1611
    %v1625 = vcombine.low %v1586, %v1618
    %v1626 = vcombine.high %v1586, %v1618
    %v1627 = vcombine.low %v236, %v242
    %v1628 = vcombine.high %v236, %v242
    %v1630 = vunpack.c.l.s4 1983009808
    %v1631 = vunpack.c.0.s8 %v1630
    %v1632 = vlaneseq
    %v1633 = vshrl.u32 %v1632, 7
    %v1634 = vsub.s32 %v1631, %v1633
    %v1635 = vrot.slane %v1627, %v1634
    %v1637 = vunpack.c.l.s4 1983009808
    %v1638 = vunpack.c.0.s8 %v1637
    %v1639 = vlaneseq
    %v1640 = vshrl.u32 %v1639, 7
    %v1641 = vsub.s32 %v1638, %v1640
    %v1642 = vrot.slane %v1628, %v1641
    %v1643 = vcombine.low %v239, %v245
    %v1644 = vcombine.high %v239, %v245
    %v1646 = vunpack.c.l.s4 1983009808
    %v1647 = vunpack.c.0.s8 %v1646
    %v1648 = vlaneseq
    %v1649 = vshrl.u32 %v1648, 7
    %v1650 = vsub.s32 %v1647, %v1649
    %v1651 = vrot.slane %v1643, %v1650
    %v1653 = vunpack.c.l.s4 1983009808
    %v1654 = vunpack.c.0.s8 %v1653
    %v1655 = vlaneseq
    %v1656 = vshrl.u32 %v1655, 7
    %v1657 = vsub.s32 %v1654, %v1656
    %v1658 = vrot.slane %v1644, %v1657
    %v1659 = vcombine.low %v248, %v254
    %v1660 = vcombine.high %v248, %v254
    %v1662 = vunpack.c.l.s4 1983009808
    %v1663 = vunpack.c.0.s8 %v1662
    %v1664 = vlaneseq
    %v1665 = vshrl.u32 %v1664, 7
    %v1666 = vsub.s32 %v1663, %v1665
    %v1667 = vrot.slane %v1659, %v1666
    %v1669 = vunpack.c.l.s4 1983009808
    %v1670 = vunpack.c.0.s8 %v1669
    %v1671 = vlaneseq
    %v1672 = vshrl.u32 %v1671, 7
    %v1673 = vsub.s32 %v1670, %v1672
    %v1674 = vrot.slane %v1660, %v1673
    %v1675 = vcombine.low %v251, %v257
    %v1676 = vcombine.high %v251, %v257
    %v1678 = vunpack.c.l.s4 1983009808
    %v1679 = vunpack.c.0.s8 %v1678
    %v1680 = vlaneseq
    %v1681 = vshrl.u32 %v1680, 7
    %v1682 = vsub.s32 %v1679, %v1681
    %v1683 = vrot.slane %v1675, %v1682
    %v1685 = vunpack.c.l.s4 1983009808
    %v1686 = vunpack.c.0.s8 %v1685
    %v1687 = vlaneseq
    %v1688 = vshrl.u32 %v1687, 7
    %v1689 = vsub.s32 %v1686, %v1688
    %v1690 = vrot.slane %v1676, %v1689
    %v1691 = vcombine.low %v1635, %v1651
    %v1692 = vcombine.high %v1635, %v1651
    %v1694 = vunpack.c.l.s4 1934713408
    %v1695 = vunpack.c.0.s8 %v1694
    %v1696 = vlaneseq
    %v1697 = vshrl.u32 %v1696, 7
    %v1698 = vsub.s32 %v1695, %v1697
    %v1699 = vrot.slane %v1691, %v1698
    %v1701 = vunpack.c.l.s4 1934713408
    %v1702 = vunpack.c.0.s8 %v1701
    %v1703 = vlaneseq
    %v1704 = vshrl.u32 %v1703, 7
    %v1705 = vsub.s32 %v1702, %v1704
    %v1706 = vrot.slane %v1692, %v1705
    %v1707 = vcombine.low %v1642, %v1658
    %v1708 = vcombine.high %v1642, %v1658
    %v1710 = vunpack.c.l.s4 1934713408
    %v1711 = vunpack.c.0.s8 %v1710
    %v1712 = vlaneseq
    %v1713 = vshrl.u32 %v1712, 7
    %v1714 = vsub.s32 %v1711, %v1713
    %v1715 = vrot.slane %v1707, %v1714
    %v1717 = vunpack.c.l.s4 1934713408
    %v1718 = vunpack.c.0.s8 %v1717
    %v1719 = vlaneseq
    %v1720 = vshrl.u32 %v1719, 7
    %v1721 = vsub.s32 %v1718, %v1720
    %v1722 = vrot.slane %v1708, %v1721
    %v1723 = vcombine.low %v1667, %v1683
    %v1724 = vcombine.high %v1667, %v1683
    %v1726 = vunpack.c.l.s4 1934713408
    %v1727 = vunpack.c.0.s8 %v1726
    %v1728 = vlaneseq
    %v1729 = vshrl.u32 %v1728, 7
    %v1730 = vsub.s32 %v1727, %v1729
    %v1731 = vrot.slane %v1723, %v1730
    %v1733 = vunpack.c.l.s4 1934713408
    %v1734 = vunpack.c.0.s8 %v1733
    %v1735 = vlaneseq
    %v1736 = vshrl.u32 %v1735, 7
    %v1737 = vsub.s32 %v1734, %v1736
    %v1738 = vrot.slane %v1724, %v1737
    %v1739 = vcombine.low %v1674, %v1690
    %v1740 = vcombine.high %v1674, %v1690
    %v1742 = vunpack.c.l.s4 1934713408
    %v1743 = vunpack.c.0.s8 %v1742
    %v1744 = vlaneseq
    %v1745 = vshrl.u32 %v1744, 7
    %v1746 = vsub.s32 %v1743, %v1745
    %v1747 = vrot.slane %v1739, %v1746
    %v1749 = vunpack.c.l.s4 1934713408
    %v1750 = vunpack.c.0.s8 %v1749
    %v1751 = vlaneseq
    %v1752 = vshrl.u32 %v1751, 7
    %v1753 = vsub.s32 %v1750, %v1752
    %v1754 = vrot.slane %v1740, %v1753
    %v1755 = vcombine.low %v1699, %v1731
    %v1756 = vcombine.high %v1699, %v1731
    %v1757 = vcombine.low %v1706, %v1738
    %v1758 = vcombine.high %v1706, %v1738
    %v1759 = vcombine.low %v1715, %v1747
    %v1760 = vcombine.high %v1715, %v1747
    %v1761 = vcombine.low %v1722, %v1754
    %v1762 = vcombine.high %v1722, %v1754
    %v1763 = vcombine.low %v260, %v266
    %v1764 = vcombine.high %v260, %v266
    %v1766 = vunpack.c.l.s4 1983009808
    %v1767 = vunpack.c.0.s8 %v1766
    %v1768 = vlaneseq
    %v1769 = vshrl.u32 %v1768, 7
    %v1770 = vsub.s32 %v1767, %v1769
    %v1771 = vrot.slane %v1763, %v1770
    %v1773 = vunpack.c.l.s4 1983009808
    %v1774 = vunpack.c.0.s8 %v1773
    %v1775 = vlaneseq
    %v1776 = vshrl.u32 %v1775, 7
    %v1777 = vsub.s32 %v1774, %v1776
    %v1778 = vrot.slane %v1764, %v1777
    %v1779 = vcombine.low %v263, %v269
    %v1780 = vcombine.high %v263, %v269
    %v1782 = vunpack.c.l.s4 1983009808
    %v1783 = vunpack.c.0.s8 %v1782
    %v1784 = vlaneseq
    %v1785 = vshrl.u32 %v1784, 7
    %v1786 = vsub.s32 %v1783, %v1785
    %v1787 = vrot.slane %v1779, %v1786
    %v1789 = vunpack.c.l.s4 1983009808
    %v1790 = vunpack.c.0.s8 %v1789
    %v1791 = vlaneseq
    %v1792 = vshrl.u32 %v1791, 7
    %v1793 = vsub.s32 %v1790, %v1792
    %v1794 = vrot.slane %v1780, %v1793
    %v1795 = vcombine.low %v272, %v278
    %v1796 = vcombine.high %v272, %v278
    %v1798 = vunpack.c.l.s4 1983009808
    %v1799 = vunpack.c.0.s8 %v1798
    %v1800 = vlaneseq
    %v1801 = vshrl.u32 %v1800, 7
    %v1802 = vsub.s32 %v1799, %v1801
    %v1803 = vrot.slane %v1795, %v1802
    %v1805 = vunpack.c.l.s4 1983009808
    %v1806 = vunpack.c.0.s8 %v1805
    %v1807 = vlaneseq
    %v1808 = vshrl.u32 %v1807, 7
    %v1809 = vsub.s32 %v1806, %v1808
    %v1810 = vrot.slane %v1796, %v1809
    %v1811 = vcombine.low %v275, %v281
    %v1812 = vcombine.high %v275, %v281
    %v1814 = vunpack.c.l.s4 1983009808
    %v1815 = vunpack.c.0.s8 %v1814
    %v1816 = vlaneseq
    %v1817 = vshrl.u32 %v1816, 7
    %v1818 = vsub.s32 %v1815, %v1817
    %v1819 = vrot.slane %v1811, %v1818
    %v1821 = vunpack.c.l.s4 1983009808
    %v1822 = vunpack.c.0.s8 %v1821
    %v1823 = vlaneseq
    %v1824 = vshrl.u32 %v1823, 7
    %v1825 = vsub.s32 %v1822, %v1824
    %v1826 = vrot.slane %v1812, %v1825
    %v1827 = vcombine.low %v1771, %v1787
    %v1828 = vcombine.high %v1771, %v1787
    %v1830 = vunpack.c.l.s4 1934713408
    %v1831 = vunpack.c.0.s8 %v1830
    %v1832 = vlaneseq
    %v1833 = vshrl.u32 %v1832, 7
    %v1834 = vsub.s32 %v1831, %v1833
    %v1835 = vrot.slane %v1827, %v1834
    %v1837 = vunpack.c.l.s4 1934713408
    %v1838 = vunpack.c.0.s8 %v1837
    %v1839 = vlaneseq
    %v1840 = vshrl.u32 %v1839, 7
    %v1841 = vsub.s32 %v1838, %v1840
    %v1842 = vrot.slane %v1828, %v1841
    %v1843 = vcombine.low %v1778, %v1794
    %v1844 = vcombine.high %v1778, %v1794
    %v1846 = vunpack.c.l.s4 1934713408
    %v1847 = vunpack.c.0.s8 %v1846
    %v1848 = vlaneseq
    %v1849 = vshrl.u32 %v1848, 7
    %v1850 = vsub.s32 %v1847, %v1849
    %v1851 = vrot.slane %v1843, %v1850
    %v1853 = vunpack.c.l.s4 1934713408
    %v1854 = vunpack.c.0.s8 %v1853
    %v1855 = vlaneseq
    %v1856 = vshrl.u32 %v1855, 7
    %v1857 = vsub.s32 %v1854, %v1856
    %v1858 = vrot.slane %v1844, %v1857
    %v1859 = vcombine.low %v1803, %v1819
    %v1860 = vcombine.high %v1803, %v1819
    %v1862 = vunpack.c.l.s4 1934713408
    %v1863 = vunpack.c.0.s8 %v1862
    %v1864 = vlaneseq
    %v1865 = vshrl.u32 %v1864, 7
    %v1866 = vsub.s32 %v1863, %v1865
    %v1867 = vrot.slane %v1859, %v1866
    %v1869 = vunpack.c.l.s4 1934713408
    %v1870 = vunpack.c.0.s8 %v1869
    %v1871 = vlaneseq
    %v1872 = vshrl.u32 %v1871, 7
    %v1873 = vsub.s32 %v1870, %v1872
    %v1874 = vrot.slane %v1860, %v1873
    %v1875 = vcombine.low %v1810, %v1826
    %v1876 = vcombine.high %v1810, %v1826
    %v1878 = vunpack.c.l.s4 1934713408
    %v1879 = vunpack.c.0.s8 %v1878
    %v1880 = vlaneseq
    %v1881 = vshrl.u32 %v1880, 7
    %v1882 = vsub.s32 %v1879, %v1881
    %v1883 = vrot.slane %v1875, %v1882
    %v1885 = vunpack.c.l.s4 1934713408
    %v1886 = vunpack.c.0.s8 %v1885
    %v1887 = vlaneseq
    %v1888 = vshrl.u32 %v1887, 7
    %v1889 = vsub.s32 %v1886, %v1888
    %v1890 = vrot.slane %v1876, %v1889
    %v1891 = vcombine.low %v1835, %v1867
    %v1892 = vcombine.high %v1835, %v1867
    %v1893 = vcombine.low %v1842, %v1874
    %v1894 = vcombine.high %v1842, %v1874
    %v1895 = vcombine.low %v1851, %v1883
    %v1896 = vcombine.high %v1851, %v1883
    %v1897 = vcombine.low %v1858, %v1890
    %v1898 = vcombine.high %v1858, %v1890
    %v1899 = vcombine.low %v284, %v290
    %v1900 = vcombine.high %v284, %v290
    %v1902 = vunpack.c.l.s4 1983009808
    %v1903 = vunpack.c.0.s8 %v1902
    %v1904 = vlaneseq
    %v1905 = vshrl.u32 %v1904, 7
    %v1906 = vsub.s32 %v1903, %v1905
    %v1907 = vrot.slane %v1899, %v1906
    %v1909 = vunpack.c.l.s4 1983009808
    %v1910 = vunpack.c.0.s8 %v1909
    %v1911 = vlaneseq
    %v1912 = vshrl.u32 %v1911, 7
    %v1913 = vsub.s32 %v1910, %v1912
    %v1914 = vrot.slane %v1900, %v1913
    %v1915 = vcombine.low %v287, %v293
    %v1916 = vcombine.high %v287, %v293
    %v1918 = vunpack.c.l.s4 1983009808
    %v1919 = vunpack.c.0.s8 %v1918
    %v1920 = vlaneseq
    %v1921 = vshrl.u32 %v1920, 7
    %v1922 = vsub.s32 %v1919, %v1921
    %v1923 = vrot.slane %v1915, %v1922
    %v1925 = vunpack.c.l.s4 1983009808
    %v1926 = vunpack.c.0.s8 %v1925
    %v1927 = vlaneseq
    %v1928 = vshrl.u32 %v1927, 7
    %v1929 = vsub.s32 %v1926, %v1928
    %v1930 = vrot.slane %v1916, %v1929
    %v1931 = vcombine.low %v296, %v302
    %v1932 = vcombine.high %v296, %v302
    %v1934 = vunpack.c.l.s4 1983009808
    %v1935 = vunpack.c.0.s8 %v1934
    %v1936 = vlaneseq
    %v1937 = vshrl.u32 %v1936, 7
    %v1938 = vsub.s32 %v1935, %v1937
    %v1939 = vrot.slane %v1931, %v1938
    %v1941 = vunpack.c.l.s4 1983009808
    %v1942 = vunpack.c.0.s8 %v1941
    %v1943 = vlaneseq
    %v1944 = vshrl.u32 %v1943, 7
    %v1945 = vsub.s32 %v1942, %v1944
    %v1946 = vrot.slane %v1932, %v1945
    %v1947 = vcombine.low %v299, %v305
    %v1948 = vcombine.high %v299, %v305
    %v1950 = vunpack.c.l.s4 1983009808
    %v1951 = vunpack.c.0.s8 %v1950
    %v1952 = vlaneseq
    %v1953 = vshrl.u32 %v1952, 7
    %v1954 = vsub.s32 %v1951, %v1953
    %v1955 = vrot.slane %v1947, %v1954
    %v1957 = vunpack.c.l.s4 1983009808
    %v1958 = vunpack.c.0.s8 %v1957
    %v1959 = vlaneseq
    %v1960 = vshrl.u32 %v1959, 7
    %v1961 = vsub.s32 %v1958, %v1960
    %v1962 = vrot.slane %v1948, %v1961
    %v1963 = vcombine.low %v1907, %v1923
    %v1964 = vcombine.high %v1907, %v1923
    %v1966 = vunpack.c.l.s4 1934713408
    %v1967 = vunpack.c.0.s8 %v1966
    %v1968 = vlaneseq
    %v1969 = vshrl.u32 %v1968, 7
    %v1970 = vsub.s32 %v1967, %v1969
    %v1971 = vrot.slane %v1963, %v1970
    %v1973 = vunpack.c.l.s4 1934713408
    %v1974 = vunpack.c.0.s8 %v1973
    %v1975 = vlaneseq
    %v1976 = vshrl.u32 %v1975, 7
    %v1977 = vsub.s32 %v1974, %v1976
    %v1978 = vrot.slane %v1964, %v1977
    %v1979 = vcombine.low %v1914, %v1930
    %v1980 = vcombine.high %v1914, %v1930
    %v1982 = vunpack.c.l.s4 1934713408
    %v1983 = vunpack.c.0.s8 %v1982
    %v1984 = vlaneseq
    %v1985 = vshrl.u32 %v1984, 7
    %v1986 = vsub.s32 %v1983, %v1985
    %v1987 = vrot.slane %v1979, %v1986
    %v1989 = vunpack.c.l.s4 1934713408
    %v1990 = vunpack.c.0.s8 %v1989
    %v1991 = vlaneseq
    %v1992 = vshrl.u32 %v1991, 7
    %v1993 = vsub.s32 %v1990, %v1992
    %v1994 = vrot.slane %v1980, %v1993
    %v1995 = vcombine.low %v1939, %v1955
    %v1996 = vcombine.high %v1939, %v1955
    %v1998 = vunpack.c.l.s4 1934713408
    %v1999 = vunpack.c.0.s8 %v1998
    %v2000 = vlaneseq
    %v2001 = vshrl.u32 %v2000, 7
    %v2002 = vsub.s32 %v1999, %v2001
    %v2003 = vrot.slane %v1995, %v2002
    %v2005 = vunpack.c.l.s4 1934713408
    %v2006 = vunpack.c.0.s8 %v2005
    %v2007 = vlaneseq
    %v2008 = vshrl.u32 %v2007, 7
    %v2009 = vsub.s32 %v2006, %v2008
    %v2010 = vrot.slane %v1996, %v2009
    %v2011 = vcombine.low %v1946, %v1962
    %v2012 = vcombine.high %v1946, %v1962
    %v2014 = vunpack.c.l.s4 1934713408
    %v2015 = vunpack.c.0.s8 %v2014
    %v2016 = vlaneseq
    %v2017 = vshrl.u32 %v2016, 7
    %v2018 = vsub.s32 %v2015, %v2017
    %v2019 = vrot.slane %v2011, %v2018
    %v2021 = vunpack.c.l.s4 1934713408
    %v2022 = vunpack.c.0.s8 %v2021
    %v2023 = vlaneseq
    %v2024 = vshrl.u32 %v2023, 7
    %v2025 = vsub.s32 %v2022, %v2024
    %v2026 = vrot.slane %v2012, %v2025
    %v2027 = vcombine.low %v1971, %v2003
    %v2028 = vcombine.high %v1971, %v2003
    %v2029 = vcombine.low %v1978, %v2010
    %v2030 = vcombine.high %v1978, %v2010
    %v2031 = vcombine.low %v1987, %v2019
    %v2032 = vcombine.high %v1987, %v2019
    %v2033 = vcombine.low %v1994, %v2026
    %v2034 = vcombine.high %v1994, %v2026
    %v2035 = vcombine.low %v308, %v314
    %v2036 = vcombine.high %v308, %v314
    %v2038 = vunpack.c.l.s4 1983009808
    %v2039 = vunpack.c.0.s8 %v2038
    %v2040 = vlaneseq
    %v2041 = vshrl.u32 %v2040, 7
    %v2042 = vsub.s32 %v2039, %v2041
    %v2043 = vrot.slane %v2035, %v2042
    %v2045 = vunpack.c.l.s4 1983009808
    %v2046 = vunpack.c.0.s8 %v2045
    %v2047 = vlaneseq
    %v2048 = vshrl.u32 %v2047, 7
    %v2049 = vsub.s32 %v2046, %v2048
    %v2050 = vrot.slane %v2036, %v2049
    %v2051 = vcombine.low %v311, %v317
    %v2052 = vcombine.high %v311, %v317
    %v2054 = vunpack.c.l.s4 1983009808
    %v2055 = vunpack.c.0.s8 %v2054
    %v2056 = vlaneseq
    %v2057 = vshrl.u32 %v2056, 7
    %v2058 = vsub.s32 %v2055, %v2057
    %v2059 = vrot.slane %v2051, %v2058
    %v2061 = vunpack.c.l.s4 1983009808
    %v2062 = vunpack.c.0.s8 %v2061
    %v2063 = vlaneseq
    %v2064 = vshrl.u32 %v2063, 7
    %v2065 = vsub.s32 %v2062, %v2064
    %v2066 = vrot.slane %v2052, %v2065
    %v2067 = vcombine.low %v320, %v326
    %v2068 = vcombine.high %v320, %v326
    %v2070 = vunpack.c.l.s4 1983009808
    %v2071 = vunpack.c.0.s8 %v2070
    %v2072 = vlaneseq
    %v2073 = vshrl.u32 %v2072, 7
    %v2074 = vsub.s32 %v2071, %v2073
    %v2075 = vrot.slane %v2067, %v2074
    %v2077 = vunpack.c.l.s4 1983009808
    %v2078 = vunpack.c.0.s8 %v2077
    %v2079 = vlaneseq
    %v2080 = vshrl.u32 %v2079, 7
    %v2081 = vsub.s32 %v2078, %v2080
    %v2082 = vrot.slane %v2068, %v2081
    %v2083 = vcombine.low %v323, %v329
    %v2084 = vcombine.high %v323, %v329
    %v2086 = vunpack.c.l.s4 1983009808
    %v2087 = vunpack.c.0.s8 %v2086
    %v2088 = vlaneseq
    %v2089 = vshrl.u32 %v2088, 7
    %v2090 = vsub.s32 %v2087, %v2089
    %v2091 = vrot.slane %v2083, %v2090
    %v2093 = vunpack.c.l.s4 1983009808
    %v2094 = vunpack.c.0.s8 %v2093
    %v2095 = vlaneseq
    %v2096 = vshrl.u32 %v2095, 7
    %v2097 = vsub.s32 %v2094, %v2096
    %v2098 = vrot.slane %v2084, %v2097
    %v2099 = vcombine.low %v2043, %v2059
    %v2100 = vcombine.high %v2043, %v2059
    %v2102 = vunpack.c.l.s4 1934713408
    %v2103 = vunpack.c.0.s8 %v2102
    %v2104 = vlaneseq
    %v2105 = vshrl.u32 %v2104, 7
    %v2106 = vsub.s32 %v2103, %v2105
    %v2107 = vrot.slane %v2099, %v2106
    %v2109 = vunpack.c.l.s4 1934713408
    %v2110 = vunpack.c.0.s8 %v2109
    %v2111 = vlaneseq
    %v2112 = vshrl.u32 %v2111, 7
    %v2113 = vsub.s32 %v2110, %v2112
    %v2114 = vrot.slane %v2100, %v2113
    %v2115 = vcombine.low %v2050, %v2066
    %v2116 = vcombine.high %v2050, %v2066
    %v2118 = vunpack.c.l.s4 1934713408
    %v2119 = vunpack.c.0.s8 %v2118
    %v2120 = vlaneseq
    %v2121 = vshrl.u32 %v2120, 7
    %v2122 = vsub.s32 %v2119, %v2121
    %v2123 = vrot.slane %v2115, %v2122
    %v2125 = vunpack.c.l.s4 1934713408
    %v2126 = vunpack.c.0.s8 %v2125
    %v2127 = vlaneseq
    %v2128 = vshrl.u32 %v2127, 7
    %v2129 = vsub.s32 %v2126, %v2128
    %v2130 = vrot.slane %v2116, %v2129
    %v2131 = vcombine.low %v2075, %v2091
    %v2132 = vcombine.high %v2075, %v2091
    %v2134 = vunpack.c.l.s4 1934713408
    %v2135 = vunpack.c.0.s8 %v2134
    %v2136 = vlaneseq
    %v2137 = vshrl.u32 %v2136, 7
    %v2138 = vsub.s32 %v2135, %v2137
    %v2139 = vrot.slane %v2131, %v2138
    %v2141 = vunpack.c.l.s4 1934713408
    %v2142 = vunpack.c.0.s8 %v2141
    %v2143 = vlaneseq
    %v2144 = vshrl.u32 %v2143, 7
    %v2145 = vsub.s32 %v2142, %v2144
    %v2146 = vrot.slane %v2132, %v2145
    %v2147 = vcombine.low %v2082, %v2098
    %v2148 = vcombine.high %v2082, %v2098
    %v2150 = vunpack.c.l.s4 1934713408
    %v2151 = vunpack.c.0.s8 %v2150
    %v2152 = vlaneseq
    %v2153 = vshrl.u32 %v2152, 7
    %v2154 = vsub.s32 %v2151, %v2153
    %v2155 = vrot.slane %v2147, %v2154
    %v2157 = vunpack.c.l.s4 1934713408
    %v2158 = vunpack.c.0.s8 %v2157
    %v2159 = vlaneseq
    %v2160 = vshrl.u32 %v2159, 7
    %v2161 = vsub.s32 %v2158, %v2160
    %v2162 = vrot.slane %v2148, %v2161
    %v2163 = vcombine.low %v2107, %v2139
    %v2164 = vcombine.high %v2107, %v2139
    %v2165 = vcombine.low %v2114, %v2146
    %v2166 = vcombine.high %v2114, %v2146
    %v2167 = vcombine.low %v2123, %v2155
    %v2168 = vcombine.high %v2123, %v2155
    %v2169 = vcombine.low %v2130, %v2162
    %v2170 = vcombine.high %v2130, %v2162
    %v2171 = vcombine.low %v332, %v338
    %v2172 = vcombine.high %v332, %v338
    %v2174 = vunpack.c.l.s4 1983009808
    %v2175 = vunpack.c.0.s8 %v2174
    %v2176 = vlaneseq
    %v2177 = vshrl.u32 %v2176, 7
    %v2178 = vsub.s32 %v2175, %v2177
    %v2179 = vrot.slane %v2171, %v2178
    %v2181 = vunpack.c.l.s4 1983009808
    %v2182 = vunpack.c.0.s8 %v2181
    %v2183 = vlaneseq
    %v2184 = vshrl.u32 %v2183, 7
    %v2185 = vsub.s32 %v2182, %v2184
    %v2186 = vrot.slane %v2172, %v2185
    %v2187 = vcombine.low %v335, %v341
    %v2188 = vcombine.high %v335, %v341
    %v2190 = vunpack.c.l.s4 1983009808
    %v2191 = vunpack.c.0.s8 %v2190
    %v2192 = vlaneseq
    %v2193 = vshrl.u32 %v2192, 7
    %v2194 = vsub.s32 %v2191, %v2193
    %v2195 = vrot.slane %v2187, %v2194
    %v2197 = vunpack.c.l.s4 1983009808
    %v2198 = vunpack.c.0.s8 %v2197
    %v2199 = vlaneseq
    %v2200 = vshrl.u32 %v2199, 7
    %v2201 = vsub.s32 %v2198, %v2200
    %v2202 = vrot.slane %v2188, %v2201
    %v2203 = vcombine.low %v344, %v350
    %v2204 = vcombine.high %v344, %v350
    %v2206 = vunpack.c.l.s4 1983009808
    %v2207 = vunpack.c.0.s8 %v2206
    %v2208 = vlaneseq
    %v2209 = vshrl.u32 %v2208, 7
    %v2210 = vsub.s32 %v2207, %v2209
    %v2211 = vrot.slane %v2203, %v2210
    %v2213 = vunpack.c.l.s4 1983009808
    %v2214 = vunpack.c.0.s8 %v2213
    %v2215 = vlaneseq
    %v2216 = vshrl.u32 %v2215, 7
    %v2217 = vsub.s32 %v2214, %v2216
    %v2218 = vrot.slane %v2204, %v2217
    %v2219 = vcombine.low %v347, %v353
    %v2220 = vcombine.high %v347, %v353
    %v2222 = vunpack.c.l.s4 1983009808
    %v2223 = vunpack.c.0.s8 %v2222
    %v2224 = vlaneseq
    %v2225 = vshrl.u32 %v2224, 7
    %v2226 = vsub.s32 %v2223, %v2225
    %v2227 = vrot.slane %v2219, %v2226
    %v2229 = vunpack.c.l.s4 1983009808
    %v2230 = vunpack.c.0.s8 %v2229
    %v2231 = vlaneseq
    %v2232 = vshrl.u32 %v2231, 7
    %v2233 = vsub.s32 %v2230, %v2232
    %v2234 = vrot.slane %v2220, %v2233
    %v2235 = vcombine.low %v2179, %v2195
    %v2236 = vcombine.high %v2179, %v2195
    %v2238 = vunpack.c.l.s4 1934713408
    %v2239 = vunpack.c.0.s8 %v2238
    %v2240 = vlaneseq
    %v2241 = vshrl.u32 %v2240, 7
    %v2242 = vsub.s32 %v2239, %v2241
    %v2243 = vrot.slane %v2235, %v2242
    %v2245 = vunpack.c.l.s4 1934713408
    %v2246 = vunpack.c.0.s8 %v2245
    %v2247 = vlaneseq
    %v2248 = vshrl.u32 %v2247, 7
    %v2249 = vsub.s32 %v2246, %v2248
    %v2250 = vrot.slane %v2236, %v2249
    %v2251 = vcombine.low %v2186, %v2202
    %v2252 = vcombine.high %v2186, %v2202
    %v2254 = vunpack.c.l.s4 1934713408
    %v2255 = vunpack.c.0.s8 %v2254
    %v2256 = vlaneseq
    %v2257 = vshrl.u32 %v2256, 7
    %v2258 = vsub.s32 %v2255, %v2257
    %v2259 = vrot.slane %v2251, %v2258
    %v2261 = vunpack.c.l.s4 1934713408
    %v2262 = vunpack.c.0.s8 %v2261
    %v2263 = vlaneseq
    %v2264 = vshrl.u32 %v2263, 7
    %v2265 = vsub.s32 %v2262, %v2264
    %v2266 = vrot.slane %v2252, %v2265
    %v2267 = vcombine.low %v2211, %v2227
    %v2268 = vcombine.high %v2211, %v2227
    %v2270 = vunpack.c.l.s4 1934713408
    %v2271 = vunpack.c.0.s8 %v2270
    %v2272 = vlaneseq
    %v2273 = vshrl.u32 %v2272, 7
    %v2274 = vsub.s32 %v2271, %v2273
    %v2275 = vrot.slane %v2267, %v2274
    %v2277 = vunpack.c.l.s4 1934713408
    %v2278 = vunpack.c.0.s8 %v2277
    %v2279 = vlaneseq
    %v2280 = vshrl.u32 %v2279, 7
    %v2281 = vsub.s32 %v2278, %v2280
    %v2282 = vrot.slane %v2268, %v2281
    %v2283 = vcombine.low %v2218, %v2234
    %v2284 = vcombine.high %v2218, %v2234
    %v2286 = vunpack.c.l.s4 1934713408
    %v2287 = vunpack.c.0.s8 %v2286
    %v2288 = vlaneseq
    %v2289 = vshrl.u32 %v2288, 7
    %v2290 = vsub.s32 %v2287, %v2289
    %v2291 = vrot.slane %v2283, %v2290
    %v2293 = vunpack.c.l.s4 1934713408
    %v2294 = vunpack.c.0.s8 %v2293
    %v2295 = vlaneseq
    %v2296 = vshrl.u32 %v2295, 7
    %v2297 = vsub.s32 %v2294, %v2296
    %v2298 = vrot.slane %v2284, %v2297
    %v2299 = vcombine.low %v2243, %v2275
    %v2300 = vcombine.high %v2243, %v2275
    %v2301 = vcombine.low %v2250, %v2282
    %v2302 = vcombine.high %v2250, %v2282
    %v2303 = vcombine.low %v2259, %v2291
    %v2304 = vcombine.high %v2259, %v2291
    %v2305 = vcombine.low %v2266, %v2298
    %v2306 = vcombine.high %v2266, %v2298
    %v2307 = vcombine.low %v356, %v362
    %v2308 = vcombine.high %v356, %v362
    %v2310 = vunpack.c.l.s4 1983009808
    %v2311 = vunpack.c.0.s8 %v2310
    %v2312 = vlaneseq
    %v2313 = vshrl.u32 %v2312, 7
    %v2314 = vsub.s32 %v2311, %v2313
    %v2315 = vrot.slane %v2307, %v2314
    %v2317 = vunpack.c.l.s4 1983009808
    %v2318 = vunpack.c.0.s8 %v2317
    %v2319 = vlaneseq
    %v2320 = vshrl.u32 %v2319, 7
    %v2321 = vsub.s32 %v2318, %v2320
    %v2322 = vrot.slane %v2308, %v2321
    %v2323 = vcombine.low %v359, %v365
    %v2324 = vcombine.high %v359, %v365
    %v2326 = vunpack.c.l.s4 1983009808
    %v2327 = vunpack.c.0.s8 %v2326
    %v2328 = vlaneseq
    %v2329 = vshrl.u32 %v2328, 7
    %v2330 = vsub.s32 %v2327, %v2329
    %v2331 = vrot.slane %v2323, %v2330
    %v2333 = vunpack.c.l.s4 1983009808
    %v2334 = vunpack.c.0.s8 %v2333
    %v2335 = vlaneseq
    %v2336 = vshrl.u32 %v2335, 7
    %v2337 = vsub.s32 %v2334, %v2336
    %v2338 = vrot.slane %v2324, %v2337
    %v2339 = vcombine.low %v368, %v374
    %v2340 = vcombine.high %v368, %v374
    %v2342 = vunpack.c.l.s4 1983009808
    %v2343 = vunpack.c.0.s8 %v2342
    %v2344 = vlaneseq
    %v2345 = vshrl.u32 %v2344, 7
    %v2346 = vsub.s32 %v2343, %v2345
    %v2347 = vrot.slane %v2339, %v2346
    %v2349 = vunpack.c.l.s4 1983009808
    %v2350 = vunpack.c.0.s8 %v2349
    %v2351 = vlaneseq
    %v2352 = vshrl.u32 %v2351, 7
    %v2353 = vsub.s32 %v2350, %v2352
    %v2354 = vrot.slane %v2340, %v2353
    %v2355 = vcombine.low %v371, %v377
    %v2356 = vcombine.high %v371, %v377
    %v2358 = vunpack.c.l.s4 1983009808
    %v2359 = vunpack.c.0.s8 %v2358
    %v2360 = vlaneseq
    %v2361 = vshrl.u32 %v2360, 7
    %v2362 = vsub.s32 %v2359, %v2361
    %v2363 = vrot.slane %v2355, %v2362
    %v2365 = vunpack.c.l.s4 1983009808
    %v2366 = vunpack.c.0.s8 %v2365
    %v2367 = vlaneseq
    %v2368 = vshrl.u32 %v2367, 7
    %v2369 = vsub.s32 %v2366, %v2368
    %v2370 = vrot.slane %v2356, %v2369
    %v2371 = vcombine.low %v2315, %v2331
    %v2372 = vcombine.high %v2315, %v2331
    %v2374 = vunpack.c.l.s4 1934713408
    %v2375 = vunpack.c.0.s8 %v2374
    %v2376 = vlaneseq
    %v2377 = vshrl.u32 %v2376, 7
    %v2378 = vsub.s32 %v2375, %v2377
    %v2379 = vrot.slane %v2371, %v2378
    %v2381 = vunpack.c.l.s4 1934713408
    %v2382 = vunpack.c.0.s8 %v2381
    %v2383 = vlaneseq
    %v2384 = vshrl.u32 %v2383, 7
    %v2385 = vsub.s32 %v2382, %v2384
    %v2386 = vrot.slane %v2372, %v2385
    %v2387 = vcombine.low %v2322, %v2338
    %v2388 = vcombine.high %v2322, %v2338
    %v2390 = vunpack.c.l.s4 1934713408
    %v2391 = vunpack.c.0.s8 %v2390
    %v2392 = vlaneseq
    %v2393 = vshrl.u32 %v2392, 7
    %v2394 = vsub.s32 %v2391, %v2393
    %v2395 = vrot.slane %v2387, %v2394
    %v2397 = vunpack.c.l.s4 1934713408
    %v2398 = vunpack.c.0.s8 %v2397
    %v2399 = vlaneseq
    %v2400 = vshrl.u32 %v2399, 7
    %v2401 = vsub.s32 %v2398, %v2400
    %v2402 = vrot.slane %v2388, %v2401
    %v2403 = vcombine.low %v2347, %v2363
    %v2404 = vcombine.high %v2347, %v2363
    %v2406 = vunpack.c.l.s4 1934713408
    %v2407 = vunpack.c.0.s8 %v2406
    %v2408 = vlaneseq
    %v2409 = vshrl.u32 %v2408, 7
    %v2410 = vsub.s32 %v2407, %v2409
    %v2411 = vrot.slane %v2403, %v2410
    %v2413 = vunpack.c.l.s4 1934713408
    %v2414 = vunpack.c.0.s8 %v2413
    %v2415 = vlaneseq
    %v2416 = vshrl.u32 %v2415, 7
    %v2417 = vsub.s32 %v2414, %v2416
    %v2418 = vrot.slane %v2404, %v2417
    %v2419 = vcombine.low %v2354, %v2370
    %v2420 = vcombine.high %v2354, %v2370
    %v2422 = vunpack.c.l.s4 1934713408
    %v2423 = vunpack.c.0.s8 %v2422
    %v2424 = vlaneseq
    %v2425 = vshrl.u32 %v2424, 7
    %v2426 = vsub.s32 %v2423, %v2425
    %v2427 = vrot.slane %v2419, %v2426
    %v2429 = vunpack.c.l.s4 1934713408
    %v2430 = vunpack.c.0.s8 %v2429
    %v2431 = vlaneseq
    %v2432 = vshrl.u32 %v2431, 7
    %v2433 = vsub.s32 %v2430, %v2432
    %v2434 = vrot.slane %v2420, %v2433
    %v2435 = vcombine.low %v2379, %v2411
    %v2436 = vcombine.high %v2379, %v2411
    %v2437 = vcombine.low %v2386, %v2418
    %v2438 = vcombine.high %v2386, %v2418
    %v2439 = vcombine.low %v2395, %v2427
    %v2440 = vcombine.high %v2395, %v2427
    %v2441 = vcombine.low %v2402, %v2434
    %v2442 = vcombine.high %v2402, %v2434
    %v2443 = vcombine.low %v380, %v386
    %v2444 = vcombine.high %v380, %v386
    %v2446 = vunpack.c.l.s4 1983009808
    %v2447 = vunpack.c.0.s8 %v2446
    %v2448 = vlaneseq
    %v2449 = vshrl.u32 %v2448, 7
    %v2450 = vsub.s32 %v2447, %v2449
    %v2451 = vrot.slane %v2443, %v2450
    %v2453 = vunpack.c.l.s4 1983009808
    %v2454 = vunpack.c.0.s8 %v2453
    %v2455 = vlaneseq
    %v2456 = vshrl.u32 %v2455, 7
    %v2457 = vsub.s32 %v2454, %v2456
    %v2458 = vrot.slane %v2444, %v2457
    %v2459 = vcombine.low %v383, %v389
    %v2460 = vcombine.high %v383, %v389
    %v2462 = vunpack.c.l.s4 1983009808
    %v2463 = vunpack.c.0.s8 %v2462
    %v2464 = vlaneseq
    %v2465 = vshrl.u32 %v2464, 7
    %v2466 = vsub.s32 %v2463, %v2465
    %v2467 = vrot.slane %v2459, %v2466
    %v2469 = vunpack.c.l.s4 1983009808
    %v2470 = vunpack.c.0.s8 %v2469
    %v2471 = vlaneseq
    %v2472 = vshrl.u32 %v2471, 7
    %v2473 = vsub.s32 %v2470, %v2472
    %v2474 = vrot.slane %v2460, %v2473
    %v2475 = vcombine.low %v392, %v398
    %v2476 = vcombine.high %v392, %v398
    %v2478 = vunpack.c.l.s4 1983009808
    %v2479 = vunpack.c.0.s8 %v2478
    %v2480 = vlaneseq
    %v2481 = vshrl.u32 %v2480, 7
    %v2482 = vsub.s32 %v2479, %v2481
    %v2483 = vrot.slane %v2475, %v2482
    %v2485 = vunpack.c.l.s4 1983009808
    %v2486 = vunpack.c.0.s8 %v2485
    %v2487 = vlaneseq
    %v2488 = vshrl.u32 %v2487, 7
    %v2489 = vsub.s32 %v2486, %v2488
    %v2490 = vrot.slane %v2476, %v2489
    %v2491 = vcombine.low %v395, %v401
    %v2492 = vcombine.high %v395, %v401
    %v2494 = vunpack.c.l.s4 1983009808
    %v2495 = vunpack.c.0.s8 %v2494
    %v2496 = vlaneseq
    %v2497 = vshrl.u32 %v2496, 7
    %v2498 = vsub.s32 %v2495, %v2497
    %v2499 = vrot.slane %v2491, %v2498
    %v2501 = vunpack.c.l.s4 1983009808
    %v2502 = vunpack.c.0.s8 %v2501
    %v2503 = vlaneseq
    %v2504 = vshrl.u32 %v2503, 7
    %v2505 = vsub.s32 %v2502, %v2504
    %v2506 = vrot.slane %v2492, %v2505
    %v2507 = vcombine.low %v2451, %v2467
    %v2508 = vcombine.high %v2451, %v2467
    %v2510 = vunpack.c.l.s4 1934713408
    %v2511 = vunpack.c.0.s8 %v2510
    %v2512 = vlaneseq
    %v2513 = vshrl.u32 %v2512, 7
    %v2514 = vsub.s32 %v2511, %v2513
    %v2515 = vrot.slane %v2507, %v2514
    %v2517 = vunpack.c.l.s4 1934713408
    %v2518 = vunpack.c.0.s8 %v2517
    %v2519 = vlaneseq
    %v2520 = vshrl.u32 %v2519, 7
    %v2521 = vsub.s32 %v2518, %v2520
    %v2522 = vrot.slane %v2508, %v2521
    %v2523 = vcombine.low %v2458, %v2474
    %v2524 = vcombine.high %v2458, %v2474
    %v2526 = vunpack.c.l.s4 1934713408
    %v2527 = vunpack.c.0.s8 %v2526
    %v2528 = vlaneseq
    %v2529 = vshrl.u32 %v2528, 7
    %v2530 = vsub.s32 %v2527, %v2529
    %v2531 = vrot.slane %v2523, %v2530
    %v2533 = vunpack.c.l.s4 1934713408
    %v2534 = vunpack.c.0.s8 %v2533
    %v2535 = vlaneseq
    %v2536 = vshrl.u32 %v2535, 7
    %v2537 = vsub.s32 %v2534, %v2536
    %v2538 = vrot.slane %v2524, %v2537
    %v2539 = vcombine.low %v2483, %v2499
    %v2540 = vcombine.high %v2483, %v2499
    %v2542 = vunpack.c.l.s4 1934713408
    %v2543 = vunpack.c.0.s8 %v2542
    %v2544 = vlaneseq
    %v2545 = vshrl.u32 %v2544, 7
    %v2546 = vsub.s32 %v2543, %v2545
    %v2547 = vrot.slane %v2539, %v2546
    %v2549 = vunpack.c.l.s4 1934713408
    %v2550 = vunpack.c.0.s8 %v2549
    %v2551 = vlaneseq
    %v2552 = vshrl.u32 %v2551, 7
    %v2553 = vsub.s32 %v2550, %v2552
    %v2554 = vrot.slane %v2540, %v2553
    %v2555 = vcombine.low %v2490, %v2506
    %v2556 = vcombine.high %v2490, %v2506
    %v2558 = vunpack.c.l.s4 1934713408
    %v2559 = vunpack.c.0.s8 %v2558
    %v2560 = vlaneseq
    %v2561 = vshrl.u32 %v2560, 7
    %v2562 = vsub.s32 %v2559, %v2561
    %v2563 = vrot.slane %v2555, %v2562
    %v2565 = vunpack.c.l.s4 1934713408
    %v2566 = vunpack.c.0.s8 %v2565
    %v2567 = vlaneseq
    %v2568 = vshrl.u32 %v2567, 7
    %v2569 = vsub.s32 %v2566, %v2568
    %v2570 = vrot.slane %v2556, %v2569
    %v2571 = vcombine.low %v2515, %v2547
    %v2572 = vcombine.high %v2515, %v2547
    %v2573 = vcombine.low %v2522, %v2554
    %v2574 = vcombine.high %v2522, %v2554
    %v2575 = vcombine.low %v2531, %v2563
    %v2576 = vcombine.high %v2531, %v2563
    %v2577 = vcombine.low %v2538, %v2570
    %v2578 = vcombine.high %v2538, %v2570
    %vm2579 = vcmask 15360
    %v2580 = vsel %vm2579, %v531, -inf
    %2581 = vmax.xlane.f32.xlu0 %v2580
    %v2582 = vpop.xlane.xlu0 %2581
    %v2583 = vsel %vm2579, %v667, -inf
    %2584 = vmax.xlane.f32.xlu0 %v2583
    %v2585 = vpop.xlane.xlu0 %2584
    %v2586 = vsel %vm2579, %v803, -inf
    %2587 = vmax.xlane.f32.xlu0 %v2586
    %v2588 = vpop.xlane.xlu0 %2587
    %v2589 = vsel %vm2579, %v939, -inf
    %2590 = vmax.xlane.f32.xlu0 %v2589
    %v2591 = vpop.xlane.xlu0 %2590
    %v2592 = vsel %vm2579, %v1075, -inf
    %2593 = vmax.xlane.f32.xlu0 %v2592
    %v2594 = vpop.xlane.xlu0 %2593
    %v2595 = vsel %vm2579, %v1211, -inf
    %2596 = vmax.xlane.f32.xlu0 %v2595
    %v2597 = vpop.xlane.xlu0 %2596
    %v2598 = vsel %vm2579, %v1347, -inf
    %2599 = vmax.xlane.f32.xlu0 %v2598
    %v2600 = vpop.xlane.xlu0 %2599
    %v2601 = vsel %vm2579, %v1483, -inf
    %2602 = vmax.xlane.f32.xlu0 %v2601
    %v2603 = vpop.xlane.xlu0 %2602
    %v2604 = vsel %vm2579, %v1619, -inf
    %2605 = vmax.xlane.f32.xlu0 %v2604
    %v2606 = vpop.xlane.xlu0 %2605
    %v2607 = vsel %vm2579, %v1755, -inf
    %2608 = vmax.xlane.f32.xlu0 %v2607
    %v2609 = vpop.xlane.xlu0 %2608
    %v2610 = vsel %vm2579, %v1891, -inf
    %2611 = vmax.xlane.f32.xlu0 %v2610
    %v2612 = vpop.xlane.xlu0 %2611
    %v2613 = vsel %vm2579, %v2027, -inf
    %2614 = vmax.xlane.f32.xlu0 %v2613
    %v2615 = vpop.xlane.xlu0 %2614
    %v2616 = vsel %vm2579, %v2163, -inf
    %2617 = vmax.xlane.f32.xlu0 %v2616
    %v2618 = vpop.xlane.xlu0 %2617
    %v2619 = vsel %vm2579, %v2299, -inf
    %2620 = vmax.xlane.f32.xlu0 %v2619
    %v2621 = vpop.xlane.xlu0 %2620
    %v2622 = vsel %vm2579, %v2435, -inf
    %2623 = vmax.xlane.f32.xlu0 %v2622
    %v2624 = vpop.xlane.xlu0 %2623
    %v2625 = vsel %vm2579, %v2571, -inf
    %2626 = vmax.xlane.f32.xlu0 %v2625
    %v2627 = vpop.xlane.xlu0 %2626
    %v2628 = vsel %vm2579, %v532, -inf
    %2629 = vmax.xlane.f32.xlu0 %v2628
    %v2630 = vpop.xlane.xlu0 %2629
    %v2631 = vsel %vm2579, %v668, -inf
    %2632 = vmax.xlane.f32.xlu0 %v2631
    %v2633 = vpop.xlane.xlu0 %2632
    %v2634 = vsel %vm2579, %v804, -inf
    %2635 = vmax.xlane.f32.xlu0 %v2634
    %v2636 = vpop.xlane.xlu0 %2635
    %v2637 = vsel %vm2579, %v940, -inf
    %2638 = vmax.xlane.f32.xlu0 %v2637
    %v2639 = vpop.xlane.xlu0 %2638
    %v2640 = vsel %vm2579, %v1076, -inf
    %2641 = vmax.xlane.f32.xlu0 %v2640
    %v2642 = vpop.xlane.xlu0 %2641
    %v2643 = vsel %vm2579, %v1212, -inf
    %2644 = vmax.xlane.f32.xlu0 %v2643
    %v2645 = vpop.xlane.xlu0 %2644
    %v2646 = vsel %vm2579, %v1348, -inf
    %2647 = vmax.xlane.f32.xlu0 %v2646
    %v2648 = vpop.xlane.xlu0 %2647
    %v2649 = vsel %vm2579, %v1484, -inf
    %2650 = vmax.xlane.f32.xlu0 %v2649
    %v2651 = vpop.xlane.xlu0 %2650
    %v2652 = vsel %vm2579, %v1620, -inf
    %2653 = vmax.xlane.f32.xlu0 %v2652
    %v2654 = vpop.xlane.xlu0 %2653
    %v2655 = vsel %vm2579, %v1756, -inf
    %2656 = vmax.xlane.f32.xlu0 %v2655
    %v2657 = vpop.xlane.xlu0 %2656
    %v2658 = vsel %vm2579, %v1892, -inf
    %2659 = vmax.xlane.f32.xlu0 %v2658
    %v2660 = vpop.xlane.xlu0 %2659
    %v2661 = vsel %vm2579, %v2028, -inf
    %2662 = vmax.xlane.f32.xlu0 %v2661
    %v2663 = vpop.xlane.xlu0 %2662
    %v2664 = vsel %vm2579, %v2164, -inf
    %2665 = vmax.xlane.f32.xlu0 %v2664
    %v2666 = vpop.xlane.xlu0 %2665
    %v2667 = vsel %vm2579, %v2300, -inf
    %2668 = vmax.xlane.f32.xlu0 %v2667
    %v2669 = vpop.xlane.xlu0 %2668
    %v2670 = vsel %vm2579, %v2436, -inf
    %2671 = vmax.xlane.f32.xlu0 %v2670
    %v2672 = vpop.xlane.xlu0 %2671
    %v2673 = vsel %vm2579, %v2572, -inf
    %2674 = vmax.xlane.f32.xlu0 %v2673
    %v2675 = vpop.xlane.xlu0 %2674
    %v2676 = vsel %vm2579, %v533, -inf
    %2677 = vmax.xlane.f32.xlu0 %v2676
    %v2678 = vpop.xlane.xlu0 %2677
    %v2679 = vsel %vm2579, %v669, -inf
    %2680 = vmax.xlane.f32.xlu0 %v2679
    %v2681 = vpop.xlane.xlu0 %2680
    %v2682 = vsel %vm2579, %v805, -inf
    %2683 = vmax.xlane.f32.xlu0 %v2682
    %v2684 = vpop.xlane.xlu0 %2683
    %v2685 = vsel %vm2579, %v941, -inf
    %2686 = vmax.xlane.f32.xlu0 %v2685
    %v2687 = vpop.xlane.xlu0 %2686
    %v2688 = vsel %vm2579, %v1077, -inf
    %2689 = vmax.xlane.f32.xlu0 %v2688
    %v2690 = vpop.xlane.xlu0 %2689
    %v2691 = vsel %vm2579, %v1213, -inf
    %2692 = vmax.xlane.f32.xlu0 %v2691
    %v2693 = vpop.xlane.xlu0 %2692
    %v2694 = vsel %vm2579, %v1349, -inf
    %2695 = vmax.xlane.f32.xlu0 %v2694
    %v2696 = vpop.xlane.xlu0 %2695
    %v2697 = vsel %vm2579, %v1485, -inf
    %2698 = vmax.xlane.f32.xlu0 %v2697
    %v2699 = vpop.xlane.xlu0 %2698
    %v2700 = vsel %vm2579, %v1621, -inf
    %2701 = vmax.xlane.f32.xlu0 %v2700
    %v2702 = vpop.xlane.xlu0 %2701
    %v2703 = vsel %vm2579, %v1757, -inf
    %2704 = vmax.xlane.f32.xlu0 %v2703
    %v2705 = vpop.xlane.xlu0 %2704
    %v2706 = vsel %vm2579, %v1893, -inf
    %2707 = vmax.xlane.f32.xlu0 %v2706
    %v2708 = vpop.xlane.xlu0 %2707
    %v2709 = vsel %vm2579, %v2029, -inf
    %2710 = vmax.xlane.f32.xlu0 %v2709
    %v2711 = vpop.xlane.xlu0 %2710
    %v2712 = vsel %vm2579, %v2165, -inf
    %2713 = vmax.xlane.f32.xlu0 %v2712
    %v2714 = vpop.xlane.xlu0 %2713
    %v2715 = vsel %vm2579, %v2301, -inf
    %2716 = vmax.xlane.f32.xlu0 %v2715
    %v2717 = vpop.xlane.xlu0 %2716
    %v2718 = vsel %vm2579, %v2437, -inf
    %2719 = vmax.xlane.f32.xlu0 %v2718
    %v2720 = vpop.xlane.xlu0 %2719
    %v2721 = vsel %vm2579, %v2573, -inf
    %2722 = vmax.xlane.f32.xlu0 %v2721
    %v2723 = vpop.xlane.xlu0 %2722
    %v2724 = vsel %vm2579, %v534, -inf
    %2725 = vmax.xlane.f32.xlu0 %v2724
    %v2726 = vpop.xlane.xlu0 %2725
    %v2727 = vsel %vm2579, %v670, -inf
    %2728 = vmax.xlane.f32.xlu0 %v2727
    %v2729 = vpop.xlane.xlu0 %2728
    %v2730 = vsel %vm2579, %v806, -inf
    %2731 = vmax.xlane.f32.xlu0 %v2730
    %v2732 = vpop.xlane.xlu0 %2731
    %v2733 = vsel %vm2579, %v942, -inf
    %2734 = vmax.xlane.f32.xlu0 %v2733
    %v2735 = vpop.xlane.xlu0 %2734
    %v2736 = vsel %vm2579, %v1078, -inf
    %2737 = vmax.xlane.f32.xlu0 %v2736
    %v2738 = vpop.xlane.xlu0 %2737
    %v2739 = vsel %vm2579, %v1214, -inf
    %2740 = vmax.xlane.f32.xlu0 %v2739
    %v2741 = vpop.xlane.xlu0 %2740
    %v2742 = vsel %vm2579, %v1350, -inf
    %2743 = vmax.xlane.f32.xlu0 %v2742
    %v2744 = vpop.xlane.xlu0 %2743
    %v2745 = vsel %vm2579, %v1486, -inf
    %2746 = vmax.xlane.f32.xlu0 %v2745
    %v2747 = vpop.xlane.xlu0 %2746
    %v2748 = vsel %vm2579, %v1622, -inf
    %2749 = vmax.xlane.f32.xlu0 %v2748
    %v2750 = vpop.xlane.xlu0 %2749
    %v2751 = vsel %vm2579, %v1758, -inf
    %2752 = vmax.xlane.f32.xlu0 %v2751
    %v2753 = vpop.xlane.xlu0 %2752
    %v2754 = vsel %vm2579, %v1894, -inf
    %2755 = vmax.xlane.f32.xlu0 %v2754
    %v2756 = vpop.xlane.xlu0 %2755
    %v2757 = vsel %vm2579, %v2030, -inf
    %2758 = vmax.xlane.f32.xlu0 %v2757
    %v2759 = vpop.xlane.xlu0 %2758
    %v2760 = vsel %vm2579, %v2166, -inf
    %2761 = vmax.xlane.f32.xlu0 %v2760
    %v2762 = vpop.xlane.xlu0 %2761
    %v2763 = vsel %vm2579, %v2302, -inf
    %2764 = vmax.xlane.f32.xlu0 %v2763
    %v2765 = vpop.xlane.xlu0 %2764
    %v2766 = vsel %vm2579, %v2438, -inf
    %2767 = vmax.xlane.f32.xlu0 %v2766
    %v2768 = vpop.xlane.xlu0 %2767
    %v2769 = vsel %vm2579, %v2574, -inf
    %2770 = vmax.xlane.f32.xlu0 %v2769
    %v2771 = vpop.xlane.xlu0 %2770
    %v2772 = vsel %vm2579, %v535, -inf
    %2773 = vmax.xlane.f32.xlu0 %v2772
    %v2774 = vpop.xlane.xlu0 %2773
    %v2775 = vsel %vm2579, %v671, -inf
    %2776 = vmax.xlane.f32.xlu0 %v2775
    %v2777 = vpop.xlane.xlu0 %2776
    %v2778 = vsel %vm2579, %v807, -inf
    %2779 = vmax.xlane.f32.xlu0 %v2778
    %v2780 = vpop.xlane.xlu0 %2779
    %v2781 = vsel %vm2579, %v943, -inf
    %2782 = vmax.xlane.f32.xlu0 %v2781
    %v2783 = vpop.xlane.xlu0 %2782
    %v2784 = vsel %vm2579, %v1079, -inf
    %2785 = vmax.xlane.f32.xlu0 %v2784
    %v2786 = vpop.xlane.xlu0 %2785
    %v2787 = vsel %vm2579, %v1215, -inf
    %2788 = vmax.xlane.f32.xlu0 %v2787
    %v2789 = vpop.xlane.xlu0 %2788
    %v2790 = vsel %vm2579, %v1351, -inf
    %2791 = vmax.xlane.f32.xlu0 %v2790
    %v2792 = vpop.xlane.xlu0 %2791
    %v2793 = vsel %vm2579, %v1487, -inf
    %2794 = vmax.xlane.f32.xlu0 %v2793
    %v2795 = vpop.xlane.xlu0 %2794
    %v2796 = vsel %vm2579, %v1623, -inf
    %2797 = vmax.xlane.f32.xlu0 %v2796
    %v2798 = vpop.xlane.xlu0 %2797
    %v2799 = vsel %vm2579, %v1759, -inf
    %2800 = vmax.xlane.f32.xlu0 %v2799
    %v2801 = vpop.xlane.xlu0 %2800
    %v2802 = vsel %vm2579, %v1895, -inf
    %2803 = vmax.xlane.f32.xlu0 %v2802
    %v2804 = vpop.xlane.xlu0 %2803
    %v2805 = vsel %vm2579, %v2031, -inf
    %2806 = vmax.xlane.f32.xlu0 %v2805
    %v2807 = vpop.xlane.xlu0 %2806
    %v2808 = vsel %vm2579, %v2167, -inf
    %2809 = vmax.xlane.f32.xlu0 %v2808
    %v2810 = vpop.xlane.xlu0 %2809
    %v2811 = vsel %vm2579, %v2303, -inf
    %2812 = vmax.xlane.f32.xlu0 %v2811
    %v2813 = vpop.xlane.xlu0 %2812
    %v2814 = vsel %vm2579, %v2439, -inf
    %2815 = vmax.xlane.f32.xlu0 %v2814
    %v2816 = vpop.xlane.xlu0 %2815
    %v2817 = vsel %vm2579, %v2575, -inf
    %2818 = vmax.xlane.f32.xlu0 %v2817
    %v2819 = vpop.xlane.xlu0 %2818
    %v2820 = vsel %vm2579, %v536, -inf
    %2821 = vmax.xlane.f32.xlu0 %v2820
    %v2822 = vpop.xlane.xlu0 %2821
    %v2823 = vsel %vm2579, %v672, -inf
    %2824 = vmax.xlane.f32.xlu0 %v2823
    %v2825 = vpop.xlane.xlu0 %2824
    %v2826 = vsel %vm2579, %v808, -inf
    %2827 = vmax.xlane.f32.xlu0 %v2826
    %v2828 = vpop.xlane.xlu0 %2827
    %v2829 = vsel %vm2579, %v944, -inf
    %2830 = vmax.xlane.f32.xlu0 %v2829
    %v2831 = vpop.xlane.xlu0 %2830
    %v2832 = vsel %vm2579, %v1080, -inf
    %2833 = vmax.xlane.f32.xlu0 %v2832
    %v2834 = vpop.xlane.xlu0 %2833
    %v2835 = vsel %vm2579, %v1216, -inf
    %2836 = vmax.xlane.f32.xlu0 %v2835
    %v2837 = vpop.xlane.xlu0 %2836
    %v2838 = vsel %vm2579, %v1352, -inf
    %2839 = vmax.xlane.f32.xlu0 %v2838
    %v2840 = vpop.xlane.xlu0 %2839
    %v2841 = vsel %vm2579, %v1488, -inf
    %2842 = vmax.xlane.f32.xlu0 %v2841
    %v2843 = vpop.xlane.xlu0 %2842
    %v2844 = vsel %vm2579, %v1624, -inf
    %2845 = vmax.xlane.f32.xlu0 %v2844
    %v2846 = vpop.xlane.xlu0 %2845
    %v2847 = vsel %vm2579, %v1760, -inf
    %2848 = vmax.xlane.f32.xlu0 %v2847
    %v2849 = vpop.xlane.xlu0 %2848
    %v2850 = vsel %vm2579, %v1896, -inf
    %2851 = vmax.xlane.f32.xlu0 %v2850
    %v2852 = vpop.xlane.xlu0 %2851
    %v2853 = vsel %vm2579, %v2032, -inf
    %2854 = vmax.xlane.f32.xlu0 %v2853
    %v2855 = vpop.xlane.xlu0 %2854
    %v2856 = vsel %vm2579, %v2168, -inf
    %2857 = vmax.xlane.f32.xlu0 %v2856
    %v2858 = vpop.xlane.xlu0 %2857
    %v2859 = vsel %vm2579, %v2304, -inf
    %2860 = vmax.xlane.f32.xlu0 %v2859
    %v2861 = vpop.xlane.xlu0 %2860
    %v2862 = vsel %vm2579, %v2440, -inf
    %2863 = vmax.xlane.f32.xlu0 %v2862
    %v2864 = vpop.xlane.xlu0 %2863
    %v2865 = vsel %vm2579, %v2576, -inf
    %2866 = vmax.xlane.f32.xlu0 %v2865
    %v2867 = vpop.xlane.xlu0 %2866
    %v2868 = vsel %vm2579, %v537, -inf
    %2869 = vmax.xlane.f32.xlu0 %v2868
    %v2870 = vpop.xlane.xlu0 %2869
    %v2871 = vsel %vm2579, %v673, -inf
    %2872 = vmax.xlane.f32.xlu0 %v2871
    %v2873 = vpop.xlane.xlu0 %2872
    %v2874 = vsel %vm2579, %v809, -inf
    %2875 = vmax.xlane.f32.xlu0 %v2874
    %v2876 = vpop.xlane.xlu0 %2875
    %v2877 = vsel %vm2579, %v945, -inf
    %2878 = vmax.xlane.f32.xlu0 %v2877
    %v2879 = vpop.xlane.xlu0 %2878
    %v2880 = vsel %vm2579, %v1081, -inf
    %2881 = vmax.xlane.f32.xlu0 %v2880
    %v2882 = vpop.xlane.xlu0 %2881
    %v2883 = vsel %vm2579, %v1217, -inf
    %2884 = vmax.xlane.f32.xlu0 %v2883
    %v2885 = vpop.xlane.xlu0 %2884
    %v2886 = vsel %vm2579, %v1353, -inf
    %2887 = vmax.xlane.f32.xlu0 %v2886
    %v2888 = vpop.xlane.xlu0 %2887
    %v2889 = vsel %vm2579, %v1489, -inf
    %2890 = vmax.xlane.f32.xlu0 %v2889
    %v2891 = vpop.xlane.xlu0 %2890
    %v2892 = vsel %vm2579, %v1625, -inf
    %2893 = vmax.xlane.f32.xlu0 %v2892
    %v2894 = vpop.xlane.xlu0 %2893
    %v2895 = vsel %vm2579, %v1761, -inf
    %2896 = vmax.xlane.f32.xlu0 %v2895
    %v2897 = vpop.xlane.xlu0 %2896
    %v2898 = vsel %vm2579, %v1897, -inf
    %2899 = vmax.xlane.f32.xlu0 %v2898
    %v2900 = vpop.xlane.xlu0 %2899
    %v2901 = vsel %vm2579, %v2033, -inf
    %2902 = vmax.xlane.f32.xlu0 %v2901
    %v2903 = vpop.xlane.xlu0 %2902
    %v2904 = vsel %vm2579, %v2169, -inf
    %2905 = vmax.xlane.f32.xlu0 %v2904
    %v2906 = vpop.xlane.xlu0 %2905
    %v2907 = vsel %vm2579, %v2305, -inf
    %2908 = vmax.xlane.f32.xlu0 %v2907
    %v2909 = vpop.xlane.xlu0 %2908
    %v2910 = vsel %vm2579, %v2441, -inf
    %2911 = vmax.xlane.f32.xlu0 %v2910
    %v2912 = vpop.xlane.xlu0 %2911
    %v2913 = vsel %vm2579, %v2577, -inf
    %2914 = vmax.xlane.f32.xlu0 %v2913
    %v2915 = vpop.xlane.xlu0 %2914
    %v2916 = vsel %vm2579, %v538, -inf
    %2917 = vmax.xlane.f32.xlu0 %v2916
    %v2918 = vpop.xlane.xlu0 %2917
    %v2919 = vsel %vm2579, %v674, -inf
    %2920 = vmax.xlane.f32.xlu0 %v2919
    %v2921 = vpop.xlane.xlu0 %2920
    %v2922 = vsel %vm2579, %v810, -inf
    %2923 = vmax.xlane.f32.xlu0 %v2922
    %v2924 = vpop.xlane.xlu0 %2923
    %v2925 = vsel %vm2579, %v946, -inf
    %2926 = vmax.xlane.f32.xlu0 %v2925
    %v2927 = vpop.xlane.xlu0 %2926
    %v2928 = vsel %vm2579, %v1082, -inf
    %2929 = vmax.xlane.f32.xlu0 %v2928
    %v2930 = vpop.xlane.xlu0 %2929
    %v2931 = vsel %vm2579, %v1218, -inf
    %2932 = vmax.xlane.f32.xlu0 %v2931
    %v2933 = vpop.xlane.xlu0 %2932
    %v2934 = vsel %vm2579, %v1354, -inf
    %2935 = vmax.xlane.f32.xlu0 %v2934
    %v2936 = vpop.xlane.xlu0 %2935
    %v2937 = vsel %vm2579, %v1490, -inf
    %2938 = vmax.xlane.f32.xlu0 %v2937
    %v2939 = vpop.xlane.xlu0 %2938
    %v2940 = vsel %vm2579, %v1626, -inf
    %2941 = vmax.xlane.f32.xlu0 %v2940
    %v2942 = vpop.xlane.xlu0 %2941
    %v2943 = vsel %vm2579, %v1762, -inf
    %2944 = vmax.xlane.f32.xlu0 %v2943
    %v2945 = vpop.xlane.xlu0 %2944
    %v2946 = vsel %vm2579, %v1898, -inf
    %2947 = vmax.xlane.f32.xlu0 %v2946
    %v2948 = vpop.xlane.xlu0 %2947
    %v2949 = vsel %vm2579, %v2034, -inf
    %2950 = vmax.xlane.f32.xlu0 %v2949
    %v2951 = vpop.xlane.xlu0 %2950
    %v2952 = vsel %vm2579, %v2170, -inf
    %2953 = vmax.xlane.f32.xlu0 %v2952
    %v2954 = vpop.xlane.xlu0 %2953
    %v2955 = vsel %vm2579, %v2306, -inf
    %2956 = vmax.xlane.f32.xlu0 %v2955
    %v2957 = vpop.xlane.xlu0 %2956
    %v2958 = vsel %vm2579, %v2442, -inf
    %2959 = vmax.xlane.f32.xlu0 %v2958
    %v2960 = vpop.xlane.xlu0 %2959
    %v2961 = vsel %vm2579, %v2578, -inf
    %2962 = vmax.xlane.f32.xlu0 %v2961
    %v2963 = vpop.xlane.xlu0 %2962
    %v3092 = vlaneseq
    %v3093 = vand.u32 %v3092, 127
    %v3094 = vlaneseq
    %v3095 = vshrl.u32 %v3094, 7
    %v3096 = vsub.s32 %v3093, %v3095
    %v3097 = vrot.slane %v2582, %v3096
    %v3098 = vadd.s32 %v3093, 4294967288
    %v3099 = vlaneseq
    %v3100 = vshrl.u32 %v3099, 7
    %v3101 = vsub.s32 %v3098, %v3100
    %v3102 = vrot.slane %v2585, %v3101
    %vm3103 = vcmask 130112
    %v3104 = vsel %vm3103, %v3102, %v3097
    %v3105 = vadd.s32 %v3093, 4294967280
    %v3106 = vlaneseq
    %v3107 = vshrl.u32 %v3106, 7
    %v3108 = vsub.s32 %v3105, %v3107
    %v3109 = vrot.slane %v2588, %v3108
    %vm3110 = vcmask 195712
    %v3111 = vsel %vm3110, %v3109, %v3104
    %v3112 = vadd.s32 %v3093, 4294967272
    %v3113 = vlaneseq
    %v3114 = vshrl.u32 %v3113, 7
    %v3115 = vsub.s32 %v3112, %v3114
    %v3116 = vrot.slane %v2591, %v3115
    %vm3117 = vcmask 261312
    %v3118 = vsel %vm3117, %v3116, %v3111
    %v3119 = vadd.s32 %v3093, 4294967264
    %v3120 = vlaneseq
    %v3121 = vshrl.u32 %v3120, 7
    %v3122 = vsub.s32 %v3119, %v3121
    %v3123 = vrot.slane %v2594, %v3122
    %vm3124 = vcmask 326912
    %v3125 = vsel %vm3124, %v3123, %v3118
    %v3126 = vadd.s32 %v3093, 4294967256
    %v3127 = vlaneseq
    %v3128 = vshrl.u32 %v3127, 7
    %v3129 = vsub.s32 %v3126, %v3128
    %v3130 = vrot.slane %v2597, %v3129
    %vm3131 = vcmask 392512
    %v3132 = vsel %vm3131, %v3130, %v3125
    %v3133 = vadd.s32 %v3093, 4294967248
    %v3134 = vlaneseq
    %v3135 = vshrl.u32 %v3134, 7
    %v3136 = vsub.s32 %v3133, %v3135
    %v3137 = vrot.slane %v2600, %v3136
    %vm3138 = vcmask 458112
    %v3139 = vsel %vm3138, %v3137, %v3132
    %v3140 = vadd.s32 %v3093, 4294967240
    %v3141 = vlaneseq
    %v3142 = vshrl.u32 %v3141, 7
    %v3143 = vsub.s32 %v3140, %v3142
    %v3144 = vrot.slane %v2603, %v3143
    %vm3145 = vcmask 523712
    %v3146 = vsel %vm3145, %v3144, %v3139
    %v3147 = vadd.s32 %v3093, 4294967232
    %v3148 = vlaneseq
    %v3149 = vshrl.u32 %v3148, 7
    %v3150 = vsub.s32 %v3147, %v3149
    %v3151 = vrot.slane %v2606, %v3150
    %vm3152 = vcmask 589312
    %v3153 = vsel %vm3152, %v3151, %v3146
    %v3154 = vadd.s32 %v3093, 4294967224
    %v3155 = vlaneseq
    %v3156 = vshrl.u32 %v3155, 7
    %v3157 = vsub.s32 %v3154, %v3156
    %v3158 = vrot.slane %v2609, %v3157
    %vm3159 = vcmask 654912
    %v3160 = vsel %vm3159, %v3158, %v3153
    %v3161 = vadd.s32 %v3093, 4294967216
    %v3162 = vlaneseq
    %v3163 = vshrl.u32 %v3162, 7
    %v3164 = vsub.s32 %v3161, %v3163
    %v3165 = vrot.slane %v2612, %v3164
    %vm3166 = vcmask 720512
    %v3167 = vsel %vm3166, %v3165, %v3160
    %v3168 = vadd.s32 %v3093, 4294967208
    %v3169 = vlaneseq
    %v3170 = vshrl.u32 %v3169, 7
    %v3171 = vsub.s32 %v3168, %v3170
    %v3172 = vrot.slane %v2615, %v3171
    %vm3173 = vcmask 786112
    %v3174 = vsel %vm3173, %v3172, %v3167
    %v3175 = vadd.s32 %v3093, 4294967200
    %v3176 = vlaneseq
    %v3177 = vshrl.u32 %v3176, 7
    %v3178 = vsub.s32 %v3175, %v3177
    %v3179 = vrot.slane %v2618, %v3178
    %vm3180 = vcmask 851712
    %v3181 = vsel %vm3180, %v3179, %v3174
    %v3182 = vadd.s32 %v3093, 4294967192
    %v3183 = vlaneseq
    %v3184 = vshrl.u32 %v3183, 7
    %v3185 = vsub.s32 %v3182, %v3184
    %v3186 = vrot.slane %v2621, %v3185
    %vm3187 = vcmask 917312
    %v3188 = vsel %vm3187, %v3186, %v3181
    %v3189 = vadd.s32 %v3093, 4294967184
    %v3190 = vlaneseq
    %v3191 = vshrl.u32 %v3190, 7
    %v3192 = vsub.s32 %v3189, %v3191
    %v3193 = vrot.slane %v2624, %v3192
    %vm3194 = vcmask 982912
    %v3195 = vsel %vm3194, %v3193, %v3188
    %v3196 = vadd.s32 %v3093, 4294967176
    %v3197 = vlaneseq
    %v3198 = vshrl.u32 %v3197, 7
    %v3199 = vsub.s32 %v3196, %v3198
    %v3200 = vrot.slane %v2627, %v3199
    %vm3201 = vcmask 1048512
    %v3202 = vsel %vm3201, %v3200, %v3195
    %v3203 = vlaneseq
    %v3204 = vshrl.u32 %v3203, 7
    %v3205 = vsub.s32 %v3093, %v3204
    %v3206 = vrot.slane %v2630, %v3205
    %v3207 = vlaneseq
    %v3208 = vshrl.u32 %v3207, 7
    %v3209 = vsub.s32 %v3098, %v3208
    %v3210 = vrot.slane %v2633, %v3209
    %v3211 = vsel %vm3103, %v3210, %v3206
    %v3212 = vlaneseq
    %v3213 = vshrl.u32 %v3212, 7
    %v3214 = vsub.s32 %v3105, %v3213
    %v3215 = vrot.slane %v2636, %v3214
    %v3216 = vsel %vm3110, %v3215, %v3211
    %v3217 = vlaneseq
    %v3218 = vshrl.u32 %v3217, 7
    %v3219 = vsub.s32 %v3112, %v3218
    %v3220 = vrot.slane %v2639, %v3219
    %v3221 = vsel %vm3117, %v3220, %v3216
    %v3222 = vlaneseq
    %v3223 = vshrl.u32 %v3222, 7
    %v3224 = vsub.s32 %v3119, %v3223
    %v3225 = vrot.slane %v2642, %v3224
    %v3226 = vsel %vm3124, %v3225, %v3221
    %v3227 = vlaneseq
    %v3228 = vshrl.u32 %v3227, 7
    %v3229 = vsub.s32 %v3126, %v3228
    %v3230 = vrot.slane %v2645, %v3229
    %v3231 = vsel %vm3131, %v3230, %v3226
    %v3232 = vlaneseq
    %v3233 = vshrl.u32 %v3232, 7
    %v3234 = vsub.s32 %v3133, %v3233
    %v3235 = vrot.slane %v2648, %v3234
    %v3236 = vsel %vm3138, %v3235, %v3231
    %v3237 = vlaneseq
    %v3238 = vshrl.u32 %v3237, 7
    %v3239 = vsub.s32 %v3140, %v3238
    %v3240 = vrot.slane %v2651, %v3239
    %v3241 = vsel %vm3145, %v3240, %v3236
    %v3242 = vlaneseq
    %v3243 = vshrl.u32 %v3242, 7
    %v3244 = vsub.s32 %v3147, %v3243
    %v3245 = vrot.slane %v2654, %v3244
    %v3246 = vsel %vm3152, %v3245, %v3241
    %v3247 = vlaneseq
    %v3248 = vshrl.u32 %v3247, 7
    %v3249 = vsub.s32 %v3154, %v3248
    %v3250 = vrot.slane %v2657, %v3249
    %v3251 = vsel %vm3159, %v3250, %v3246
    %v3252 = vlaneseq
    %v3253 = vshrl.u32 %v3252, 7
    %v3254 = vsub.s32 %v3161, %v3253
    %v3255 = vrot.slane %v2660, %v3254
    %v3256 = vsel %vm3166, %v3255, %v3251
    %v3257 = vlaneseq
    %v3258 = vshrl.u32 %v3257, 7
    %v3259 = vsub.s32 %v3168, %v3258
    %v3260 = vrot.slane %v2663, %v3259
    %v3261 = vsel %vm3173, %v3260, %v3256
    %v3262 = vlaneseq
    %v3263 = vshrl.u32 %v3262, 7
    %v3264 = vsub.s32 %v3175, %v3263
    %v3265 = vrot.slane %v2666, %v3264
    %v3266 = vsel %vm3180, %v3265, %v3261
    %v3267 = vlaneseq
    %v3268 = vshrl.u32 %v3267, 7
    %v3269 = vsub.s32 %v3182, %v3268
    %v3270 = vrot.slane %v2669, %v3269
    %v3271 = vsel %vm3187, %v3270, %v3266
    %v3272 = vlaneseq
    %v3273 = vshrl.u32 %v3272, 7
    %v3274 = vsub.s32 %v3189, %v3273
    %v3275 = vrot.slane %v2672, %v3274
    %v3276 = vsel %vm3194, %v3275, %v3271
    %v3277 = vlaneseq
    %v3278 = vshrl.u32 %v3277, 7
    %v3279 = vsub.s32 %v3196, %v3278
    %v3280 = vrot.slane %v2675, %v3279
    %v3281 = vsel %vm3201, %v3280, %v3276
    %v3282 = vlaneseq
    %v3283 = vshrl.u32 %v3282, 7
    %v3284 = vsub.s32 %v3093, %v3283
    %v3285 = vrot.slane %v2678, %v3284
    %v3286 = vlaneseq
    %v3287 = vshrl.u32 %v3286, 7
    %v3288 = vsub.s32 %v3098, %v3287
    %v3289 = vrot.slane %v2681, %v3288
    %v3290 = vsel %vm3103, %v3289, %v3285
    %v3291 = vlaneseq
    %v3292 = vshrl.u32 %v3291, 7
    %v3293 = vsub.s32 %v3105, %v3292
    %v3294 = vrot.slane %v2684, %v3293
    %v3295 = vsel %vm3110, %v3294, %v3290
    %v3296 = vlaneseq
    %v3297 = vshrl.u32 %v3296, 7
    %v3298 = vsub.s32 %v3112, %v3297
    %v3299 = vrot.slane %v2687, %v3298
    %v3300 = vsel %vm3117, %v3299, %v3295
    %v3301 = vlaneseq
    %v3302 = vshrl.u32 %v3301, 7
    %v3303 = vsub.s32 %v3119, %v3302
    %v3304 = vrot.slane %v2690, %v3303
    %v3305 = vsel %vm3124, %v3304, %v3300
    %v3306 = vlaneseq
    %v3307 = vshrl.u32 %v3306, 7
    %v3308 = vsub.s32 %v3126, %v3307
    %v3309 = vrot.slane %v2693, %v3308
    %v3310 = vsel %vm3131, %v3309, %v3305
    %v3311 = vlaneseq
    %v3312 = vshrl.u32 %v3311, 7
    %v3313 = vsub.s32 %v3133, %v3312
    %v3314 = vrot.slane %v2696, %v3313
    %v3315 = vsel %vm3138, %v3314, %v3310
    %v3316 = vlaneseq
    %v3317 = vshrl.u32 %v3316, 7
    %v3318 = vsub.s32 %v3140, %v3317
    %v3319 = vrot.slane %v2699, %v3318
    %v3320 = vsel %vm3145, %v3319, %v3315
    %v3321 = vlaneseq
    %v3322 = vshrl.u32 %v3321, 7
    %v3323 = vsub.s32 %v3147, %v3322
    %v3324 = vrot.slane %v2702, %v3323
    %v3325 = vsel %vm3152, %v3324, %v3320
    %v3326 = vlaneseq
    %v3327 = vshrl.u32 %v3326, 7
    %v3328 = vsub.s32 %v3154, %v3327
    %v3329 = vrot.slane %v2705, %v3328
    %v3330 = vsel %vm3159, %v3329, %v3325
    %v3331 = vlaneseq
    %v3332 = vshrl.u32 %v3331, 7
    %v3333 = vsub.s32 %v3161, %v3332
    %v3334 = vrot.slane %v2708, %v3333
    %v3335 = vsel %vm3166, %v3334, %v3330
    %v3336 = vlaneseq
    %v3337 = vshrl.u32 %v3336, 7
    %v3338 = vsub.s32 %v3168, %v3337
    %v3339 = vrot.slane %v2711, %v3338
    %v3340 = vsel %vm3173, %v3339, %v3335
    %v3341 = vlaneseq
    %v3342 = vshrl.u32 %v3341, 7
    %v3343 = vsub.s32 %v3175, %v3342
    %v3344 = vrot.slane %v2714, %v3343
    %v3345 = vsel %vm3180, %v3344, %v3340
    %v3346 = vlaneseq
    %v3347 = vshrl.u32 %v3346, 7
    %v3348 = vsub.s32 %v3182, %v3347
    %v3349 = vrot.slane %v2717, %v3348
    %v3350 = vsel %vm3187, %v3349, %v3345
    %v3351 = vlaneseq
    %v3352 = vshrl.u32 %v3351, 7
    %v3353 = vsub.s32 %v3189, %v3352
    %v3354 = vrot.slane %v2720, %v3353
    %v3355 = vsel %vm3194, %v3354, %v3350
    %v3356 = vlaneseq
    %v3357 = vshrl.u32 %v3356, 7
    %v3358 = vsub.s32 %v3196, %v3357
    %v3359 = vrot.slane %v2723, %v3358
    %v3360 = vsel %vm3201, %v3359, %v3355
    %v3361 = vlaneseq
    %v3362 = vshrl.u32 %v3361, 7
    %v3363 = vsub.s32 %v3093, %v3362
    %v3364 = vrot.slane %v2726, %v3363
    %v3365 = vlaneseq
    %v3366 = vshrl.u32 %v3365, 7
    %v3367 = vsub.s32 %v3098, %v3366
    %v3368 = vrot.slane %v2729, %v3367
    %v3369 = vsel %vm3103, %v3368, %v3364
    %v3370 = vlaneseq
    %v3371 = vshrl.u32 %v3370, 7
    %v3372 = vsub.s32 %v3105, %v3371
    %v3373 = vrot.slane %v2732, %v3372
    %v3374 = vsel %vm3110, %v3373, %v3369
    %v3375 = vlaneseq
    %v3376 = vshrl.u32 %v3375, 7
    %v3377 = vsub.s32 %v3112, %v3376
    %v3378 = vrot.slane %v2735, %v3377
    %v3379 = vsel %vm3117, %v3378, %v3374
    %v3380 = vlaneseq
    %v3381 = vshrl.u32 %v3380, 7
    %v3382 = vsub.s32 %v3119, %v3381
    %v3383 = vrot.slane %v2738, %v3382
    %v3384 = vsel %vm3124, %v3383, %v3379
    %v3385 = vlaneseq
    %v3386 = vshrl.u32 %v3385, 7
    %v3387 = vsub.s32 %v3126, %v3386
    %v3388 = vrot.slane %v2741, %v3387
    %v3389 = vsel %vm3131, %v3388, %v3384
    %v3390 = vlaneseq
    %v3391 = vshrl.u32 %v3390, 7
    %v3392 = vsub.s32 %v3133, %v3391
    %v3393 = vrot.slane %v2744, %v3392
    %v3394 = vsel %vm3138, %v3393, %v3389
    %v3395 = vlaneseq
    %v3396 = vshrl.u32 %v3395, 7
    %v3397 = vsub.s32 %v3140, %v3396
    %v3398 = vrot.slane %v2747, %v3397
    %v3399 = vsel %vm3145, %v3398, %v3394
    %v3400 = vlaneseq
    %v3401 = vshrl.u32 %v3400, 7
    %v3402 = vsub.s32 %v3147, %v3401
    %v3403 = vrot.slane %v2750, %v3402
    %v3404 = vsel %vm3152, %v3403, %v3399
    %v3405 = vlaneseq
    %v3406 = vshrl.u32 %v3405, 7
    %v3407 = vsub.s32 %v3154, %v3406
    %v3408 = vrot.slane %v2753, %v3407
    %v3409 = vsel %vm3159, %v3408, %v3404
    %v3410 = vlaneseq
    %v3411 = vshrl.u32 %v3410, 7
    %v3412 = vsub.s32 %v3161, %v3411
    %v3413 = vrot.slane %v2756, %v3412
    %v3414 = vsel %vm3166, %v3413, %v3409
    %v3415 = vlaneseq
    %v3416 = vshrl.u32 %v3415, 7
    %v3417 = vsub.s32 %v3168, %v3416
    %v3418 = vrot.slane %v2759, %v3417
    %v3419 = vsel %vm3173, %v3418, %v3414
    %v3420 = vlaneseq
    %v3421 = vshrl.u32 %v3420, 7
    %v3422 = vsub.s32 %v3175, %v3421
    %v3423 = vrot.slane %v2762, %v3422
    %v3424 = vsel %vm3180, %v3423, %v3419
    %v3425 = vlaneseq
    %v3426 = vshrl.u32 %v3425, 7
    %v3427 = vsub.s32 %v3182, %v3426
    %v3428 = vrot.slane %v2765, %v3427
    %v3429 = vsel %vm3187, %v3428, %v3424
    %v3430 = vlaneseq
    %v3431 = vshrl.u32 %v3430, 7
    %v3432 = vsub.s32 %v3189, %v3431
    %v3433 = vrot.slane %v2768, %v3432
    %v3434 = vsel %vm3194, %v3433, %v3429
    %v3435 = vlaneseq
    %v3436 = vshrl.u32 %v3435, 7
    %v3437 = vsub.s32 %v3196, %v3436
    %v3438 = vrot.slane %v2771, %v3437
    %v3439 = vsel %vm3201, %v3438, %v3434
    %v3440 = vlaneseq
    %v3441 = vshrl.u32 %v3440, 7
    %v3442 = vsub.s32 %v3093, %v3441
    %v3443 = vrot.slane %v2774, %v3442
    %v3444 = vlaneseq
    %v3445 = vshrl.u32 %v3444, 7
    %v3446 = vsub.s32 %v3098, %v3445
    %v3447 = vrot.slane %v2777, %v3446
    %v3448 = vsel %vm3103, %v3447, %v3443
    %v3449 = vlaneseq
    %v3450 = vshrl.u32 %v3449, 7
    %v3451 = vsub.s32 %v3105, %v3450
    %v3452 = vrot.slane %v2780, %v3451
    %v3453 = vsel %vm3110, %v3452, %v3448
    %v3454 = vlaneseq
    %v3455 = vshrl.u32 %v3454, 7
    %v3456 = vsub.s32 %v3112, %v3455
    %v3457 = vrot.slane %v2783, %v3456
    %v3458 = vsel %vm3117, %v3457, %v3453
    %v3459 = vlaneseq
    %v3460 = vshrl.u32 %v3459, 7
    %v3461 = vsub.s32 %v3119, %v3460
    %v3462 = vrot.slane %v2786, %v3461
    %v3463 = vsel %vm3124, %v3462, %v3458
    %v3464 = vlaneseq
    %v3465 = vshrl.u32 %v3464, 7
    %v3466 = vsub.s32 %v3126, %v3465
    %v3467 = vrot.slane %v2789, %v3466
    %v3468 = vsel %vm3131, %v3467, %v3463
    %v3469 = vlaneseq
    %v3470 = vshrl.u32 %v3469, 7
    %v3471 = vsub.s32 %v3133, %v3470
    %v3472 = vrot.slane %v2792, %v3471
    %v3473 = vsel %vm3138, %v3472, %v3468
    %v3474 = vlaneseq
    %v3475 = vshrl.u32 %v3474, 7
    %v3476 = vsub.s32 %v3140, %v3475
    %v3477 = vrot.slane %v2795, %v3476
    %v3478 = vsel %vm3145, %v3477, %v3473
    %v3479 = vlaneseq
    %v3480 = vshrl.u32 %v3479, 7
    %v3481 = vsub.s32 %v3147, %v3480
    %v3482 = vrot.slane %v2798, %v3481
    %v3483 = vsel %vm3152, %v3482, %v3478
    %v3484 = vlaneseq
    %v3485 = vshrl.u32 %v3484, 7
    %v3486 = vsub.s32 %v3154, %v3485
    %v3487 = vrot.slane %v2801, %v3486
    %v3488 = vsel %vm3159, %v3487, %v3483
    %v3489 = vlaneseq
    %v3490 = vshrl.u32 %v3489, 7
    %v3491 = vsub.s32 %v3161, %v3490
    %v3492 = vrot.slane %v2804, %v3491
    %v3493 = vsel %vm3166, %v3492, %v3488
    %v3494 = vlaneseq
    %v3495 = vshrl.u32 %v3494, 7
    %v3496 = vsub.s32 %v3168, %v3495
    %v3497 = vrot.slane %v2807, %v3496
    %v3498 = vsel %vm3173, %v3497, %v3493
    %v3499 = vlaneseq
    %v3500 = vshrl.u32 %v3499, 7
    %v3501 = vsub.s32 %v3175, %v3500
    %v3502 = vrot.slane %v2810, %v3501
    %v3503 = vsel %vm3180, %v3502, %v3498
    %v3504 = vlaneseq
    %v3505 = vshrl.u32 %v3504, 7
    %v3506 = vsub.s32 %v3182, %v3505
    %v3507 = vrot.slane %v2813, %v3506
    %v3508 = vsel %vm3187, %v3507, %v3503
    %v3509 = vlaneseq
    %v3510 = vshrl.u32 %v3509, 7
    %v3511 = vsub.s32 %v3189, %v3510
    %v3512 = vrot.slane %v2816, %v3511
    %v3513 = vsel %vm3194, %v3512, %v3508
    %v3514 = vlaneseq
    %v3515 = vshrl.u32 %v3514, 7
    %v3516 = vsub.s32 %v3196, %v3515
    %v3517 = vrot.slane %v2819, %v3516
    %v3518 = vsel %vm3201, %v3517, %v3513
    %v3519 = vlaneseq
    %v3520 = vshrl.u32 %v3519, 7
    %v3521 = vsub.s32 %v3093, %v3520
    %v3522 = vrot.slane %v2822, %v3521
    %v3523 = vlaneseq
    %v3524 = vshrl.u32 %v3523, 7
    %v3525 = vsub.s32 %v3098, %v3524
    %v3526 = vrot.slane %v2825, %v3525
    %v3527 = vsel %vm3103, %v3526, %v3522
    %v3528 = vlaneseq
    %v3529 = vshrl.u32 %v3528, 7
    %v3530 = vsub.s32 %v3105, %v3529
    %v3531 = vrot.slane %v2828, %v3530
    %v3532 = vsel %vm3110, %v3531, %v3527
    %v3533 = vlaneseq
    %v3534 = vshrl.u32 %v3533, 7
    %v3535 = vsub.s32 %v3112, %v3534
    %v3536 = vrot.slane %v2831, %v3535
    %v3537 = vsel %vm3117, %v3536, %v3532
    %v3538 = vlaneseq
    %v3539 = vshrl.u32 %v3538, 7
    %v3540 = vsub.s32 %v3119, %v3539
    %v3541 = vrot.slane %v2834, %v3540
    %v3542 = vsel %vm3124, %v3541, %v3537
    %v3543 = vlaneseq
    %v3544 = vshrl.u32 %v3543, 7
    %v3545 = vsub.s32 %v3126, %v3544
    %v3546 = vrot.slane %v2837, %v3545
    %v3547 = vsel %vm3131, %v3546, %v3542
    %v3548 = vlaneseq
    %v3549 = vshrl.u32 %v3548, 7
    %v3550 = vsub.s32 %v3133, %v3549
    %v3551 = vrot.slane %v2840, %v3550
    %v3552 = vsel %vm3138, %v3551, %v3547
    %v3553 = vlaneseq
    %v3554 = vshrl.u32 %v3553, 7
    %v3555 = vsub.s32 %v3140, %v3554
    %v3556 = vrot.slane %v2843, %v3555
    %v3557 = vsel %vm3145, %v3556, %v3552
    %v3558 = vlaneseq
    %v3559 = vshrl.u32 %v3558, 7
    %v3560 = vsub.s32 %v3147, %v3559
    %v3561 = vrot.slane %v2846, %v3560
    %v3562 = vsel %vm3152, %v3561, %v3557
    %v3563 = vlaneseq
    %v3564 = vshrl.u32 %v3563, 7
    %v3565 = vsub.s32 %v3154, %v3564
    %v3566 = vrot.slane %v2849, %v3565
    %v3567 = vsel %vm3159, %v3566, %v3562
    %v3568 = vlaneseq
    %v3569 = vshrl.u32 %v3568, 7
    %v3570 = vsub.s32 %v3161, %v3569
    %v3571 = vrot.slane %v2852, %v3570
    %v3572 = vsel %vm3166, %v3571, %v3567
    %v3573 = vlaneseq
    %v3574 = vshrl.u32 %v3573, 7
    %v3575 = vsub.s32 %v3168, %v3574
    %v3576 = vrot.slane %v2855, %v3575
    %v3577 = vsel %vm3173, %v3576, %v3572
    %v3578 = vlaneseq
    %v3579 = vshrl.u32 %v3578, 7
    %v3580 = vsub.s32 %v3175, %v3579
    %v3581 = vrot.slane %v2858, %v3580
    %v3582 = vsel %vm3180, %v3581, %v3577
    %v3583 = vlaneseq
    %v3584 = vshrl.u32 %v3583, 7
    %v3585 = vsub.s32 %v3182, %v3584
    %v3586 = vrot.slane %v2861, %v3585
    %v3587 = vsel %vm3187, %v3586, %v3582
    %v3588 = vlaneseq
    %v3589 = vshrl.u32 %v3588, 7
    %v3590 = vsub.s32 %v3189, %v3589
    %v3591 = vrot.slane %v2864, %v3590
    %v3592 = vsel %vm3194, %v3591, %v3587
    %v3593 = vlaneseq
    %v3594 = vshrl.u32 %v3593, 7
    %v3595 = vsub.s32 %v3196, %v3594
    %v3596 = vrot.slane %v2867, %v3595
    %v3597 = vsel %vm3201, %v3596, %v3592
    %v3598 = vlaneseq
    %v3599 = vshrl.u32 %v3598, 7
    %v3600 = vsub.s32 %v3093, %v3599
    %v3601 = vrot.slane %v2870, %v3600
    %v3602 = vlaneseq
    %v3603 = vshrl.u32 %v3602, 7
    %v3604 = vsub.s32 %v3098, %v3603
    %v3605 = vrot.slane %v2873, %v3604
    %v3606 = vsel %vm3103, %v3605, %v3601
    %v3607 = vlaneseq
    %v3608 = vshrl.u32 %v3607, 7
    %v3609 = vsub.s32 %v3105, %v3608
    %v3610 = vrot.slane %v2876, %v3609
    %v3611 = vsel %vm3110, %v3610, %v3606
    %v3612 = vlaneseq
    %v3613 = vshrl.u32 %v3612, 7
    %v3614 = vsub.s32 %v3112, %v3613
    %v3615 = vrot.slane %v2879, %v3614
    %v3616 = vsel %vm3117, %v3615, %v3611
    %v3617 = vlaneseq
    %v3618 = vshrl.u32 %v3617, 7
    %v3619 = vsub.s32 %v3119, %v3618
    %v3620 = vrot.slane %v2882, %v3619
    %v3621 = vsel %vm3124, %v3620, %v3616
    %v3622 = vlaneseq
    %v3623 = vshrl.u32 %v3622, 7
    %v3624 = vsub.s32 %v3126, %v3623
    %v3625 = vrot.slane %v2885, %v3624
    %v3626 = vsel %vm3131, %v3625, %v3621
    %v3627 = vlaneseq
    %v3628 = vshrl.u32 %v3627, 7
    %v3629 = vsub.s32 %v3133, %v3628
    %v3630 = vrot.slane %v2888, %v3629
    %v3631 = vsel %vm3138, %v3630, %v3626
    %v3632 = vlaneseq
    %v3633 = vshrl.u32 %v3632, 7
    %v3634 = vsub.s32 %v3140, %v3633
    %v3635 = vrot.slane %v2891, %v3634
    %v3636 = vsel %vm3145, %v3635, %v3631
    %v3637 = vlaneseq
    %v3638 = vshrl.u32 %v3637, 7
    %v3639 = vsub.s32 %v3147, %v3638
    %v3640 = vrot.slane %v2894, %v3639
    %v3641 = vsel %vm3152, %v3640, %v3636
    %v3642 = vlaneseq
    %v3643 = vshrl.u32 %v3642, 7
    %v3644 = vsub.s32 %v3154, %v3643
    %v3645 = vrot.slane %v2897, %v3644
    %v3646 = vsel %vm3159, %v3645, %v3641
    %v3647 = vlaneseq
    %v3648 = vshrl.u32 %v3647, 7
    %v3649 = vsub.s32 %v3161, %v3648
    %v3650 = vrot.slane %v2900, %v3649
    %v3651 = vsel %vm3166, %v3650, %v3646
    %v3652 = vlaneseq
    %v3653 = vshrl.u32 %v3652, 7
    %v3654 = vsub.s32 %v3168, %v3653
    %v3655 = vrot.slane %v2903, %v3654
    %v3656 = vsel %vm3173, %v3655, %v3651
    %v3657 = vlaneseq
    %v3658 = vshrl.u32 %v3657, 7
    %v3659 = vsub.s32 %v3175, %v3658
    %v3660 = vrot.slane %v2906, %v3659
    %v3661 = vsel %vm3180, %v3660, %v3656
    %v3662 = vlaneseq
    %v3663 = vshrl.u32 %v3662, 7
    %v3664 = vsub.s32 %v3182, %v3663
    %v3665 = vrot.slane %v2909, %v3664
    %v3666 = vsel %vm3187, %v3665, %v3661
    %v3667 = vlaneseq
    %v3668 = vshrl.u32 %v3667, 7
    %v3669 = vsub.s32 %v3189, %v3668
    %v3670 = vrot.slane %v2912, %v3669
    %v3671 = vsel %vm3194, %v3670, %v3666
    %v3672 = vlaneseq
    %v3673 = vshrl.u32 %v3672, 7
    %v3674 = vsub.s32 %v3196, %v3673
    %v3675 = vrot.slane %v2915, %v3674
    %v3676 = vsel %vm3201, %v3675, %v3671
    %v3677 = vlaneseq
    %v3678 = vshrl.u32 %v3677, 7
    %v3679 = vsub.s32 %v3093, %v3678
    %v3680 = vrot.slane %v2918, %v3679
    %v3681 = vlaneseq
    %v3682 = vshrl.u32 %v3681, 7
    %v3683 = vsub.s32 %v3098, %v3682
    %v3684 = vrot.slane %v2921, %v3683
    %v3685 = vsel %vm3103, %v3684, %v3680
    %v3686 = vlaneseq
    %v3687 = vshrl.u32 %v3686, 7
    %v3688 = vsub.s32 %v3105, %v3687
    %v3689 = vrot.slane %v2924, %v3688
    %v3690 = vsel %vm3110, %v3689, %v3685
    %v3691 = vlaneseq
    %v3692 = vshrl.u32 %v3691, 7
    %v3693 = vsub.s32 %v3112, %v3692
    %v3694 = vrot.slane %v2927, %v3693
    %v3695 = vsel %vm3117, %v3694, %v3690
    %v3696 = vlaneseq
    %v3697 = vshrl.u32 %v3696, 7
    %v3698 = vsub.s32 %v3119, %v3697
    %v3699 = vrot.slane %v2930, %v3698
    %v3700 = vsel %vm3124, %v3699, %v3695
    %v3701 = vlaneseq
    %v3702 = vshrl.u32 %v3701, 7
    %v3703 = vsub.s32 %v3126, %v3702
    %v3704 = vrot.slane %v2933, %v3703
    %v3705 = vsel %vm3131, %v3704, %v3700
    %v3706 = vlaneseq
    %v3707 = vshrl.u32 %v3706, 7
    %v3708 = vsub.s32 %v3133, %v3707
    %v3709 = vrot.slane %v2936, %v3708
    %v3710 = vsel %vm3138, %v3709, %v3705
    %v3711 = vlaneseq
    %v3712 = vshrl.u32 %v3711, 7
    %v3713 = vsub.s32 %v3140, %v3712
    %v3714 = vrot.slane %v2939, %v3713
    %v3715 = vsel %vm3145, %v3714, %v3710
    %v3716 = vlaneseq
    %v3717 = vshrl.u32 %v3716, 7
    %v3718 = vsub.s32 %v3147, %v3717
    %v3719 = vrot.slane %v2942, %v3718
    %v3720 = vsel %vm3152, %v3719, %v3715
    %v3721 = vlaneseq
    %v3722 = vshrl.u32 %v3721, 7
    %v3723 = vsub.s32 %v3154, %v3722
    %v3724 = vrot.slane %v2945, %v3723
    %v3725 = vsel %vm3159, %v3724, %v3720
    %v3726 = vlaneseq
    %v3727 = vshrl.u32 %v3726, 7
    %v3728 = vsub.s32 %v3161, %v3727
    %v3729 = vrot.slane %v2948, %v3728
    %v3730 = vsel %vm3166, %v3729, %v3725
    %v3731 = vlaneseq
    %v3732 = vshrl.u32 %v3731, 7
    %v3733 = vsub.s32 %v3168, %v3732
    %v3734 = vrot.slane %v2951, %v3733
    %v3735 = vsel %vm3173, %v3734, %v3730
    %v3736 = vlaneseq
    %v3737 = vshrl.u32 %v3736, 7
    %v3738 = vsub.s32 %v3175, %v3737
    %v3739 = vrot.slane %v2954, %v3738
    %v3740 = vsel %vm3180, %v3739, %v3735
    %v3741 = vlaneseq
    %v3742 = vshrl.u32 %v3741, 7
    %v3743 = vsub.s32 %v3182, %v3742
    %v3744 = vrot.slane %v2957, %v3743
    %v3745 = vsel %vm3187, %v3744, %v3740
    %v3746 = vlaneseq
    %v3747 = vshrl.u32 %v3746, 7
    %v3748 = vsub.s32 %v3189, %v3747
    %v3749 = vrot.slane %v2960, %v3748
    %v3750 = vsel %vm3194, %v3749, %v3745
    %v3751 = vlaneseq
    %v3752 = vshrl.u32 %v3751, 7
    %v3753 = vsub.s32 %v3196, %v3752
    %v3754 = vrot.slane %v2963, %v3753
    %v3755 = vsel %vm3201, %v3754, %v3750
    %vm3756 = vcmask 1041409
    %v3757 = vsel %vm3756, %v3281, %v3202
    %vm3758 = vcmask 1042434
    %v3759 = vsel %vm3758, %v3360, %v3757
    %vm3760 = vcmask 1043459
    %v3761 = vsel %vm3760, %v3439, %v3759
    %vm3762 = vcmask 1044484
    %v3763 = vsel %vm3762, %v3518, %v3761
    %vm3764 = vcmask 1045509
    %v3765 = vsel %vm3764, %v3597, %v3763
    %vm3766 = vcmask 1046534
    %v3767 = vsel %vm3766, %v3676, %v3765
    %vm3768 = vcmask 1047559
    %v3769 = vsel %vm3768, %v3755, %v3767
    %3771 = vst [vmem:[#allocation5] sm:$0xff] %v3769
    // Predicated region
    $region10: #{tpu_custom_call.1} parent=1 // pred_check
      _
    $region11: #{tpu_custom_call.1} parent=1 // pred_check_branch
      %3773 = sbr.rel (0) target = $region13
    $region12: #{tpu_custom_call.1} parent=1 // pred_region
      %s3775 = ssub.s32 128, 128
      %3776 = vsyncadd [#allocation4], %s3775
      %s3778 = sshll.u32 [#allocation5], 4
      %s3779 = int_to_ptr.vmem [resolvable:$true] %s3778
      %3781 = dma.vmem_to_hbm [thread:$0]  %s3779, 128, %s1, [#allocation4]
    $region13: #{tpu_custom_call.1} parent=1 // pred_fallthru
      _
    // Predicated region
    $region14: #{tpu_custom_call.1} parent=1 // pred_check
      _
    $region15: #{tpu_custom_call.1} parent=1 // pred_check_branch
      %3783 = sbr.rel (0) target = $region17
    $region16: #{tpu_custom_call.1} parent=1 // pred_region
      %3784 = dma.done [#allocation4], 128
    $region17: #{tpu_custom_call.1} parent=1 // pred_fallthru
      _
    %3785 = vsyncpa [#allocation3], 1
    %3786 = vsyncpa [#allocation4], 1

// kernel: tpu_custom_call.1
$region0: #{tpu_custom_call.1}
  #allocation0 [shape = 'u32[]', space=smem, size = 0x4, offset = 0x4, fixed_abs, tag = 'smem constant byte address 0x4 - core index']
  #allocation1 [shape = 'u32[144,128]{1,0:T(1,128)}', space=vmem, size = 0x12000, scoped, tag = 'internal scratch']
  %s0 = inlined_call_operand.hbm [shape: f32[8,16], index: 0, kind: input, shape index: {}]
  %s1 = inlined_call_operand.hbm [shape: f32[8,8], index: 1, kind: output, shape index: {}]
  %s2 = sld [smem:[#allocation0]]
  $region18: #{tpu_custom_call.1} parent=0
    _
  %s4 = ssub.s32 1, %s2
  %s5 = scalar_select 0, %s4, %s2
  $region1: #{tpu_custom_call.1} parent=0
    #allocation2 [shape = 'u8[4096]{0}', space=vmem, size = 0x1000, scoped, tag = 'input window, operand 0, single buffered']
    #allocation3 [shape = 's32[1]{0}', space=sflag, size = 0x4, scoped, tag = 'scoped memory for tpu_custom_call.1']
    #allocation4 [shape = 's32[1]{0}', space=sflag, size = 0x4, scoped, tag = 'scoped memory for tpu_custom_call.1']
    #allocation5 [shape = 'u8[4096]{0}', space=vmem, size = 0x1000, scoped, tag = 'output window, operand 0, single buffered']
    %6 = vsyncpa [#allocation3], 0
    %7 = vsyncpa [#allocation4], 0
    // Predicated region
    $region2: #{tpu_custom_call.1} parent=1 // pred_check
      _
    $region3: #{tpu_custom_call.1} parent=1 // pred_check_branch
      %9 = sbr.rel (0) target = $region5
    $region4: #{tpu_custom_call.1} parent=1 // pred_region
      %s11 = ssub.s32 128, 128
      %12 = vsyncadd [#allocation3], %s11
      %s14 = sshll.u32 [#allocation2], 4
      %s15 = int_to_ptr.vmem [resolvable:$true] %s14
      %17 = dma.hbm_to_vmem [thread:$0]  %s0, 128, %s15, [#allocation3]
    $region5: #{tpu_custom_call.1} parent=1 // pred_fallthru
      _
    // Predicated region
    $region6: #{tpu_custom_call.1} parent=1 // pred_check
      _
    $region7: #{tpu_custom_call.1} parent=1 // pred_check_branch
      %19 = sbr.rel (0) target = $region9
    $region8: #{tpu_custom_call.1} parent=1 // pred_region
      %20 = dma.done [#allocation3], 128
    $region9: #{tpu_custom_call.1} parent=1 // pred_fallthru
      _
    %v21 = vld [vmem:[#allocation2] sm:$0xff]
    %23 = vrot.lane.b32.xlu0 %v21, 126
    %v24 = vpop.permute.xlu0 %23
    %26 = vrot.lane.b32.xlu0 %v21, 124
    %v27 = vpop.permute.xlu0 %26
    %29 = vrot.lane.b32.xlu0 %v21, 122
    %v30 = vpop.permute.xlu0 %29
    %32 = vrot.lane.b32.xlu0 %v21, 120
    %v33 = vpop.permute.xlu0 %32
    %35 = vrot.lane.b32.xlu0 %v21, 118
    %v36 = vpop.permute.xlu0 %35
    %38 = vrot.lane.b32.xlu0 %v21, 116
    %v39 = vpop.permute.xlu0 %38
    %41 = vrot.lane.b32.xlu0 %v21, 114
    %v42 = vpop.permute.xlu0 %41
    %v44 = vcombine.low %v21, %v27
    %v45 = vcombine.high %v21, %v27
    %v47 = vunpack.c.l.s4 1983009808
    %v48 = vunpack.c.0.s8 %v47
    %v49 = vlaneseq
    %v50 = vshrl.u32 %v49, 7
    %v51 = vsub.s32 %v48, %v50
    %v52 = vrot.slane %v44, %v51
    %v54 = vunpack.c.l.s4 1983009808
    %v55 = vunpack.c.0.s8 %v54
    %v56 = vlaneseq
    %v57 = vshrl.u32 %v56, 7
    %v58 = vsub.s32 %v55, %v57
    %v59 = vrot.slane %v45, %v58
    %v60 = vcombine.low %v24, %v30
    %v61 = vcombine.high %v24, %v30
    %v63 = vunpack.c.l.s4 1983009808
    %v64 = vunpack.c.0.s8 %v63
    %v65 = vlaneseq
    %v66 = vshrl.u32 %v65, 7
    %v67 = vsub.s32 %v64, %v66
    %v68 = vrot.slane %v60, %v67
    %v70 = vunpack.c.l.s4 1983009808
    %v71 = vunpack.c.0.s8 %v70
    %v72 = vlaneseq
    %v73 = vshrl.u32 %v72, 7
    %v74 = vsub.s32 %v71, %v73
    %v75 = vrot.slane %v61, %v74
    %v76 = vcombine.low %v33, %v39
    %v77 = vcombine.high %v33, %v39
    %v79 = vunpack.c.l.s4 1983009808
    %v80 = vunpack.c.0.s8 %v79
    %v81 = vlaneseq
    %v82 = vshrl.u32 %v81, 7
    %v83 = vsub.s32 %v80, %v82
    %v84 = vrot.slane %v76, %v83
    %v86 = vunpack.c.l.s4 1983009808
    %v87 = vunpack.c.0.s8 %v86
    %v88 = vlaneseq
    %v89 = vshrl.u32 %v88, 7
    %v90 = vsub.s32 %v87, %v89
    %v91 = vrot.slane %v77, %v90
    %v92 = vcombine.low %v36, %v42
    %v93 = vcombine.high %v36, %v42
    %v95 = vunpack.c.l.s4 1983009808
    %v96 = vunpack.c.0.s8 %v95
    %v97 = vlaneseq
    %v98 = vshrl.u32 %v97, 7
    %v99 = vsub.s32 %v96, %v98
    %v100 = vrot.slane %v92, %v99
    %v102 = vunpack.c.l.s4 1983009808
    %v103 = vunpack.c.0.s8 %v102
    %v104 = vlaneseq
    %v105 = vshrl.u32 %v104, 7
    %v106 = vsub.s32 %v103, %v105
    %v107 = vrot.slane %v93, %v106
    %v108 = vcombine.low %v52, %v68
    %v109 = vcombine.high %v52, %v68
    %v111 = vunpack.c.l.s4 1934713408
    %v112 = vunpack.c.0.s8 %v111
    %v113 = vlaneseq
    %v114 = vshrl.u32 %v113, 7
    %v115 = vsub.s32 %v112, %v114
    %v116 = vrot.slane %v108, %v115
    %v118 = vunpack.c.l.s4 1934713408
    %v119 = vunpack.c.0.s8 %v118
    %v120 = vlaneseq
    %v121 = vshrl.u32 %v120, 7
    %v122 = vsub.s32 %v119, %v121
    %v123 = vrot.slane %v109, %v122
    %v124 = vcombine.low %v59, %v75
    %v125 = vcombine.high %v59, %v75
    %v127 = vunpack.c.l.s4 1934713408
    %v128 = vunpack.c.0.s8 %v127
    %v129 = vlaneseq
    %v130 = vshrl.u32 %v129, 7
    %v131 = vsub.s32 %v128, %v130
    %v132 = vrot.slane %v124, %v131
    %v134 = vunpack.c.l.s4 1934713408
    %v135 = vunpack.c.0.s8 %v134
    %v136 = vlaneseq
    %v137 = vshrl.u32 %v136, 7
    %v138 = vsub.s32 %v135, %v137
    %v139 = vrot.slane %v125, %v138
    %v140 = vcombine.low %v84, %v100
    %v141 = vcombine.high %v84, %v100
    %v143 = vunpack.c.l.s4 1934713408
    %v144 = vunpack.c.0.s8 %v143
    %v145 = vlaneseq
    %v146 = vshrl.u32 %v145, 7
    %v147 = vsub.s32 %v144, %v146
    %v148 = vrot.slane %v140, %v147
    %v150 = vunpack.c.l.s4 1934713408
    %v151 = vunpack.c.0.s8 %v150
    %v152 = vlaneseq
    %v153 = vshrl.u32 %v152, 7
    %v154 = vsub.s32 %v151, %v153
    %v155 = vrot.slane %v141, %v154
    %v156 = vcombine.low %v91, %v107
    %v157 = vcombine.high %v91, %v107
    %v159 = vunpack.c.l.s4 1934713408
    %v160 = vunpack.c.0.s8 %v159
    %v161 = vlaneseq
    %v162 = vshrl.u32 %v161, 7
    %v163 = vsub.s32 %v160, %v162
    %v164 = vrot.slane %v156, %v163
    %v166 = vunpack.c.l.s4 1934713408
    %v167 = vunpack.c.0.s8 %v166
    %v168 = vlaneseq
    %v169 = vshrl.u32 %v168, 7
    %v170 = vsub.s32 %v167, %v169
    %v171 = vrot.slane %v157, %v170
    %v172 = vcombine.low %v116, %v148
    %v173 = vcombine.high %v116, %v148
    %v174 = vcombine.low %v123, %v155
    %v175 = vcombine.high %v123, %v155
    %v176 = vcombine.low %v132, %v164
    %v177 = vcombine.high %v132, %v164
    %v178 = vcombine.low %v139, %v171
    %v179 = vcombine.high %v139, %v171
    %vm180 = vcmask 15360
    %v181 = vsel %vm180, %v172, -inf
    %182 = vmax.xlane.f32.xlu0 %v181
    %v183 = vpop.xlane.xlu0 %182
    %v184 = vsel %vm180, %v173, -inf
    %185 = vmax.xlane.f32.xlu0 %v184
    %v186 = vpop.xlane.xlu0 %185
    %v187 = vsel %vm180, %v174, -inf
    %188 = vmax.xlane.f32.xlu0 %v187
    %v189 = vpop.xlane.xlu0 %188
    %v190 = vsel %vm180, %v175, -inf
    %191 = vmax.xlane.f32.xlu0 %v190
    %v192 = vpop.xlane.xlu0 %191
    %v193 = vsel %vm180, %v176, -inf
    %194 = vmax.xlane.f32.xlu0 %v193
    %v195 = vpop.xlane.xlu0 %194
    %v196 = vsel %vm180, %v177, -inf
    %197 = vmax.xlane.f32.xlu0 %v196
    %v198 = vpop.xlane.xlu0 %197
    %v199 = vsel %vm180, %v178, -inf
    %200 = vmax.xlane.f32.xlu0 %v199
    %v201 = vpop.xlane.xlu0 %200
    %v202 = vsel %vm180, %v179, -inf
    %203 = vmax.xlane.f32.xlu0 %v202
    %v204 = vpop.xlane.xlu0 %203
    %v213 = vlaneseq
    %v214 = vand.u32 %v213, 127
    %v215 = vlaneseq
    %v216 = vshrl.u32 %v215, 7
    %v217 = vsub.s32 %v214, %v216
    %v218 = vrot.slane %v183, %v217
    %v219 = vlaneseq
    %v220 = vshrl.u32 %v219, 7
    %v221 = vsub.s32 %v214, %v220
    %v222 = vrot.slane %v186, %v221
    %v223 = vlaneseq
    %v224 = vshrl.u32 %v223, 7
    %v225 = vsub.s32 %v214, %v224
    %v226 = vrot.slane %v189, %v225
    %v227 = vlaneseq
    %v228 = vshrl.u32 %v227, 7
    %v229 = vsub.s32 %v214, %v228
    %v230 = vrot.slane %v192, %v229
    %v231 = vlaneseq
    %v232 = vshrl.u32 %v231, 7
    %v233 = vsub.s32 %v214, %v232
    %v234 = vrot.slane %v195, %v233
    %v235 = vlaneseq
    %v236 = vshrl.u32 %v235, 7
    %v237 = vsub.s32 %v214, %v236
    %v238 = vrot.slane %v198, %v237
    %v239 = vlaneseq
    %v240 = vshrl.u32 %v239, 7
    %v241 = vsub.s32 %v214, %v240
    %v242 = vrot.slane %v201, %v241
    %v243 = vlaneseq
    %v244 = vshrl.u32 %v243, 7
    %v245 = vsub.s32 %v214, %v244
    %v246 = vrot.slane %v204, %v245
    %vm247 = vcmask 1041409
    %v248 = vsel %vm247, %v222, %v218
    %vm249 = vcmask 1042434
    %v250 = vsel %vm249, %v226, %v248
    %vm251 = vcmask 1043459
    %v252 = vsel %vm251, %v230, %v250
    %vm253 = vcmask 1044484
    %v254 = vsel %vm253, %v234, %v252
    %vm255 = vcmask 1045509
    %v256 = vsel %vm255, %v238, %v254
    %vm257 = vcmask 1046534
    %v258 = vsel %vm257, %v242, %v256
    %vm259 = vcmask 1047559
    %v260 = vsel %vm259, %v246, %v258
    %vm262 = vcmask 64512
    %263 = vst.msk [vmem:[#allocation5] sm:$0xff] %vm262, %v260
    // Predicated region
    $region10: #{tpu_custom_call.1} parent=1 // pred_check
      _
    $region11: #{tpu_custom_call.1} parent=1 // pred_check_branch
      %265 = sbr.rel (0) target = $region13
    $region12: #{tpu_custom_call.1} parent=1 // pred_region
      %s267 = ssub.s32 128, 128
      %268 = vsyncadd [#allocation4], %s267
      %s270 = sshll.u32 [#allocation5], 4
      %s271 = int_to_ptr.vmem [resolvable:$true] %s270
      %273 = dma.vmem_to_hbm [thread:$0]  %s271, 128, %s1, [#allocation4]
    $region13: #{tpu_custom_call.1} parent=1 // pred_fallthru
      _
    // Predicated region
    $region14: #{tpu_custom_call.1} parent=1 // pred_check
      _
    $region15: #{tpu_custom_call.1} parent=1 // pred_check_branch
      %275 = sbr.rel (0) target = $region17
    $region16: #{tpu_custom_call.1} parent=1 // pred_region
      %276 = dma.done [#allocation4], 128
    $region17: #{tpu_custom_call.1} parent=1 // pred_fallthru
      _
    %277 = vsyncpa [#allocation3], 1
    %278 = vsyncpa [#allocation4], 1

</llo_original>
